<compile_context>
chip_gen: v7x
topology: tpu7x:2x2x1
jax: 0.10.0
libtpu: 0.0.40
codegen_flags: <defaults>
</compile_context>

<pallas_src>
import functools

import jax
import jax.numpy as jnp
import numpy as np
from jax.experimental import pallas as pl
from jax.experimental.pallas import tpu as pltpu


# ------------------------------ Pallas kernel ------------------------------- #

def _basic_block_kernel(xp_ref, w1_ref, b1_ref, w2_ref, b2_ref, out_ref,
                        cols1_ref, y1p_ref, cols2_ref,
                        *, stride, dilation, Ho, Wo, wpad):
    """Fused conv1+bn1+relu -> conv2+bn2 + 1x1 residual -> relu for one image.

    xp_ref   : (Hp, Wp, Cin)  spatially padded NHWC input tile
    w1_ref   : (9*Cin, P)     conv1 weights with bn1 scale folded in
    b1_ref   : (1, P)         bn1 folded bias
    w2_ref   : (9*P+Cin, P)   [conv2 weights * bn2 scale ; residual 1x1 weights]
    b2_ref   : (1, P)         bn2 folded bias
    out_ref  : (Ho*Wo, P)
    cols1_ref: (Ho, Wo, 9*Cin)           scratch: conv1 patch matrix
    y1p_ref  : (Ho+2*d, Wo+2*wpad, P)    scratch: zero-padded y1 (conv2 halo)
    cols2_ref: (Ho, Wo, 9*P+Cin)         scratch: conv2 + residual patch matrix
    """
    Cin = xp_ref.shape[-1]
    P = out_ref.shape[-1]
    d, s = dilation, stride

    def x_patch(h0, w0):
        # (Ho, Wo, Cin) window of the padded input, sampled at `stride`.
        if s == 1:
            return xp_ref[h0:h0 + Ho, w0:w0 + Wo, :]
        return xp_ref[pl.ds(h0, Ho, stride=s), pl.ds(w0, Wo, stride=s), :]

    # ---- conv1 (3x3, stride, dilation) + bn1 (folded) + relu ---------------
    for kh in range(3):
        for kw in range(3):
            t = kh * 3 + kw
            cols1_ref[:, :, t * Cin:(t + 1) * Cin] = x_patch(kh * d, kw * d)
    y1 = jnp.dot(cols1_ref[...].reshape(Ho * Wo, 9 * Cin), w1_ref[...],
                 preferred_element_type=jnp.float32)
    y1 = jnp.maximum(y1 + b1_ref[...], 0.0)

    # y1, zero-padded for conv2's halo, lives only in VMEM (never hits HBM).
    # The W-side pad `wpad` is rounded up to a multiple of 8 so the interior
    # store below is sublane-aligned.
    y1p_ref[...] = jnp.zeros_like(y1p_ref)
    y1p_ref[d:d + Ho, wpad:wpad + Wo, :] = (
        y1.reshape(Ho, Wo, P).astype(y1p_ref.dtype))

    # ---- conv2 (3x3, stride 1, dilation) + bn2 + 1x1 residual + relu -------
    for kh in range(3):
        for kw in range(3):
            t = kh * 3 + kw
            h0 = kh * d
            w0 = (wpad - d) + kw * d
            cols2_ref[:, :, t * P:(t + 1) * P] = (
                y1p_ref[h0:h0 + Ho, w0:w0 + Wo, :])
    # residual path: the 1x1 conv taps of the original x (strided centers)
    cols2_ref[:, :, 9 * P:9 * P + Cin] = x_patch(d, d)

    out = jnp.dot(cols2_ref[...].reshape(Ho * Wo, 9 * P + Cin), w2_ref[...],
                  preferred_element_type=jnp.float32)
    out_ref[...] = jnp.maximum(out + b2_ref[...], 0.0).astype(out_ref.dtype)


def _fused_basic_block(xp, w1, b1, w2, b2, *, stride, dilation, Ho, Wo):
    N, Hp, Wp, Cin = xp.shape
    K1, P = w1.shape
    K2 = w2.shape[0]
    cdt = xp.dtype
    wpad = -(-dilation // 8) * 8          # W-side halo pad, sublane aligned

    kernel = functools.partial(
        _basic_block_kernel, stride=stride, dilation=dilation,
        Ho=Ho, Wo=Wo, wpad=wpad)

    flops = 2 * N * Ho * Wo * P * (K1 + K2)
    bytes_accessed = int(
        xp.size * xp.dtype.itemsize
        + (w1.size + w2.size) * w1.dtype.itemsize
        + (b1.size + b2.size) * 4
        + N * Ho * Wo * P * 4)

    return pl.pallas_call(
        kernel,
        out_shape=jax.ShapeDtypeStruct((N, Ho * Wo, P), jnp.float32),
        grid_spec=pltpu.PrefetchScalarGridSpec(
            num_scalar_prefetch=0,
            grid=(N,),
            in_specs=[
                pl.BlockSpec((None, Hp, Wp, Cin), lambda n: (n, 0, 0, 0)),
                pl.BlockSpec((K1, P), lambda n: (0, 0)),
                pl.BlockSpec((1, P), lambda n: (0, 0)),
                pl.BlockSpec((K2, P), lambda n: (0, 0)),
                pl.BlockSpec((1, P), lambda n: (0, 0)),
            ],
            out_specs=pl.BlockSpec((None, Ho * Wo, P), lambda n: (n, 0, 0)),
            scratch_shapes=[
                pltpu.VMEM((Ho, Wo, K1), cdt),                        # cols1
                pltpu.VMEM((Ho + 2 * dilation, Wo + 2 * wpad, P), cdt),  # y1 pad
                pltpu.VMEM((Ho, Wo, K2), cdt),                        # cols2
            ],
        ),
        compiler_params=pltpu.CompilerParams(
            dimension_semantics=("parallel",)),
        cost_estimate=pl.CostEstimate(
            flops=flops, transcendentals=0, bytes_accessed=bytes_accessed),
    )(xp, w1, b1, w2, b2)


# -------------------------------- JAX glue ---------------------------------- #

def _w_oihw_to_mat(w_oihw):
    """PyTorch (O, I, kh, kw) -> im2col weight matrix (kh*kw*I, O)."""
    O, I, kh, kw = w_oihw.shape
    return jnp.transpose(w_oihw, (2, 3, 1, 0)).reshape(kh * kw * I, O)


def _fold_bn(gamma, beta, mean, var, eps=1e-5):
    scale = gamma / jnp.sqrt(var + eps)            # (P,)
    bias = (beta - mean * scale).reshape(1, -1)    # (1, P)
    return scale, bias


@functools.partial(jax.jit,
                   static_argnames=("stride", "dilation", "compute_dtype"))
def basic_block_forward(x_nchw, params, *, stride=1, dilation=1,
                        compute_dtype=jnp.float32):
    """BasicBlock forward. x_nchw: (N, Cin, H, W) float32 -> (N, P, Ho, Wo)."""
    N, Cin, H, W = x_nchw.shape
    P = params["w1"].shape[0]
    pad = dilation
    Ho = (H + 2 * pad - 2 * dilation - 1) // stride + 1
    Wo = (W + 2 * pad - 2 * dilation - 1) // stride + 1

    # NCHW -> NHWC + spatial zero pad: the only activation prep outside the
    # kernel.  TODO(synk): keep activations NHWC between stacked blocks to
    # drop the entry/exit transposes entirely.
    x_nhwc = jnp.transpose(x_nchw, (0, 2, 3, 1))
    xp = jnp.pad(x_nhwc, ((0, 0), (pad, pad), (pad, pad), (0, 0)))

    # Fold BN scales into the GEMM weights; stack the residual 1x1 weights
    # under the conv2 taps so stage two is a single dot.
    s1, b1 = _fold_bn(params["g1"], params["b1"], params["m1"], params["v1"])
    s2, b2 = _fold_bn(params["g2"], params["b2"], params["m2"], params["v2"])
    w1f = _w_oihw_to_mat(params["w1"]) * s1[None, :]          # (9*Cin, P)
    w2f = _w_oihw_to_mat(params["w2"]) * s2[None, :]          # (9*P,  P)
    wp = params["wp"][:, :, 0, 0].T                           # (Cin,  P)
    w2cat = jnp.concatenate([w2f, wp], axis=0)                # (9*P+Cin, P)

    out_flat = _fused_basic_block(
        xp.astype(compute_dtype), w1f.astype(compute_dtype), b1,
        w2cat.astype(compute_dtype), b2,
        stride=stride, dilation=dilation, Ho=Ho, Wo=Wo)       # (N, Ho*Wo, P)

    return jnp.transpose(out_flat.reshape(N, Ho, Wo, P), (0, 3, 1, 2))


# ---------------------------- pure-JAX reference ----------------------------- #

def reference_forward(x_nchw, params, *, stride=1, dilation=1):
    dn = ("NCHW", "OIHW", "NCHW")

    def conv(x, w, s, d, p):
        return jax.lax.conv_general_dilated(
            x, w, (s, s), [(p, p), (p, p)],
            rhs_dilation=(d, d), dimension_numbers=dn)

    def bn(x, g, b, m, v, eps=1e-5):
        sc = g / jnp.sqrt(v + eps)
        return x * sc[None, :, None, None] + (b - m * sc)[None, :, None, None]

    out = conv(x_nchw, params["w1"], stride, dilation, dilation)
    out = jnp.maximum(bn(out, params["g1"], params["b1"],
                         params["m1"], params["v1"]), 0.0)
    out = conv(out, params["w2"], 1, dilation, dilation)
    out = bn(out, params["g2"], params["b2"], params["m2"], params["v2"])
    res = conv(x_nchw, params["wp"], stride, 1, 0)
    return jnp.maximum(out + res, 0.0)


# ----------------------------------- main ------------------------------------ #

if __name__ == "__main__":
    N, Cin, H, W = 2, 4, 16, 16        # input: (2, 4, 16, 16) NCHW
    planes = 8
    stride, dilation = 1, 1

    key = jax.random.PRNGKey(0)
    k = jax.random.split(key, 8)

    def he(kk, shape):
        fan_in = np.prod(shape[1:])
        return (jax.random.normal(kk, shape, jnp.float32)
                * np.sqrt(2.0 / fan_in)).astype(jnp.float32)

    params = {
        "w1": he(k[0], (planes, Cin, 3, 3)),
        "w2": he(k[1], (planes, planes, 3, 3)),
        "wp": he(k[2], (planes, Cin, 1, 1)),
        # deterministic (non-identity) BN params, eval-mode
        "g1": 1.0 + 0.05 * jnp.arange(planes, dtype=jnp.float32),
        "b1": 0.01 * jnp.arange(planes, dtype=jnp.float32),
        "m1": 0.1 * jax.random.normal(k[3], (planes,), jnp.float32),
        "v1": 1.0 + 0.1 * jax.random.uniform(k[4], (planes,), jnp.float32),
        "g2": 1.0 - 0.03 * jnp.arange(planes, dtype=jnp.float32),
        "b2": -0.02 * jnp.arange(planes, dtype=jnp.float32),
        "m2": 0.1 * jax.random.normal(k[5], (planes,), jnp.float32),
        "v2": 1.0 + 0.1 * jax.random.uniform(k[6], (planes,), jnp.float32),
    }

    x = jax.random.normal(k[7], (N, Cin, H, W), jnp.float32)

    out = basic_block_forward(x, params, stride=stride, dilation=dilation)
    out = jax.block_until_ready(out)

    ref = jax.block_until_ready(
        reference_forward(x, params, stride=stride, dilation=dilation))
    np.testing.assert_allclose(np.asarray(out), np.asarray(ref),
                               rtol=1e-4, atol=1e-4)

    print("KERNEL_OK")
</pallas_src>

<mosaic_0001>
module attributes {stable_mosaic.version = 11 : i64} {
  func.func @_basic_block_kernel(%arg0: i32, %arg1: memref<1x18x18x4xf32, #tpu.memory_space<vmem>>, %arg2: memref<36x8xf32, #tpu.memory_space<vmem>>, %arg3: memref<1x8xf32, #tpu.memory_space<vmem>>, %arg4: memref<76x8xf32, #tpu.memory_space<vmem>>, %arg5: memref<1x8xf32, #tpu.memory_space<vmem>>, %arg6: memref<1x256x8xf32, #tpu.memory_space<vmem>>, %arg7: memref<16x16x36xf32, #tpu.memory_space<vmem>>, %arg8: memref<18x32x8xf32, #tpu.memory_space<vmem>>, %arg9: memref<16x16x76xf32, #tpu.memory_space<vmem>>) attributes {dimension_semantics = [#tpu.dimension_semantics<parallel>], iteration_bounds = array<i64: 2>, scalar_prefetch = 0 : i64, scratch_operands = 3 : i64, tpu.core_type = #tpu.core_type<tc>, window_params = [{transform_indices = @transform_0, window_bounds = array<i64: 1, 18, 18, 4>}, {pipeline_mode = #tpu.pipeline_mode<synchronous>, transform_indices = @transform_1, window_bounds = array<i64: 36, 8>}, {pipeline_mode = #tpu.pipeline_mode<synchronous>, transform_indices = @transform_2, window_bounds = array<i64: 1, 8>}, {pipeline_mode = #tpu.pipeline_mode<synchronous>, transform_indices = @transform_3, window_bounds = array<i64: 76, 8>}, {pipeline_mode = #tpu.pipeline_mode<synchronous>, transform_indices = @transform_4, window_bounds = array<i64: 1, 8>}, {transform_indices = @transform_5, window_bounds = array<i64: 1, 256, 8>}]} {
    %c0 = arith.constant 0 : index
    %c0_0 = arith.constant 0 : index
    %c0_1 = arith.constant 0 : index
    %c0_2 = arith.constant 0 : index
    %0 = vector.load %arg1[%c0, %c0_0, %c0_1, %c0_2] : memref<1x18x18x4xf32, #tpu.memory_space<vmem>>, vector<1x16x16x4xf32>
    %1 = vector.shape_cast %0 : vector<1x16x16x4xf32> to vector<16x16x4xf32>
    %c0_3 = arith.constant 0 : index
    %c0_4 = arith.constant 0 : index
    %c0_5 = arith.constant 0 : index
    %2 = vector.load %arg7[%c0_3, %c0_4, %c0_5] : memref<16x16x36xf32, #tpu.memory_space<vmem>>, vector<16x16x4xf32>
    tpu.vector_store %arg7[%c0_3, %c0_4, %c0_5], %1 {strides = array<i32>} : memref<16x16x36xf32, #tpu.memory_space<vmem>>, vector<16x16x4xf32>,
    %c0_6 = arith.constant 0 : index
    %c0_7 = arith.constant 0 : index
    %c1 = arith.constant 1 : index
    %c0_8 = arith.constant 0 : index
    %3 = vector.load %arg1[%c0_6, %c0_7, %c1, %c0_8] : memref<1x18x18x4xf32, #tpu.memory_space<vmem>>, vector<1x16x16x4xf32>
    %4 = vector.shape_cast %3 : vector<1x16x16x4xf32> to vector<16x16x4xf32>
    %c0_9 = arith.constant 0 : index
    %c0_10 = arith.constant 0 : index
    %c4 = arith.constant 4 : index
    %5 = vector.load %arg7[%c0_9, %c0_10, %c4] : memref<16x16x36xf32, #tpu.memory_space<vmem>>, vector<16x16x4xf32>
    tpu.vector_store %arg7[%c0_9, %c0_10, %c4], %4 {strides = array<i32>} : memref<16x16x36xf32, #tpu.memory_space<vmem>>, vector<16x16x4xf32>,
    %c0_11 = arith.constant 0 : index
    %c0_12 = arith.constant 0 : index
    %c2 = arith.constant 2 : index
    %c0_13 = arith.constant 0 : index
    %6 = vector.load %arg1[%c0_11, %c0_12, %c2, %c0_13] : memref<1x18x18x4xf32, #tpu.memory_space<vmem>>, vector<1x16x16x4xf32>
    %7 = vector.shape_cast %6 : vector<1x16x16x4xf32> to vector<16x16x4xf32>
    %c0_14 = arith.constant 0 : index
    %c0_15 = arith.constant 0 : index
    %c8 = arith.constant 8 : index
    %8 = vector.load %arg7[%c0_14, %c0_15, %c8] : memref<16x16x36xf32, #tpu.memory_space<vmem>>, vector<16x16x4xf32>
    tpu.vector_store %arg7[%c0_14, %c0_15, %c8], %7 {strides = array<i32>} : memref<16x16x36xf32, #tpu.memory_space<vmem>>, vector<16x16x4xf32>,
    %c0_16 = arith.constant 0 : index
    %c1_17 = arith.constant 1 : index
    %c0_18 = arith.constant 0 : index
    %c0_19 = arith.constant 0 : index
    %9 = vector.load %arg1[%c0_16, %c1_17, %c0_18, %c0_19] : memref<1x18x18x4xf32, #tpu.memory_space<vmem>>, vector<1x16x16x4xf32>
    %10 = vector.shape_cast %9 : vector<1x16x16x4xf32> to vector<16x16x4xf32>
    %c0_20 = arith.constant 0 : index
    %c0_21 = arith.constant 0 : index
    %c12 = arith.constant 12 : index
    %11 = vector.load %arg7[%c0_20, %c0_21, %c12] : memref<16x16x36xf32, #tpu.memory_space<vmem>>, vector<16x16x4xf32>
    tpu.vector_store %arg7[%c0_20, %c0_21, %c12], %10 {strides = array<i32>} : memref<16x16x36xf32, #tpu.memory_space<vmem>>, vector<16x16x4xf32>,
    %c0_22 = arith.constant 0 : index
    %c1_23 = arith.constant 1 : index
    %c1_24 = arith.constant 1 : index
    %c0_25 = arith.constant 0 : index
    %12 = vector.load %arg1[%c0_22, %c1_23, %c1_24, %c0_25] : memref<1x18x18x4xf32, #tpu.memory_space<vmem>>, vector<1x16x16x4xf32>
    %13 = vector.shape_cast %12 : vector<1x16x16x4xf32> to vector<16x16x4xf32>
    %c0_26 = arith.constant 0 : index
    %c0_27 = arith.constant 0 : index
    %c16 = arith.constant 16 : index
    %14 = vector.load %arg7[%c0_26, %c0_27, %c16] : memref<16x16x36xf32, #tpu.memory_space<vmem>>, vector<16x16x4xf32>
    tpu.vector_store %arg7[%c0_26, %c0_27, %c16], %13 {strides = array<i32>} : memref<16x16x36xf32, #tpu.memory_space<vmem>>, vector<16x16x4xf32>,
    %c0_28 = arith.constant 0 : index
    %c1_29 = arith.constant 1 : index
    %c2_30 = arith.constant 2 : index
    %c0_31 = arith.constant 0 : index
    %15 = vector.load %arg1[%c0_28, %c1_29, %c2_30, %c0_31] : memref<1x18x18x4xf32, #tpu.memory_space<vmem>>, vector<1x16x16x4xf32>
    %16 = vector.shape_cast %15 : vector<1x16x16x4xf32> to vector<16x16x4xf32>
    %c0_32 = arith.constant 0 : index
    %c0_33 = arith.constant 0 : index
    %c20 = arith.constant 20 : index
    %17 = vector.load %arg7[%c0_32, %c0_33, %c20] : memref<16x16x36xf32, #tpu.memory_space<vmem>>, vector<16x16x4xf32>
    tpu.vector_store %arg7[%c0_32, %c0_33, %c20], %16 {strides = array<i32>} : memref<16x16x36xf32, #tpu.memory_space<vmem>>, vector<16x16x4xf32>,
    %c0_34 = arith.constant 0 : index
    %c2_35 = arith.constant 2 : index
    %c0_36 = arith.constant 0 : index
    %c0_37 = arith.constant 0 : index
    %18 = vector.load %arg1[%c0_34, %c2_35, %c0_36, %c0_37] : memref<1x18x18x4xf32, #tpu.memory_space<vmem>>, vector<1x16x16x4xf32>
    %19 = vector.shape_cast %18 : vector<1x16x16x4xf32> to vector<16x16x4xf32>
    %c0_38 = arith.constant 0 : index
    %c0_39 = arith.constant 0 : index
    %c24 = arith.constant 24 : index
    %20 = vector.load %arg7[%c0_38, %c0_39, %c24] : memref<16x16x36xf32, #tpu.memory_space<vmem>>, vector<16x16x4xf32>
    tpu.vector_store %arg7[%c0_38, %c0_39, %c24], %19 {strides = array<i32>} : memref<16x16x36xf32, #tpu.memory_space<vmem>>, vector<16x16x4xf32>,
    %c0_40 = arith.constant 0 : index
    %c2_41 = arith.constant 2 : index
    %c1_42 = arith.constant 1 : index
    %c0_43 = arith.constant 0 : index
    %21 = vector.load %arg1[%c0_40, %c2_41, %c1_42, %c0_43] : memref<1x18x18x4xf32, #tpu.memory_space<vmem>>, vector<1x16x16x4xf32>
    %22 = vector.shape_cast %21 : vector<1x16x16x4xf32> to vector<16x16x4xf32>
    %c0_44 = arith.constant 0 : index
    %c0_45 = arith.constant 0 : index
    %c28 = arith.constant 28 : index
    %23 = vector.load %arg7[%c0_44, %c0_45, %c28] : memref<16x16x36xf32, #tpu.memory_space<vmem>>, vector<16x16x4xf32>
    tpu.vector_store %arg7[%c0_44, %c0_45, %c28], %22 {strides = array<i32>} : memref<16x16x36xf32, #tpu.memory_space<vmem>>, vector<16x16x4xf32>,
    %c0_46 = arith.constant 0 : index
    %c2_47 = arith.constant 2 : index
    %c2_48 = arith.constant 2 : index
    %c0_49 = arith.constant 0 : index
    %24 = vector.load %arg1[%c0_46, %c2_47, %c2_48, %c0_49] : memref<1x18x18x4xf32, #tpu.memory_space<vmem>>, vector<1x16x16x4xf32>
    %25 = vector.shape_cast %24 : vector<1x16x16x4xf32> to vector<16x16x4xf32>
    %c0_50 = arith.constant 0 : index
    %c0_51 = arith.constant 0 : index
    %c32 = arith.constant 32 : index
    %26 = vector.load %arg7[%c0_50, %c0_51, %c32] : memref<16x16x36xf32, #tpu.memory_space<vmem>>, vector<16x16x4xf32>
    tpu.vector_store %arg7[%c0_50, %c0_51, %c32], %25 {strides = array<i32>} : memref<16x16x36xf32, #tpu.memory_space<vmem>>, vector<16x16x4xf32>,
    %c0_52 = arith.constant 0 : index
    %c0_53 = arith.constant 0 : index
    %c0_54 = arith.constant 0 : index
    %27 = vector.load %arg7[%c0_52, %c0_53, %c0_54] : memref<16x16x36xf32, #tpu.memory_space<vmem>>, vector<16x16x36xf32>
    %28 = vector.shape_cast %27 : vector<16x16x36xf32> to vector<256x36xf32>
    %c0_55 = arith.constant 0 : index
    %c0_56 = arith.constant 0 : index
    %29 = vector.load %arg2[%c0_55, %c0_56] : memref<36x8xf32, #tpu.memory_space<vmem>>, vector<36x8xf32>
    %cst = arith.constant dense<0.000000e+00> : vector<256x8xf32>
    %30 = tpu.matmul %28, %29, %cst {dimension_numbers = #tpu.dot_dimension_numbers<[1], [0], [0], [1], [0, 0, 1, 1], [], []>} : vector<256x36xf32>, vector<36x8xf32>, vector<256x8xf32> -> vector<256x8xf32>
    %c0_57 = arith.constant 0 : index
    %c0_58 = arith.constant 0 : index
    %31 = vector.load %arg3[%c0_57, %c0_58] : memref<1x8xf32, #tpu.memory_space<vmem>>, vector<1x8xf32>
    %32 = vector.broadcast %31 : vector<1x8xf32> to vector<256x8xf32>
    %33 = arith.addf %30, %32 : vector<256x8xf32>
    %cst_59 = arith.constant 0.000000e+00 : f32
    %34 = vector.broadcast %cst_59 : f32 to vector<256x8xf32>
    %35 = arith.maximumf %33, %34 : vector<256x8xf32>
    %cst_60 = arith.constant 0.000000e+00 : f32
    %36 = vector.broadcast %cst_60 : f32 to vector<18x32x8xf32>
    %c0_61 = arith.constant 0 : index
    %c0_62 = arith.constant 0 : index
    %c0_63 = arith.constant 0 : index
    %37 = vector.load %arg8[%c0_61, %c0_62, %c0_63] : memref<18x32x8xf32, #tpu.memory_space<vmem>>, vector<18x32x8xf32>
    tpu.vector_store %arg8[%c0_61, %c0_62, %c0_63], %36 {strides = array<i32>} : memref<18x32x8xf32, #tpu.memory_space<vmem>>, vector<18x32x8xf32>,
    %38 = vector.shape_cast %35 : vector<256x8xf32> to vector<16x16x8xf32>
    %c1_64 = arith.constant 1 : index
    %c8_65 = arith.constant 8 : index
    %c0_66 = arith.constant 0 : index
    %39 = vector.load %arg8[%c1_64, %c8_65, %c0_66] : memref<18x32x8xf32, #tpu.memory_space<vmem>>, vector<16x16x8xf32>
    tpu.vector_store %arg8[%c1_64, %c8_65, %c0_66], %38 {strides = array<i32>} : memref<18x32x8xf32, #tpu.memory_space<vmem>>, vector<16x16x8xf32>,
    %c0_67 = arith.constant 0 : index
    %c7 = arith.constant 7 : index
    %c0_68 = arith.constant 0 : index
    %40 = vector.load %arg8[%c0_67, %c7, %c0_68] : memref<18x32x8xf32, #tpu.memory_space<vmem>>, vector<16x16x8xf32>
    %c0_69 = arith.constant 0 : index
    %c0_70 = arith.constant 0 : index
    %c0_71 = arith.constant 0 : index
    %41 = vector.load %arg9[%c0_69, %c0_70, %c0_71] : memref<16x16x76xf32, #tpu.memory_space<vmem>>, vector<16x16x8xf32>
    tpu.vector_store %arg9[%c0_69, %c0_70, %c0_71], %40 {strides = array<i32>} : memref<16x16x76xf32, #tpu.memory_space<vmem>>, vector<16x16x8xf32>,
    %c0_72 = arith.constant 0 : index
    %c8_73 = arith.constant 8 : index
    %c0_74 = arith.constant 0 : index
    %42 = vector.load %arg8[%c0_72, %c8_73, %c0_74] : memref<18x32x8xf32, #tpu.memory_space<vmem>>, vector<16x16x8xf32>
    %c0_75 = arith.constant 0 : index
    %c0_76 = arith.constant 0 : index
    %c8_77 = arith.constant 8 : index
    %43 = vector.load %arg9[%c0_75, %c0_76, %c8_77] : memref<16x16x76xf32, #tpu.memory_space<vmem>>, vector<16x16x8xf32>
    tpu.vector_store %arg9[%c0_75, %c0_76, %c8_77], %42 {strides = array<i32>} : memref<16x16x76xf32, #tpu.memory_space<vmem>>, vector<16x16x8xf32>,
    %c0_78 = arith.constant 0 : index
    %c9 = arith.constant 9 : index
    %c0_79 = arith.constant 0 : index
    %44 = vector.load %arg8[%c0_78, %c9, %c0_79] : memref<18x32x8xf32, #tpu.memory_space<vmem>>, vector<16x16x8xf32>
    %c0_80 = arith.constant 0 : index
    %c0_81 = arith.constant 0 : index
    %c16_82 = arith.constant 16 : index
    %45 = vector.load %arg9[%c0_80, %c0_81, %c16_82] : memref<16x16x76xf32, #tpu.memory_space<vmem>>, vector<16x16x8xf32>
    tpu.vector_store %arg9[%c0_80, %c0_81, %c16_82], %44 {strides = array<i32>} : memref<16x16x76xf32, #tpu.memory_space<vmem>>, vector<16x16x8xf32>,
    %c1_83 = arith.constant 1 : index
    %c7_84 = arith.constant 7 : index
    %c0_85 = arith.constant 0 : index
    %46 = vector.load %arg8[%c1_83, %c7_84, %c0_85] : memref<18x32x8xf32, #tpu.memory_space<vmem>>, vector<16x16x8xf32>
    %c0_86 = arith.constant 0 : index
    %c0_87 = arith.constant 0 : index
    %c24_88 = arith.constant 24 : index
    %47 = vector.load %arg9[%c0_86, %c0_87, %c24_88] : memref<16x16x76xf32, #tpu.memory_space<vmem>>, vector<16x16x8xf32>
    tpu.vector_store %arg9[%c0_86, %c0_87, %c24_88], %46 {strides = array<i32>} : memref<16x16x76xf32, #tpu.memory_space<vmem>>, vector<16x16x8xf32>,
    %c1_89 = arith.constant 1 : index
    %c8_90 = arith.constant 8 : index
    %c0_91 = arith.constant 0 : index
    %48 = vector.load %arg8[%c1_89, %c8_90, %c0_91] : memref<18x32x8xf32, #tpu.memory_space<vmem>>, vector<16x16x8xf32>
    %c0_92 = arith.constant 0 : index
    %c0_93 = arith.constant 0 : index
    %c32_94 = arith.constant 32 : index
    %49 = vector.load %arg9[%c0_92, %c0_93, %c32_94] : memref<16x16x76xf32, #tpu.memory_space<vmem>>, vector<16x16x8xf32>
    tpu.vector_store %arg9[%c0_92, %c0_93, %c32_94], %48 {strides = array<i32>} : memref<16x16x76xf32, #tpu.memory_space<vmem>>, vector<16x16x8xf32>,
    %c1_95 = arith.constant 1 : index
    %c9_96 = arith.constant 9 : index
    %c0_97 = arith.constant 0 : index
    %50 = vector.load %arg8[%c1_95, %c9_96, %c0_97] : memref<18x32x8xf32, #tpu.memory_space<vmem>>, vector<16x16x8xf32>
    %c0_98 = arith.constant 0 : index
    %c0_99 = arith.constant 0 : index
    %c40 = arith.constant 40 : index
    %51 = vector.load %arg9[%c0_98, %c0_99, %c40] : memref<16x16x76xf32, #tpu.memory_space<vmem>>, vector<16x16x8xf32>
    tpu.vector_store %arg9[%c0_98, %c0_99, %c40], %50 {strides = array<i32>} : memref<16x16x76xf32, #tpu.memory_space<vmem>>, vector<16x16x8xf32>,
    %c2_100 = arith.constant 2 : index
    %c7_101 = arith.constant 7 : index
    %c0_102 = arith.constant 0 : index
    %52 = vector.load %arg8[%c2_100, %c7_101, %c0_102] : memref<18x32x8xf32, #tpu.memory_space<vmem>>, vector<16x16x8xf32>
    %c0_103 = arith.constant 0 : index
    %c0_104 = arith.constant 0 : index
    %c48 = arith.constant 48 : index
    %53 = vector.load %arg9[%c0_103, %c0_104, %c48] : memref<16x16x76xf32, #tpu.memory_space<vmem>>, vector<16x16x8xf32>
    tpu.vector_store %arg9[%c0_103, %c0_104, %c48], %52 {strides = array<i32>} : memref<16x16x76xf32, #tpu.memory_space<vmem>>, vector<16x16x8xf32>,
    %c2_105 = arith.constant 2 : index
    %c8_106 = arith.constant 8 : index
    %c0_107 = arith.constant 0 : index
    %54 = vector.load %arg8[%c2_105, %c8_106, %c0_107] : memref<18x32x8xf32, #tpu.memory_space<vmem>>, vector<16x16x8xf32>
    %c0_108 = arith.constant 0 : index
    %c0_109 = arith.constant 0 : index
    %c56 = arith.constant 56 : index
    %55 = vector.load %arg9[%c0_108, %c0_109, %c56] : memref<16x16x76xf32, #tpu.memory_space<vmem>>, vector<16x16x8xf32>
    tpu.vector_store %arg9[%c0_108, %c0_109, %c56], %54 {strides = array<i32>} : memref<16x16x76xf32, #tpu.memory_space<vmem>>, vector<16x16x8xf32>,
    %c2_110 = arith.constant 2 : index
    %c9_111 = arith.constant 9 : index
    %c0_112 = arith.constant 0 : index
    %56 = vector.load %arg8[%c2_110, %c9_111, %c0_112] : memref<18x32x8xf32, #tpu.memory_space<vmem>>, vector<16x16x8xf32>
    %c0_113 = arith.constant 0 : index
    %c0_114 = arith.constant 0 : index
    %c64 = arith.constant 64 : index
    %57 = vector.load %arg9[%c0_113, %c0_114, %c64] : memref<16x16x76xf32, #tpu.memory_space<vmem>>, vector<16x16x8xf32>
    tpu.vector_store %arg9[%c0_113, %c0_114, %c64], %56 {strides = array<i32>} : memref<16x16x76xf32, #tpu.memory_space<vmem>>, vector<16x16x8xf32>,
    %c0_115 = arith.constant 0 : index
    %c1_116 = arith.constant 1 : index
    %c1_117 = arith.constant 1 : index
    %c0_118 = arith.constant 0 : index
    %58 = vector.load %arg1[%c0_115, %c1_116, %c1_117, %c0_118] : memref<1x18x18x4xf32, #tpu.memory_space<vmem>>, vector<1x16x16x4xf32>
    %59 = vector.shape_cast %58 : vector<1x16x16x4xf32> to vector<16x16x4xf32>
    %c0_119 = arith.constant 0 : index
    %c0_120 = arith.constant 0 : index
    %c72 = arith.constant 72 : index
    %60 = vector.load %arg9[%c0_119, %c0_120, %c72] : memref<16x16x76xf32, #tpu.memory_space<vmem>>, vector<16x16x4xf32>
    tpu.vector_store %arg9[%c0_119, %c0_120, %c72], %59 {strides = array<i32>} : memref<16x16x76xf32, #tpu.memory_space<vmem>>, vector<16x16x4xf32>,
    %c0_121 = arith.constant 0 : index
    %c0_122 = arith.constant 0 : index
    %c0_123 = arith.constant 0 : index
    %61 = vector.load %arg9[%c0_121, %c0_122, %c0_123] : memref<16x16x76xf32, #tpu.memory_space<vmem>>, vector<16x16x76xf32>
    %62 = vector.shape_cast %61 : vector<16x16x76xf32> to vector<256x76xf32>
    %c0_124 = arith.constant 0 : index
    %c0_125 = arith.constant 0 : index
    %63 = vector.load %arg4[%c0_124, %c0_125] : memref<76x8xf32, #tpu.memory_space<vmem>>, vector<76x8xf32>
    %cst_126 = arith.constant dense<0.000000e+00> : vector<256x8xf32>
    %64 = tpu.matmul %62, %63, %cst_126 {dimension_numbers = #tpu.dot_dimension_numbers<[1], [0], [0], [1], [0, 0, 1, 1], [], []>} : vector<256x76xf32>, vector<76x8xf32>, vector<256x8xf32> -> vector<256x8xf32>
    %c0_127 = arith.constant 0 : index
    %c0_128 = arith.constant 0 : index
    %65 = vector.load %arg5[%c0_127, %c0_128] : memref<1x8xf32, #tpu.memory_space<vmem>>, vector<1x8xf32>
    %66 = vector.broadcast %65 : vector<1x8xf32> to vector<256x8xf32>
    %67 = arith.addf %64, %66 : vector<256x8xf32>
    %cst_129 = arith.constant 0.000000e+00 : f32
    %68 = vector.broadcast %cst_129 : f32 to vector<256x8xf32>
    %69 = arith.maximumf %67, %68 : vector<256x8xf32>
    %c0_130 = arith.constant 0 : index
    %c0_131 = arith.constant 0 : index
    %c0_132 = arith.constant 0 : index
    %70 = vector.load %arg6[%c0_130, %c0_131, %c0_132] : memref<1x256x8xf32, #tpu.memory_space<vmem>>, vector<1x256x8xf32>
    %71 = vector.shape_cast %70 : vector<1x256x8xf32> to vector<256x8xf32>
    %72 = vector.shape_cast %69 : vector<256x8xf32> to vector<1x256x8xf32>
    tpu.vector_store %arg6[%c0_130, %c0_131, %c0_132], %72 {strides = array<i32>} : memref<1x256x8xf32, #tpu.memory_space<vmem>>, vector<1x256x8xf32>,
    return
  }
  func.func @transform_0(%arg0: i32) -> (i32, i32, i32, i32) {
    %c0_i32 = arith.constant 0 : i32
    %c0_i32_0 = arith.constant 0 : i32
    %c0_i32_1 = arith.constant 0 : i32
    %c0_i32_2 = arith.constant 0 : i32
    return %arg0, %c0_i32, %c0_i32_0, %c0_i32_1 : i32, i32, i32, i32
  }
  func.func @transform_1(%arg0: i32) -> (i32, i32) {
    %c0_i32 = arith.constant 0 : i32
    %c0_i32_0 = arith.constant 0 : i32
    %c0_i32_1 = arith.constant 0 : i32
    return %c0_i32, %c0_i32_0 : i32, i32
  }
  func.func @transform_2(%arg0: i32) -> (i32, i32) {
    %c0_i32 = arith.constant 0 : i32
    %c0_i32_0 = arith.constant 0 : i32
    %c0_i32_1 = arith.constant 0 : i32
    return %c0_i32, %c0_i32_0 : i32, i32
  }
  func.func @transform_3(%arg0: i32) -> (i32, i32) {
    %c0_i32 = arith.constant 0 : i32
    %c0_i32_0 = arith.constant 0 : i32
    %c0_i32_1 = arith.constant 0 : i32
    return %c0_i32, %c0_i32_0 : i32, i32
  }
  func.func @transform_4(%arg0: i32) -> (i32, i32) {
    %c0_i32 = arith.constant 0 : i32
    %c0_i32_0 = arith.constant 0 : i32
    %c0_i32_1 = arith.constant 0 : i32
    return %c0_i32, %c0_i32_0 : i32, i32
  }
  func.func @transform_5(%arg0: i32) -> (i32, i32, i32) {
    %c0_i32 = arith.constant 0 : i32
    %c0_i32_0 = arith.constant 0 : i32
    %c0_i32_1 = arith.constant 0 : i32
    return %arg0, %c0_i32, %c0_i32_0 : i32, i32, i32
  }
}

</mosaic_0001>

<llo_original>
// kernel: basic_block_forward.1
$region0: #{basic_block_forward.1}
  #allocation0 [shape = 'u32[]', space=smem, size = 0x4, offset = 0x4, fixed_abs, tag = 'smem constant byte address 0x4 - core index']
  #allocation1 [shape = 'u32[144,128]{1,0:T(1,128)}', space=vmem, size = 0x12000, scoped, tag = 'internal scratch']
  #allocation2 [shape = 'f32[16,16,36]{2,1,0:T(8,128)}', space=vmem, size = 0x20000, scoped, tag = 'scratch operand']
  #allocation3 [shape = 'f32[18,32,8]{2,1,0:T(8,128)}', space=vmem, size = 0x48000, scoped, tag = 'scratch operand']
  #allocation4 [shape = 'f32[16,16,76]{2,1,0:T(8,128)}', space=vmem, size = 0x20000, scoped, tag = 'scratch operand']
  %s0 = inlined_call_operand.vmem [shape: f32[2,18,18,4], index: 0, kind: input, shape index: {}]
  %s1 = inlined_call_operand.vmem [shape: f32[36,8], index: 1, kind: input, shape index: {}]
  %s2 = inlined_call_operand.vmem [shape: f32[1,8], index: 2, kind: input, shape index: {}]
  %s3 = inlined_call_operand.vmem [shape: f32[76,8], index: 3, kind: input, shape index: {}]
  %s4 = inlined_call_operand.vmem [shape: f32[1,8], index: 4, kind: input, shape index: {}]
  %s5 = inlined_call_operand.vmem [shape: f32[2,256,8], index: 5, kind: output, shape index: {}]
  %s6 = sld [smem:[#allocation0]]
  $region53: #{basic_block_forward.1} parent=0
    _
  %s8 = ssub.s32 1, %s6
  %s9 = scalar_select 0, %s8, %s6
  loop: start=0, step=1, limit=4
  $region2: #{basic_block_forward.1} parent=0 // loop_pre_header
    _
  $region3: #{basic_block_forward.1} parent=0 // loop_header
    %s11 = sphi 0, %s15
    %p12 = scmp.ge.s32.totalorder %s11, 4
    %s21 = sphi 0, %s23
    %s24 = sphi 0, %s21
    %s25 = sphi 0, %s24
    %s41 = sphi 0, %s25
    %s45 = sphi 0, %s45
    %s47 = sphi 0, %s45
    %s48 = sphi 0, %s47
    %s62 = sphi 0, %s48
    %s66 = sphi 0, %s66
    %s68 = sphi 0, %s66
    %s69 = sphi 0, %s68
    %s83 = sphi 0, %s69
    %s87 = sphi 0, %s87
    %s89 = sphi 0, %s87
    %s90 = sphi 0, %s89
    %s104 = sphi 0, %s90
    %s108 = sphi 0, %s108
    %s110 = sphi 0, %s108
    %s111 = sphi 0, %s110
    %s125 = sphi 0, %s111
    %s131 = sphi 0, %s133
    %s134 = sphi 0, %s131
    %s135 = sphi 0, %s134
    %s151 = sphi 0, %s135
  $region4: #{basic_block_forward.1} parent=0 // loop_header_branch
    %14 = sbr.rel (%p12) target = $region8
  $region5: #{basic_block_forward.1} parent=0 // loop_body
    %s16 = ssub.s32 %s11, 1
    %s17 = ssub.s32 %s11, 2
    %s18 = sadd.s32 %s11, 1
    %s19 = ssub.s32 %s11, %s18
    %p20 = scmp.eq.s32.totalorder %s19, 0
    %s22 = sadd.s32 %s21, 1
    %s23 = scalar_select %p20, %s21, %s22
    %p26 = pneg %p20
    %p27 = scmp.eq.s32.totalorder %s11, 1
    %p28 = por %p26, %p27
    %p29 = scmp.ne.s32.totalorder %s21, %s24
    %p30 = scmp.eq.s32.totalorder %s11, 0
    %p31 = por %p29, %p30
    %p32 = scmp.ne.s32.totalorder %s21, %s24
    %p33 = scmp.eq.s32.totalorder %s16, 1
    %p34 = por %p32, %p33
    %p35 = scmp.ne.s32.totalorder %s24, %s25
    %p36 = scmp.eq.s32.totalorder %s16, 0
    %p37 = por %p35, %p36
    %p38 = scmp.ne.s32.totalorder %s24, %s25
    %p39 = scmp.eq.s32.totalorder %s17, 1
    %p40 = por %p38, %p39
    %p42 = scmp.ne.s32.totalorder %s25, %s41
    %p43 = scmp.eq.s32.totalorder %s17, 0
    %p44 = por %p42, %p43
    %s46 = sadd.s32 %s45, 1
    %p49 = scmp.eq.s32.totalorder %s11, 1
    %p50 = scmp.ne.s32.totalorder %s45, %s47
    %p51 = scmp.eq.s32.totalorder %s11, 0
    %p52 = por %p50, %p51
    %p53 = scmp.ne.s32.totalorder %s45, %s47
    %p54 = scmp.eq.s32.totalorder %s16, 1
    %p55 = por %p53, %p54
    %p56 = scmp.ne.s32.totalorder %s47, %s48
    %p57 = scmp.eq.s32.totalorder %s16, 0
    %p58 = por %p56, %p57
    %p59 = scmp.ne.s32.totalorder %s47, %s48
    %p60 = scmp.eq.s32.totalorder %s17, 1
    %p61 = por %p59, %p60
    %p63 = scmp.ne.s32.totalorder %s48, %s62
    %p64 = scmp.eq.s32.totalorder %s17, 0
    %p65 = por %p63, %p64
    %s67 = sadd.s32 %s66, 1
    %p70 = scmp.eq.s32.totalorder %s11, 1
    %p71 = scmp.ne.s32.totalorder %s66, %s68
    %p72 = scmp.eq.s32.totalorder %s11, 0
    %p73 = por %p71, %p72
    %p74 = scmp.ne.s32.totalorder %s66, %s68
    %p75 = scmp.eq.s32.totalorder %s16, 1
    %p76 = por %p74, %p75
    %p77 = scmp.ne.s32.totalorder %s68, %s69
    %p78 = scmp.eq.s32.totalorder %s16, 0
    %p79 = por %p77, %p78
    %p80 = scmp.ne.s32.totalorder %s68, %s69
    %p81 = scmp.eq.s32.totalorder %s17, 1
    %p82 = por %p80, %p81
    %p84 = scmp.ne.s32.totalorder %s69, %s83
    %p85 = scmp.eq.s32.totalorder %s17, 0
    %p86 = por %p84, %p85
    %s88 = sadd.s32 %s87, 1
    %p91 = scmp.eq.s32.totalorder %s11, 1
    %p92 = scmp.ne.s32.totalorder %s87, %s89
    %p93 = scmp.eq.s32.totalorder %s11, 0
    %p94 = por %p92, %p93
    %p95 = scmp.ne.s32.totalorder %s87, %s89
    %p96 = scmp.eq.s32.totalorder %s16, 1
    %p97 = por %p95, %p96
    %p98 = scmp.ne.s32.totalorder %s89, %s90
    %p99 = scmp.eq.s32.totalorder %s16, 0
    %p100 = por %p98, %p99
    %p101 = scmp.ne.s32.totalorder %s89, %s90
    %p102 = scmp.eq.s32.totalorder %s17, 1
    %p103 = por %p101, %p102
    %p105 = scmp.ne.s32.totalorder %s90, %s104
    %p106 = scmp.eq.s32.totalorder %s17, 0
    %p107 = por %p105, %p106
    %s109 = sadd.s32 %s108, 1
    %p112 = scmp.eq.s32.totalorder %s11, 1
    %p113 = scmp.ne.s32.totalorder %s108, %s110
    %p114 = scmp.eq.s32.totalorder %s11, 0
    %p115 = por %p113, %p114
    %p116 = scmp.ne.s32.totalorder %s108, %s110
    %p117 = scmp.eq.s32.totalorder %s16, 1
    %p118 = por %p116, %p117
    %p119 = scmp.ne.s32.totalorder %s110, %s111
    %p120 = scmp.eq.s32.totalorder %s16, 0
    %p121 = por %p119, %p120
    %p122 = scmp.ne.s32.totalorder %s110, %s111
    %p123 = scmp.eq.s32.totalorder %s17, 1
    %p124 = por %p122, %p123
    %p126 = scmp.ne.s32.totalorder %s111, %s125
    %p127 = scmp.eq.s32.totalorder %s17, 0
    %p128 = por %p126, %p127
    %s129 = ssub.s32 %s11, %s18
    %p130 = scmp.eq.s32.totalorder %s129, 0
    %s132 = sadd.s32 %s131, 1
    %s133 = scalar_select %p130, %s131, %s132
    %p136 = pneg %p130
    %p137 = scmp.eq.s32.totalorder %s11, 1
    %p138 = por %p136, %p137
    %p139 = scmp.ne.s32.totalorder %s131, %s134
    %p140 = scmp.eq.s32.totalorder %s11, 0
    %p141 = por %p139, %p140
    %p142 = scmp.ne.s32.totalorder %s131, %s134
    %p143 = scmp.eq.s32.totalorder %s16, 1
    %p144 = por %p142, %p143
    %p145 = scmp.ne.s32.totalorder %s134, %s135
    %p146 = scmp.eq.s32.totalorder %s16, 0
    %p147 = por %p145, %p146
    %p148 = scmp.ne.s32.totalorder %s134, %s135
    %p149 = scmp.eq.s32.totalorder %s17, 1
    %p150 = por %p148, %p149
    %p152 = scmp.ne.s32.totalorder %s135, %s151
    %p153 = scmp.eq.s32.totalorder %s17, 0
    %p154 = por %p152, %p153
    %p155 = scmp.le.s32.totalorder 1, %s11
    %p156 = scmp.lt.s32.totalorder %s11, 3
    %p157 = pnand %p155, %p156
    %p158 = pneg %p157
    // Predicated region
    $region9: #{basic_block_forward.1} parent=5 // pred_check
      _
    $region10: #{basic_block_forward.1} parent=5 // pred_check_branch
      %160 = sbr.rel (%p157) target = $region12
    $region11: #{basic_block_forward.1} parent=5 // pred_region
      %s161 = ssub.s32 %s11, 1
      // Predicated region
      $region13: #{basic_block_forward.1} parent=11 // pred_check
        %p162 = pneg %p58
      $region14: #{basic_block_forward.1} parent=11 // pred_check_branch
        %164 = sbr.rel (%p162) target = $region16
      $region15: #{basic_block_forward.1} parent=11 // pred_region
        _
      $region16: #{basic_block_forward.1} parent=11 // pred_fallthru
        _
      // Predicated region
      $region17: #{basic_block_forward.1} parent=11 // pred_check
        %p165 = pneg %p79
      $region18: #{basic_block_forward.1} parent=11 // pred_check_branch
        %167 = sbr.rel (%p165) target = $region20
      $region19: #{basic_block_forward.1} parent=11 // pred_region
        _
      $region20: #{basic_block_forward.1} parent=11 // pred_fallthru
        _
      // Predicated region
      $region21: #{basic_block_forward.1} parent=11 // pred_check
        %p168 = pneg %p100
      $region22: #{basic_block_forward.1} parent=11 // pred_check_branch
        %170 = sbr.rel (%p168) target = $region24
      $region23: #{basic_block_forward.1} parent=11 // pred_region
        _
      $region24: #{basic_block_forward.1} parent=11 // pred_fallthru
        _
      // Predicated region
      $region25: #{basic_block_forward.1} parent=11 // pred_check
        %p171 = pneg %p121
      $region26: #{basic_block_forward.1} parent=11 // pred_check_branch
        %173 = sbr.rel (%p171) target = $region28
      $region27: #{basic_block_forward.1} parent=11 // pred_region
        _
      $region28: #{basic_block_forward.1} parent=11 // pred_fallthru
        _
    $region12: #{basic_block_forward.1} parent=5 // pred_fallthru
      _
    %p174 = scmp.lt.s32.totalorder %s11, 2
    // Predicated region
    $region29: #{basic_block_forward.1} parent=5 // pred_check
      %p175 = pneg %p174
    $region30: #{basic_block_forward.1} parent=5 // pred_check_branch
      %177 = sbr.rel (%p175) target = $region32
    $region31: #{basic_block_forward.1} parent=5 // pred_region
      // Predicated region
      $region33: #{basic_block_forward.1} parent=31 // pred_check
        %p178 = pneg %p31
      $region34: #{basic_block_forward.1} parent=31 // pred_check_branch
        %180 = sbr.rel (%p178) target = $region36
      $region35: #{basic_block_forward.1} parent=31 // pred_region
        %p181 = scmp.lt.s32.totalorder %s11, 1
        %s182 = scalar_select %p181, %s11, 1
        %s183 = smul.addr %s182, 54
        %s184 = smul.addr %s183, 8
        %s185 = scalar_lea.vmem %s0, %s184
      $region36: #{basic_block_forward.1} parent=31 // pred_fallthru
        _
    $region32: #{basic_block_forward.1} parent=5 // pred_fallthru
      _
    %p186 = scmp.le.s32.totalorder 1, %s11
    %p187 = scmp.lt.s32.totalorder %s11, 3
    %p188 = pnand %p186, %p187
    %p189 = pneg %p188
    // Predicated region
    $region37: #{basic_block_forward.1} parent=5 // pred_check
      _
    $region38: #{basic_block_forward.1} parent=5 // pred_check_branch
      %191 = sbr.rel (%p188) target = $region40
    $region39: #{basic_block_forward.1} parent=5 // pred_region
      %s192 = ssub.s32 %s11, 1
      %p193 = scmp.lt.s32.totalorder %s16, 1
      %s194 = scalar_select %p193, %s16, 1
      %s195 = smul.addr %s194, 54
      %s196 = smul.addr %s195, 8
      %s197 = scalar_lea.vmem %s0, %s196
      %p198 = pneg %p37
      %p199 = pneg %p34
      %p200 = pneg %p58
      %p201 = pneg %p55
      %p202 = pneg %p79
      %p203 = pneg %p76
      %p204 = pneg %p100
      %p205 = pneg %p97
      %p206 = pneg %p121
      %p207 = pneg %p118
      %p208 = pneg %p147
      %p209 = pneg %p144
      %p210 = scmp.lt.s32.totalorder %s16, 1
      %s211 = scalar_select %p210, %s16, 1
      %s212 = smul.addr %s211, 32
      %s213 = smul.addr %s212, 8
      %s214 = scalar_lea.vmem %s5, %s213
      %p215 = scmp.lt.s32.totalorder %s16, 1
      %s216 = scalar_select %p215, %s16, 1
      %s217 = smul.addr %s216, 54
      %s218 = smul.addr %s217, 8
      %s219 = scalar_lea.vmem %s0, %s218
      %p220 = scmp.lt.s32.totalorder %s16, 1
      %s221 = scalar_select %p220, %s16, 1
      %s222 = smul.addr %s221, 32
      %s223 = smul.addr %s222, 8
      %s224 = scalar_lea.vmem %s5, %s223
      %v225 = vld [vmem:[%s219] sm:$0xff]
      %v226 = vld [vmem:[%s219 + $0x8] sm:$0xff]
      %v227 = vld [vmem:[%s219 + $0x18] sm:$0xff]
      %v228 = vld [vmem:[%s219 + $0x20] sm:$0xff]
      %v229 = vld [vmem:[%s219 + $0x30] sm:$0xff]
      %v230 = vld [vmem:[%s219 + $0x38] sm:$0xff]
      %v231 = vld [vmem:[%s219 + $0x48] sm:$0xff]
      %v232 = vld [vmem:[%s219 + $0x50] sm:$0xff]
      %v233 = vld [vmem:[%s219 + $0x60] sm:$0xff]
      %v234 = vld [vmem:[%s219 + $0x68] sm:$0xff]
      %v235 = vld [vmem:[%s219 + $0x78] sm:$0xff]
      %v236 = vld [vmem:[%s219 + $0x80] sm:$0xff]
      %v237 = vld [vmem:[%s219 + $0x90] sm:$0xff]
      %v238 = vld [vmem:[%s219 + $0x98] sm:$0xff]
      %v239 = vld [vmem:[%s219 + $0xa8] sm:$0xff]
      %v240 = vld [vmem:[%s219 + $0xb0] sm:$0xff]
      %v241 = vld [vmem:[%s219 + $0xc0] sm:$0xff]
      %v242 = vld [vmem:[%s219 + $0xc8] sm:$0xff]
      %v243 = vld [vmem:[%s219 + $0xd8] sm:$0xff]
      %v244 = vld [vmem:[%s219 + $0xe0] sm:$0xff]
      %v245 = vld [vmem:[%s219 + $0xf0] sm:$0xff]
      %v246 = vld [vmem:[%s219 + $0xf8] sm:$0xff]
      %v247 = vld [vmem:[%s219 + $0x108] sm:$0xff]
      %v248 = vld [vmem:[%s219 + $0x110] sm:$0xff]
      %v249 = vld [vmem:[%s219 + $0x120] sm:$0xff]
      %v250 = vld [vmem:[%s219 + $0x128] sm:$0xff]
      %v251 = vld [vmem:[%s219 + $0x138] sm:$0xff]
      %v252 = vld [vmem:[%s219 + $0x140] sm:$0xff]
      %v253 = vld [vmem:[%s219 + $0x150] sm:$0xff]
      %v254 = vld [vmem:[%s219 + $0x158] sm:$0xff]
      %v255 = vld [vmem:[%s219 + $0x168] sm:$0xff]
      %v256 = vld [vmem:[%s219 + $0x170] sm:$0xff]
      %vm257 = vcmask 31744
      %258 = vst.msk [vmem:[#allocation2] sm:$0xff] %vm257, %v225
      %259 = vst.msk [vmem:[#allocation2 + $0x8] sm:$0xff] %vm257, %v226
      %260 = vst.msk [vmem:[#allocation2 + $0x10] sm:$0xff] %vm257, %v227
      %261 = vst.msk [vmem:[#allocation2 + $0x18] sm:$0xff] %vm257, %v228
      %262 = vst.msk [vmem:[#allocation2 + $0x20] sm:$0xff] %vm257, %v229
      %263 = vst.msk [vmem:[#allocation2 + $0x28] sm:$0xff] %vm257, %v230
      %264 = vst.msk [vmem:[#allocation2 + $0x30] sm:$0xff] %vm257, %v231
      %265 = vst.msk [vmem:[#allocation2 + $0x38] sm:$0xff] %vm257, %v232
      %266 = vst.msk [vmem:[#allocation2 + $0x40] sm:$0xff] %vm257, %v233
      %267 = vst.msk [vmem:[#allocation2 + $0x48] sm:$0xff] %vm257, %v234
      %268 = vst.msk [vmem:[#allocation2 + $0x50] sm:$0xff] %vm257, %v235
      %269 = vst.msk [vmem:[#allocation2 + $0x58] sm:$0xff] %vm257, %v236
      %270 = vst.msk [vmem:[#allocation2 + $0x60] sm:$0xff] %vm257, %v237
      %271 = vst.msk [vmem:[#allocation2 + $0x68] sm:$0xff] %vm257, %v238
      %272 = vst.msk [vmem:[#allocation2 + $0x70] sm:$0xff] %vm257, %v239
      %273 = vst.msk [vmem:[#allocation2 + $0x78] sm:$0xff] %vm257, %v240
      %274 = vst.msk [vmem:[#allocation2 + $0x80] sm:$0xff] %vm257, %v241
      %275 = vst.msk [vmem:[#allocation2 + $0x88] sm:$0xff] %vm257, %v242
      %276 = vst.msk [vmem:[#allocation2 + $0x90] sm:$0xff] %vm257, %v243
      %277 = vst.msk [vmem:[#allocation2 + $0x98] sm:$0xff] %vm257, %v244
      %278 = vst.msk [vmem:[#allocation2 + $0xa0] sm:$0xff] %vm257, %v245
      %279 = vst.msk [vmem:[#allocation2 + $0xa8] sm:$0xff] %vm257, %v246
      %280 = vst.msk [vmem:[#allocation2 + $0xb0] sm:$0xff] %vm257, %v247
      %281 = vst.msk [vmem:[#allocation2 + $0xb8] sm:$0xff] %vm257, %v248
      %282 = vst.msk [vmem:[#allocation2 + $0xc0] sm:$0xff] %vm257, %v249
      %283 = vst.msk [vmem:[#allocation2 + $0xc8] sm:$0xff] %vm257, %v250
      %284 = vst.msk [vmem:[#allocation2 + $0xd0] sm:$0xff] %vm257, %v251
      %285 = vst.msk [vmem:[#allocation2 + $0xd8] sm:$0xff] %vm257, %v252
      %286 = vst.msk [vmem:[#allocation2 + $0xe0] sm:$0xff] %vm257, %v253
      %287 = vst.msk [vmem:[#allocation2 + $0xe8] sm:$0xff] %vm257, %v254
      %288 = vst.msk [vmem:[#allocation2 + $0xf0] sm:$0xff] %vm257, %v255
      %289 = vst.msk [vmem:[#allocation2 + $0xf8] sm:$0xff] %vm257, %v256
      %v290 = vld [vmem:[%s219 + $0x1] sm:$0xff]
      %v291 = vld [vmem:[%s219 + $0x9] sm:$0xff]
      %v292 = vld [vmem:[%s219 + $0x19] sm:$0xff]
      %v293 = vld [vmem:[%s219 + $0x21] sm:$0xff]
      %v294 = vld [vmem:[%s219 + $0x31] sm:$0xff]
      %v295 = vld [vmem:[%s219 + $0x39] sm:$0xff]
      %v296 = vld [vmem:[%s219 + $0x49] sm:$0xff]
      %v297 = vld [vmem:[%s219 + $0x51] sm:$0xff]
      %v298 = vld [vmem:[%s219 + $0x61] sm:$0xff]
      %v299 = vld [vmem:[%s219 + $0x69] sm:$0xff]
      %v300 = vld [vmem:[%s219 + $0x79] sm:$0xff]
      %v301 = vld [vmem:[%s219 + $0x81] sm:$0xff]
      %v302 = vld [vmem:[%s219 + $0x91] sm:$0xff]
      %v303 = vld [vmem:[%s219 + $0x99] sm:$0xff]
      %v304 = vld [vmem:[%s219 + $0xa9] sm:$0xff]
      %v305 = vld [vmem:[%s219 + $0xb1] sm:$0xff]
      %v306 = vld [vmem:[%s219 + $0xc1] sm:$0xff]
      %v307 = vld [vmem:[%s219 + $0xc9] sm:$0xff]
      %v308 = vld [vmem:[%s219 + $0xd9] sm:$0xff]
      %v309 = vld [vmem:[%s219 + $0xe1] sm:$0xff]
      %v310 = vld [vmem:[%s219 + $0xf1] sm:$0xff]
      %v311 = vld [vmem:[%s219 + $0xf9] sm:$0xff]
      %v312 = vld [vmem:[%s219 + $0x109] sm:$0xff]
      %v313 = vld [vmem:[%s219 + $0x111] sm:$0xff]
      %v314 = vld [vmem:[%s219 + $0x121] sm:$0xff]
      %v315 = vld [vmem:[%s219 + $0x129] sm:$0xff]
      %v316 = vld [vmem:[%s219 + $0x139] sm:$0xff]
      %v317 = vld [vmem:[%s219 + $0x141] sm:$0xff]
      %v318 = vld [vmem:[%s219 + $0x151] sm:$0xff]
      %v319 = vld [vmem:[%s219 + $0x159] sm:$0xff]
      %v320 = vld [vmem:[%s219 + $0x169] sm:$0xff]
      %v321 = vld [vmem:[%s219 + $0x171] sm:$0xff]
      %354 = vrot.lane.b32.xlu0 %v290, 4
      %v355 = vpop.permute.xlu0 %354
      %356 = vrot.lane.b32.xlu0 %v291, 4
      %v357 = vpop.permute.xlu0 %356
      %358 = vrot.lane.b32.xlu0 %v292, 4
      %v359 = vpop.permute.xlu0 %358
      %360 = vrot.lane.b32.xlu0 %v293, 4
      %v361 = vpop.permute.xlu0 %360
      %362 = vrot.lane.b32.xlu0 %v294, 4
      %v363 = vpop.permute.xlu0 %362
      %364 = vrot.lane.b32.xlu0 %v295, 4
      %v365 = vpop.permute.xlu0 %364
      %366 = vrot.lane.b32.xlu0 %v296, 4
      %v367 = vpop.permute.xlu0 %366
      %368 = vrot.lane.b32.xlu0 %v297, 4
      %v369 = vpop.permute.xlu0 %368
      %370 = vrot.lane.b32.xlu0 %v298, 4
      %v371 = vpop.permute.xlu0 %370
      %372 = vrot.lane.b32.xlu0 %v299, 4
      %v373 = vpop.permute.xlu0 %372
      %374 = vrot.lane.b32.xlu0 %v300, 4
      %v375 = vpop.permute.xlu0 %374
      %376 = vrot.lane.b32.xlu0 %v301, 4
      %v377 = vpop.permute.xlu0 %376
      %378 = vrot.lane.b32.xlu0 %v302, 4
      %v379 = vpop.permute.xlu0 %378
      %380 = vrot.lane.b32.xlu0 %v303, 4
      %v381 = vpop.permute.xlu0 %380
      %382 = vrot.lane.b32.xlu0 %v304, 4
      %v383 = vpop.permute.xlu0 %382
      %384 = vrot.lane.b32.xlu0 %v305, 4
      %v385 = vpop.permute.xlu0 %384
      %386 = vrot.lane.b32.xlu0 %v306, 4
      %v387 = vpop.permute.xlu0 %386
      %388 = vrot.lane.b32.xlu0 %v307, 4
      %v389 = vpop.permute.xlu0 %388
      %390 = vrot.lane.b32.xlu0 %v308, 4
      %v391 = vpop.permute.xlu0 %390
      %392 = vrot.lane.b32.xlu0 %v309, 4
      %v393 = vpop.permute.xlu0 %392
      %394 = vrot.lane.b32.xlu0 %v310, 4
      %v395 = vpop.permute.xlu0 %394
      %396 = vrot.lane.b32.xlu0 %v311, 4
      %v397 = vpop.permute.xlu0 %396
      %398 = vrot.lane.b32.xlu0 %v312, 4
      %v399 = vpop.permute.xlu0 %398
      %400 = vrot.lane.b32.xlu0 %v313, 4
      %v401 = vpop.permute.xlu0 %400
      %402 = vrot.lane.b32.xlu0 %v314, 4
      %v403 = vpop.permute.xlu0 %402
      %404 = vrot.lane.b32.xlu0 %v315, 4
      %v405 = vpop.permute.xlu0 %404
      %406 = vrot.lane.b32.xlu0 %v316, 4
      %v407 = vpop.permute.xlu0 %406
      %408 = vrot.lane.b32.xlu0 %v317, 4
      %v409 = vpop.permute.xlu0 %408
      %410 = vrot.lane.b32.xlu0 %v318, 4
      %v411 = vpop.permute.xlu0 %410
      %412 = vrot.lane.b32.xlu0 %v319, 4
      %v413 = vpop.permute.xlu0 %412
      %414 = vrot.lane.b32.xlu0 %v320, 4
      %v415 = vpop.permute.xlu0 %414
      %416 = vrot.lane.b32.xlu0 %v321, 4
      %v417 = vpop.permute.xlu0 %416
      %vm450 = vcmask 64544
      %451 = vst.msk [vmem:[#allocation2] sm:$0xff] %vm450, %v355
      %452 = vst.msk [vmem:[#allocation2 + $0x8] sm:$0xff] %vm450, %v357
      %453 = vst.msk [vmem:[#allocation2 + $0x10] sm:$0xff] %vm450, %v359
      %454 = vst.msk [vmem:[#allocation2 + $0x18] sm:$0xff] %vm450, %v361
      %455 = vst.msk [vmem:[#allocation2 + $0x20] sm:$0xff] %vm450, %v363
      %456 = vst.msk [vmem:[#allocation2 + $0x28] sm:$0xff] %vm450, %v365
      %457 = vst.msk [vmem:[#allocation2 + $0x30] sm:$0xff] %vm450, %v367
      %458 = vst.msk [vmem:[#allocation2 + $0x38] sm:$0xff] %vm450, %v369
      %459 = vst.msk [vmem:[#allocation2 + $0x40] sm:$0xff] %vm450, %v371
      %460 = vst.msk [vmem:[#allocation2 + $0x48] sm:$0xff] %vm450, %v373
      %461 = vst.msk [vmem:[#allocation2 + $0x50] sm:$0xff] %vm450, %v375
      %462 = vst.msk [vmem:[#allocation2 + $0x58] sm:$0xff] %vm450, %v377
      %463 = vst.msk [vmem:[#allocation2 + $0x60] sm:$0xff] %vm450, %v379
      %464 = vst.msk [vmem:[#allocation2 + $0x68] sm:$0xff] %vm450, %v381
      %465 = vst.msk [vmem:[#allocation2 + $0x70] sm:$0xff] %vm450, %v383
      %466 = vst.msk [vmem:[#allocation2 + $0x78] sm:$0xff] %vm450, %v385
      %467 = vst.msk [vmem:[#allocation2 + $0x80] sm:$0xff] %vm450, %v387
      %468 = vst.msk [vmem:[#allocation2 + $0x88] sm:$0xff] %vm450, %v389
      %469 = vst.msk [vmem:[#allocation2 + $0x90] sm:$0xff] %vm450, %v391
      %470 = vst.msk [vmem:[#allocation2 + $0x98] sm:$0xff] %vm450, %v393
      %471 = vst.msk [vmem:[#allocation2 + $0xa0] sm:$0xff] %vm450, %v395
      %472 = vst.msk [vmem:[#allocation2 + $0xa8] sm:$0xff] %vm450, %v397
      %473 = vst.msk [vmem:[#allocation2 + $0xb0] sm:$0xff] %vm450, %v399
      %474 = vst.msk [vmem:[#allocation2 + $0xb8] sm:$0xff] %vm450, %v401
      %475 = vst.msk [vmem:[#allocation2 + $0xc0] sm:$0xff] %vm450, %v403
      %476 = vst.msk [vmem:[#allocation2 + $0xc8] sm:$0xff] %vm450, %v405
      %477 = vst.msk [vmem:[#allocation2 + $0xd0] sm:$0xff] %vm450, %v407
      %478 = vst.msk [vmem:[#allocation2 + $0xd8] sm:$0xff] %vm450, %v409
      %479 = vst.msk [vmem:[#allocation2 + $0xe0] sm:$0xff] %vm450, %v411
      %480 = vst.msk [vmem:[#allocation2 + $0xe8] sm:$0xff] %vm450, %v413
      %481 = vst.msk [vmem:[#allocation2 + $0xf0] sm:$0xff] %vm450, %v415
      %482 = vst.msk [vmem:[#allocation2 + $0xf8] sm:$0xff] %vm450, %v417
      %v483 = vld [vmem:[%s219 + $0x2] sm:$0xff]
      %v484 = vld [vmem:[%s219 + $0xa] sm:$0xff]
      %v485 = vld [vmem:[%s219 + $0x1a] sm:$0xff]
      %v486 = vld [vmem:[%s219 + $0x22] sm:$0xff]
      %v487 = vld [vmem:[%s219 + $0x32] sm:$0xff]
      %v488 = vld [vmem:[%s219 + $0x3a] sm:$0xff]
      %v489 = vld [vmem:[%s219 + $0x4a] sm:$0xff]
      %v490 = vld [vmem:[%s219 + $0x52] sm:$0xff]
      %v491 = vld [vmem:[%s219 + $0x62] sm:$0xff]
      %v492 = vld [vmem:[%s219 + $0x6a] sm:$0xff]
      %v493 = vld [vmem:[%s219 + $0x7a] sm:$0xff]
      %v494 = vld [vmem:[%s219 + $0x82] sm:$0xff]
      %v495 = vld [vmem:[%s219 + $0x92] sm:$0xff]
      %v496 = vld [vmem:[%s219 + $0x9a] sm:$0xff]
      %v497 = vld [vmem:[%s219 + $0xaa] sm:$0xff]
      %v498 = vld [vmem:[%s219 + $0xb2] sm:$0xff]
      %v499 = vld [vmem:[%s219 + $0xc2] sm:$0xff]
      %v500 = vld [vmem:[%s219 + $0xca] sm:$0xff]
      %v501 = vld [vmem:[%s219 + $0xda] sm:$0xff]
      %v502 = vld [vmem:[%s219 + $0xe2] sm:$0xff]
      %v503 = vld [vmem:[%s219 + $0xf2] sm:$0xff]
      %v504 = vld [vmem:[%s219 + $0xfa] sm:$0xff]
      %v505 = vld [vmem:[%s219 + $0x10a] sm:$0xff]
      %v506 = vld [vmem:[%s219 + $0x112] sm:$0xff]
      %v507 = vld [vmem:[%s219 + $0x122] sm:$0xff]
      %v508 = vld [vmem:[%s219 + $0x12a] sm:$0xff]
      %v509 = vld [vmem:[%s219 + $0x13a] sm:$0xff]
      %v510 = vld [vmem:[%s219 + $0x142] sm:$0xff]
      %v511 = vld [vmem:[%s219 + $0x152] sm:$0xff]
      %v512 = vld [vmem:[%s219 + $0x15a] sm:$0xff]
      %v513 = vld [vmem:[%s219 + $0x16a] sm:$0xff]
      %v514 = vld [vmem:[%s219 + $0x172] sm:$0xff]
      %547 = vrot.lane.b32.xlu0 %v483, 8
      %v548 = vpop.permute.xlu0 %547
      %549 = vrot.lane.b32.xlu0 %v484, 8
      %v550 = vpop.permute.xlu0 %549
      %551 = vrot.lane.b32.xlu0 %v485, 8
      %v552 = vpop.permute.xlu0 %551
      %553 = vrot.lane.b32.xlu0 %v486, 8
      %v554 = vpop.permute.xlu0 %553
      %555 = vrot.lane.b32.xlu0 %v487, 8
      %v556 = vpop.permute.xlu0 %555
      %557 = vrot.lane.b32.xlu0 %v488, 8
      %v558 = vpop.permute.xlu0 %557
      %559 = vrot.lane.b32.xlu0 %v489, 8
      %v560 = vpop.permute.xlu0 %559
      %561 = vrot.lane.b32.xlu0 %v490, 8
      %v562 = vpop.permute.xlu0 %561
      %563 = vrot.lane.b32.xlu0 %v491, 8
      %v564 = vpop.permute.xlu0 %563
      %565 = vrot.lane.b32.xlu0 %v492, 8
      %v566 = vpop.permute.xlu0 %565
      %567 = vrot.lane.b32.xlu0 %v493, 8
      %v568 = vpop.permute.xlu0 %567
      %569 = vrot.lane.b32.xlu0 %v494, 8
      %v570 = vpop.permute.xlu0 %569
      %571 = vrot.lane.b32.xlu0 %v495, 8
      %v572 = vpop.permute.xlu0 %571
      %573 = vrot.lane.b32.xlu0 %v496, 8
      %v574 = vpop.permute.xlu0 %573
      %575 = vrot.lane.b32.xlu0 %v497, 8
      %v576 = vpop.permute.xlu0 %575
      %577 = vrot.lane.b32.xlu0 %v498, 8
      %v578 = vpop.permute.xlu0 %577
      %579 = vrot.lane.b32.xlu0 %v499, 8
      %v580 = vpop.permute.xlu0 %579
      %581 = vrot.lane.b32.xlu0 %v500, 8
      %v582 = vpop.permute.xlu0 %581
      %583 = vrot.lane.b32.xlu0 %v501, 8
      %v584 = vpop.permute.xlu0 %583
      %585 = vrot.lane.b32.xlu0 %v502, 8
      %v586 = vpop.permute.xlu0 %585
      %587 = vrot.lane.b32.xlu0 %v503, 8
      %v588 = vpop.permute.xlu0 %587
      %589 = vrot.lane.b32.xlu0 %v504, 8
      %v590 = vpop.permute.xlu0 %589
      %591 = vrot.lane.b32.xlu0 %v505, 8
      %v592 = vpop.permute.xlu0 %591
      %593 = vrot.lane.b32.xlu0 %v506, 8
      %v594 = vpop.permute.xlu0 %593
      %595 = vrot.lane.b32.xlu0 %v507, 8
      %v596 = vpop.permute.xlu0 %595
      %597 = vrot.lane.b32.xlu0 %v508, 8
      %v598 = vpop.permute.xlu0 %597
      %599 = vrot.lane.b32.xlu0 %v509, 8
      %v600 = vpop.permute.xlu0 %599
      %601 = vrot.lane.b32.xlu0 %v510, 8
      %v602 = vpop.permute.xlu0 %601
      %603 = vrot.lane.b32.xlu0 %v511, 8
      %v604 = vpop.permute.xlu0 %603
      %605 = vrot.lane.b32.xlu0 %v512, 8
      %v606 = vpop.permute.xlu0 %605
      %607 = vrot.lane.b32.xlu0 %v513, 8
      %v608 = vpop.permute.xlu0 %607
      %609 = vrot.lane.b32.xlu0 %v514, 8
      %v610 = vpop.permute.xlu0 %609
      %vm643 = vcmask 97344
      %644 = vst.msk [vmem:[#allocation2] sm:$0xff] %vm643, %v548
      %645 = vst.msk [vmem:[#allocation2 + $0x8] sm:$0xff] %vm643, %v550
      %646 = vst.msk [vmem:[#allocation2 + $0x10] sm:$0xff] %vm643, %v552
      %647 = vst.msk [vmem:[#allocation2 + $0x18] sm:$0xff] %vm643, %v554
      %648 = vst.msk [vmem:[#allocation2 + $0x20] sm:$0xff] %vm643, %v556
      %649 = vst.msk [vmem:[#allocation2 + $0x28] sm:$0xff] %vm643, %v558
      %650 = vst.msk [vmem:[#allocation2 + $0x30] sm:$0xff] %vm643, %v560
      %651 = vst.msk [vmem:[#allocation2 + $0x38] sm:$0xff] %vm643, %v562
      %652 = vst.msk [vmem:[#allocation2 + $0x40] sm:$0xff] %vm643, %v564
      %653 = vst.msk [vmem:[#allocation2 + $0x48] sm:$0xff] %vm643, %v566
      %654 = vst.msk [vmem:[#allocation2 + $0x50] sm:$0xff] %vm643, %v568
      %655 = vst.msk [vmem:[#allocation2 + $0x58] sm:$0xff] %vm643, %v570
      %656 = vst.msk [vmem:[#allocation2 + $0x60] sm:$0xff] %vm643, %v572
      %657 = vst.msk [vmem:[#allocation2 + $0x68] sm:$0xff] %vm643, %v574
      %658 = vst.msk [vmem:[#allocation2 + $0x70] sm:$0xff] %vm643, %v576
      %659 = vst.msk [vmem:[#allocation2 + $0x78] sm:$0xff] %vm643, %v578
      %660 = vst.msk [vmem:[#allocation2 + $0x80] sm:$0xff] %vm643, %v580
      %661 = vst.msk [vmem:[#allocation2 + $0x88] sm:$0xff] %vm643, %v582
      %662 = vst.msk [vmem:[#allocation2 + $0x90] sm:$0xff] %vm643, %v584
      %663 = vst.msk [vmem:[#allocation2 + $0x98] sm:$0xff] %vm643, %v586
      %664 = vst.msk [vmem:[#allocation2 + $0xa0] sm:$0xff] %vm643, %v588
      %665 = vst.msk [vmem:[#allocation2 + $0xa8] sm:$0xff] %vm643, %v590
      %666 = vst.msk [vmem:[#allocation2 + $0xb0] sm:$0xff] %vm643, %v592
      %667 = vst.msk [vmem:[#allocation2 + $0xb8] sm:$0xff] %vm643, %v594
      %668 = vst.msk [vmem:[#allocation2 + $0xc0] sm:$0xff] %vm643, %v596
      %669 = vst.msk [vmem:[#allocation2 + $0xc8] sm:$0xff] %vm643, %v598
      %670 = vst.msk [vmem:[#allocation2 + $0xd0] sm:$0xff] %vm643, %v600
      %671 = vst.msk [vmem:[#allocation2 + $0xd8] sm:$0xff] %vm643, %v602
      %672 = vst.msk [vmem:[#allocation2 + $0xe0] sm:$0xff] %vm643, %v604
      %673 = vst.msk [vmem:[#allocation2 + $0xe8] sm:$0xff] %vm643, %v606
      %674 = vst.msk [vmem:[#allocation2 + $0xf0] sm:$0xff] %vm643, %v608
      %675 = vst.msk [vmem:[#allocation2 + $0xf8] sm:$0xff] %vm643, %v610
      %s676 = scalar_lea.vmem %s219, 24
      %v677 = vld [vmem:[%s676] sm:$0xff]
      %v678 = vld [vmem:[%s676 + $0x8] sm:$0xff]
      %v679 = vld [vmem:[%s676 + $0x18] sm:$0xff]
      %v680 = vld [vmem:[%s676 + $0x20] sm:$0xff]
      %v681 = vld [vmem:[%s676 + $0x30] sm:$0xff]
      %v682 = vld [vmem:[%s676 + $0x38] sm:$0xff]
      %v683 = vld [vmem:[%s676 + $0x48] sm:$0xff]
      %v684 = vld [vmem:[%s676 + $0x50] sm:$0xff]
      %v685 = vld [vmem:[%s676 + $0x60] sm:$0xff]
      %v686 = vld [vmem:[%s676 + $0x68] sm:$0xff]
      %v687 = vld [vmem:[%s676 + $0x78] sm:$0xff]
      %v688 = vld [vmem:[%s676 + $0x80] sm:$0xff]
      %v689 = vld [vmem:[%s676 + $0x90] sm:$0xff]
      %v690 = vld [vmem:[%s676 + $0x98] sm:$0xff]
      %v691 = vld [vmem:[%s676 + $0xa8] sm:$0xff]
      %v692 = vld [vmem:[%s676 + $0xb0] sm:$0xff]
      %v693 = vld [vmem:[%s676 + $0xc0] sm:$0xff]
      %v694 = vld [vmem:[%s676 + $0xc8] sm:$0xff]
      %v695 = vld [vmem:[%s676 + $0xd8] sm:$0xff]
      %v696 = vld [vmem:[%s676 + $0xe0] sm:$0xff]
      %v697 = vld [vmem:[%s676 + $0xf0] sm:$0xff]
      %v698 = vld [vmem:[%s676 + $0xf8] sm:$0xff]
      %v699 = vld [vmem:[%s676 + $0x108] sm:$0xff]
      %v700 = vld [vmem:[%s676 + $0x110] sm:$0xff]
      %v701 = vld [vmem:[%s676 + $0x120] sm:$0xff]
      %v702 = vld [vmem:[%s676 + $0x128] sm:$0xff]
      %v703 = vld [vmem:[%s676 + $0x138] sm:$0xff]
      %v704 = vld [vmem:[%s676 + $0x140] sm:$0xff]
      %v705 = vld [vmem:[%s676 + $0x150] sm:$0xff]
      %v706 = vld [vmem:[%s676 + $0x158] sm:$0xff]
      %v707 = vld [vmem:[%s676 + $0x168] sm:$0xff]
      %v708 = vld [vmem:[%s676 + $0x170] sm:$0xff]
      %741 = vrot.lane.b32.xlu0 %v677, 12
      %v742 = vpop.permute.xlu0 %741
      %743 = vrot.lane.b32.xlu0 %v678, 12
      %v744 = vpop.permute.xlu0 %743
      %745 = vrot.lane.b32.xlu0 %v679, 12
      %v746 = vpop.permute.xlu0 %745
      %747 = vrot.lane.b32.xlu0 %v680, 12
      %v748 = vpop.permute.xlu0 %747
      %749 = vrot.lane.b32.xlu0 %v681, 12
      %v750 = vpop.permute.xlu0 %749
      %751 = vrot.lane.b32.xlu0 %v682, 12
      %v752 = vpop.permute.xlu0 %751
      %753 = vrot.lane.b32.xlu0 %v683, 12
      %v754 = vpop.permute.xlu0 %753
      %755 = vrot.lane.b32.xlu0 %v684, 12
      %v756 = vpop.permute.xlu0 %755
      %757 = vrot.lane.b32.xlu0 %v685, 12
      %v758 = vpop.permute.xlu0 %757
      %759 = vrot.lane.b32.xlu0 %v686, 12
      %v760 = vpop.permute.xlu0 %759
      %761 = vrot.lane.b32.xlu0 %v687, 12
      %v762 = vpop.permute.xlu0 %761
      %763 = vrot.lane.b32.xlu0 %v688, 12
      %v764 = vpop.permute.xlu0 %763
      %765 = vrot.lane.b32.xlu0 %v689, 12
      %v766 = vpop.permute.xlu0 %765
      %767 = vrot.lane.b32.xlu0 %v690, 12
      %v768 = vpop.permute.xlu0 %767
      %769 = vrot.lane.b32.xlu0 %v691, 12
      %v770 = vpop.permute.xlu0 %769
      %771 = vrot.lane.b32.xlu0 %v692, 12
      %v772 = vpop.permute.xlu0 %771
      %773 = vrot.lane.b32.xlu0 %v693, 12
      %v774 = vpop.permute.xlu0 %773
      %775 = vrot.lane.b32.xlu0 %v694, 12
      %v776 = vpop.permute.xlu0 %775
      %777 = vrot.lane.b32.xlu0 %v695, 12
      %v778 = vpop.permute.xlu0 %777
      %779 = vrot.lane.b32.xlu0 %v696, 12
      %v780 = vpop.permute.xlu0 %779
      %781 = vrot.lane.b32.xlu0 %v697, 12
      %v782 = vpop.permute.xlu0 %781
      %783 = vrot.lane.b32.xlu0 %v698, 12
      %v784 = vpop.permute.xlu0 %783
      %785 = vrot.lane.b32.xlu0 %v699, 12
      %v786 = vpop.permute.xlu0 %785
      %787 = vrot.lane.b32.xlu0 %v700, 12
      %v788 = vpop.permute.xlu0 %787
      %789 = vrot.lane.b32.xlu0 %v701, 12
      %v790 = vpop.permute.xlu0 %789
      %791 = vrot.lane.b32.xlu0 %v702, 12
      %v792 = vpop.permute.xlu0 %791
      %793 = vrot.lane.b32.xlu0 %v703, 12
      %v794 = vpop.permute.xlu0 %793
      %795 = vrot.lane.b32.xlu0 %v704, 12
      %v796 = vpop.permute.xlu0 %795
      %797 = vrot.lane.b32.xlu0 %v705, 12
      %v798 = vpop.permute.xlu0 %797
      %799 = vrot.lane.b32.xlu0 %v706, 12
      %v800 = vpop.permute.xlu0 %799
      %801 = vrot.lane.b32.xlu0 %v707, 12
      %v802 = vpop.permute.xlu0 %801
      %803 = vrot.lane.b32.xlu0 %v708, 12
      %v804 = vpop.permute.xlu0 %803
      %vm837 = vcmask 130144
      %838 = vst.msk [vmem:[#allocation2] sm:$0xff] %vm837, %v742
      %839 = vst.msk [vmem:[#allocation2 + $0x8] sm:$0xff] %vm837, %v744
      %840 = vst.msk [vmem:[#allocation2 + $0x10] sm:$0xff] %vm837, %v746
      %841 = vst.msk [vmem:[#allocation2 + $0x18] sm:$0xff] %vm837, %v748
      %842 = vst.msk [vmem:[#allocation2 + $0x20] sm:$0xff] %vm837, %v750
      %843 = vst.msk [vmem:[#allocation2 + $0x28] sm:$0xff] %vm837, %v752
      %844 = vst.msk [vmem:[#allocation2 + $0x30] sm:$0xff] %vm837, %v754
      %845 = vst.msk [vmem:[#allocation2 + $0x38] sm:$0xff] %vm837, %v756
      %846 = vst.msk [vmem:[#allocation2 + $0x40] sm:$0xff] %vm837, %v758
      %847 = vst.msk [vmem:[#allocation2 + $0x48] sm:$0xff] %vm837, %v760
      %848 = vst.msk [vmem:[#allocation2 + $0x50] sm:$0xff] %vm837, %v762
      %849 = vst.msk [vmem:[#allocation2 + $0x58] sm:$0xff] %vm837, %v764
      %850 = vst.msk [vmem:[#allocation2 + $0x60] sm:$0xff] %vm837, %v766
      %851 = vst.msk [vmem:[#allocation2 + $0x68] sm:$0xff] %vm837, %v768
      %852 = vst.msk [vmem:[#allocation2 + $0x70] sm:$0xff] %vm837, %v770
      %853 = vst.msk [vmem:[#allocation2 + $0x78] sm:$0xff] %vm837, %v772
      %854 = vst.msk [vmem:[#allocation2 + $0x80] sm:$0xff] %vm837, %v774
      %855 = vst.msk [vmem:[#allocation2 + $0x88] sm:$0xff] %vm837, %v776
      %856 = vst.msk [vmem:[#allocation2 + $0x90] sm:$0xff] %vm837, %v778
      %857 = vst.msk [vmem:[#allocation2 + $0x98] sm:$0xff] %vm837, %v780
      %858 = vst.msk [vmem:[#allocation2 + $0xa0] sm:$0xff] %vm837, %v782
      %859 = vst.msk [vmem:[#allocation2 + $0xa8] sm:$0xff] %vm837, %v784
      %860 = vst.msk [vmem:[#allocation2 + $0xb0] sm:$0xff] %vm837, %v786
      %861 = vst.msk [vmem:[#allocation2 + $0xb8] sm:$0xff] %vm837, %v788
      %862 = vst.msk [vmem:[#allocation2 + $0xc0] sm:$0xff] %vm837, %v790
      %863 = vst.msk [vmem:[#allocation2 + $0xc8] sm:$0xff] %vm837, %v792
      %864 = vst.msk [vmem:[#allocation2 + $0xd0] sm:$0xff] %vm837, %v794
      %865 = vst.msk [vmem:[#allocation2 + $0xd8] sm:$0xff] %vm837, %v796
      %866 = vst.msk [vmem:[#allocation2 + $0xe0] sm:$0xff] %vm837, %v798
      %867 = vst.msk [vmem:[#allocation2 + $0xe8] sm:$0xff] %vm837, %v800
      %868 = vst.msk [vmem:[#allocation2 + $0xf0] sm:$0xff] %vm837, %v802
      %869 = vst.msk [vmem:[#allocation2 + $0xf8] sm:$0xff] %vm837, %v804
      %v870 = vld [vmem:[%s676 + $0x1] sm:$0xff]
      %v871 = vld [vmem:[%s676 + $0x9] sm:$0xff]
      %v872 = vld [vmem:[%s676 + $0x19] sm:$0xff]
      %v873 = vld [vmem:[%s676 + $0x21] sm:$0xff]
      %v874 = vld [vmem:[%s676 + $0x31] sm:$0xff]
      %v875 = vld [vmem:[%s676 + $0x39] sm:$0xff]
      %v876 = vld [vmem:[%s676 + $0x49] sm:$0xff]
      %v877 = vld [vmem:[%s676 + $0x51] sm:$0xff]
      %v878 = vld [vmem:[%s676 + $0x61] sm:$0xff]
      %v879 = vld [vmem:[%s676 + $0x69] sm:$0xff]
      %v880 = vld [vmem:[%s676 + $0x79] sm:$0xff]
      %v881 = vld [vmem:[%s676 + $0x81] sm:$0xff]
      %v882 = vld [vmem:[%s676 + $0x91] sm:$0xff]
      %v883 = vld [vmem:[%s676 + $0x99] sm:$0xff]
      %v884 = vld [vmem:[%s676 + $0xa9] sm:$0xff]
      %v885 = vld [vmem:[%s676 + $0xb1] sm:$0xff]
      %v886 = vld [vmem:[%s676 + $0xc1] sm:$0xff]
      %v887 = vld [vmem:[%s676 + $0xc9] sm:$0xff]
      %v888 = vld [vmem:[%s676 + $0xd9] sm:$0xff]
      %v889 = vld [vmem:[%s676 + $0xe1] sm:$0xff]
      %v890 = vld [vmem:[%s676 + $0xf1] sm:$0xff]
      %v891 = vld [vmem:[%s676 + $0xf9] sm:$0xff]
      %v892 = vld [vmem:[%s676 + $0x109] sm:$0xff]
      %v893 = vld [vmem:[%s676 + $0x111] sm:$0xff]
      %v894 = vld [vmem:[%s676 + $0x121] sm:$0xff]
      %v895 = vld [vmem:[%s676 + $0x129] sm:$0xff]
      %v896 = vld [vmem:[%s676 + $0x139] sm:$0xff]
      %v897 = vld [vmem:[%s676 + $0x141] sm:$0xff]
      %v898 = vld [vmem:[%s676 + $0x151] sm:$0xff]
      %v899 = vld [vmem:[%s676 + $0x159] sm:$0xff]
      %v900 = vld [vmem:[%s676 + $0x169] sm:$0xff]
      %v901 = vld [vmem:[%s676 + $0x171] sm:$0xff]
      %934 = vrot.lane.b32.xlu0 %v870, 16
      %v935 = vpop.permute.xlu0 %934
      %936 = vrot.lane.b32.xlu0 %v871, 16
      %v937 = vpop.permute.xlu0 %936
      %938 = vrot.lane.b32.xlu0 %v872, 16
      %v939 = vpop.permute.xlu0 %938
      %940 = vrot.lane.b32.xlu0 %v873, 16
      %v941 = vpop.permute.xlu0 %940
      %942 = vrot.lane.b32.xlu0 %v874, 16
      %v943 = vpop.permute.xlu0 %942
      %944 = vrot.lane.b32.xlu0 %v875, 16
      %v945 = vpop.permute.xlu0 %944
      %946 = vrot.lane.b32.xlu0 %v876, 16
      %v947 = vpop.permute.xlu0 %946
      %948 = vrot.lane.b32.xlu0 %v877, 16
      %v949 = vpop.permute.xlu0 %948
      %950 = vrot.lane.b32.xlu0 %v878, 16
      %v951 = vpop.permute.xlu0 %950
      %952 = vrot.lane.b32.xlu0 %v879, 16
      %v953 = vpop.permute.xlu0 %952
      %954 = vrot.lane.b32.xlu0 %v880, 16
      %v955 = vpop.permute.xlu0 %954
      %956 = vrot.lane.b32.xlu0 %v881, 16
      %v957 = vpop.permute.xlu0 %956
      %958 = vrot.lane.b32.xlu0 %v882, 16
      %v959 = vpop.permute.xlu0 %958
      %960 = vrot.lane.b32.xlu0 %v883, 16
      %v961 = vpop.permute.xlu0 %960
      %962 = vrot.lane.b32.xlu0 %v884, 16
      %v963 = vpop.permute.xlu0 %962
      %964 = vrot.lane.b32.xlu0 %v885, 16
      %v965 = vpop.permute.xlu0 %964
      %966 = vrot.lane.b32.xlu0 %v886, 16
      %v967 = vpop.permute.xlu0 %966
      %968 = vrot.lane.b32.xlu0 %v887, 16
      %v969 = vpop.permute.xlu0 %968
      %970 = vrot.lane.b32.xlu0 %v888, 16
      %v971 = vpop.permute.xlu0 %970
      %972 = vrot.lane.b32.xlu0 %v889, 16
      %v973 = vpop.permute.xlu0 %972
      %974 = vrot.lane.b32.xlu0 %v890, 16
      %v975 = vpop.permute.xlu0 %974
      %976 = vrot.lane.b32.xlu0 %v891, 16
      %v977 = vpop.permute.xlu0 %976
      %978 = vrot.lane.b32.xlu0 %v892, 16
      %v979 = vpop.permute.xlu0 %978
      %980 = vrot.lane.b32.xlu0 %v893, 16
      %v981 = vpop.permute.xlu0 %980
      %982 = vrot.lane.b32.xlu0 %v894, 16
      %v983 = vpop.permute.xlu0 %982
      %984 = vrot.lane.b32.xlu0 %v895, 16
      %v985 = vpop.permute.xlu0 %984
      %986 = vrot.lane.b32.xlu0 %v896, 16
      %v987 = vpop.permute.xlu0 %986
      %988 = vrot.lane.b32.xlu0 %v897, 16
      %v989 = vpop.permute.xlu0 %988
      %990 = vrot.lane.b32.xlu0 %v898, 16
      %v991 = vpop.permute.xlu0 %990
      %992 = vrot.lane.b32.xlu0 %v899, 16
      %v993 = vpop.permute.xlu0 %992
      %994 = vrot.lane.b32.xlu0 %v900, 16
      %v995 = vpop.permute.xlu0 %994
      %996 = vrot.lane.b32.xlu0 %v901, 16
      %v997 = vpop.permute.xlu0 %996
      %vm1030 = vcmask 162944
      %1031 = vst.msk [vmem:[#allocation2] sm:$0xff] %vm1030, %v935
      %1032 = vst.msk [vmem:[#allocation2 + $0x8] sm:$0xff] %vm1030, %v937
      %1033 = vst.msk [vmem:[#allocation2 + $0x10] sm:$0xff] %vm1030, %v939
      %1034 = vst.msk [vmem:[#allocation2 + $0x18] sm:$0xff] %vm1030, %v941
      %1035 = vst.msk [vmem:[#allocation2 + $0x20] sm:$0xff] %vm1030, %v943
      %1036 = vst.msk [vmem:[#allocation2 + $0x28] sm:$0xff] %vm1030, %v945
      %1037 = vst.msk [vmem:[#allocation2 + $0x30] sm:$0xff] %vm1030, %v947
      %1038 = vst.msk [vmem:[#allocation2 + $0x38] sm:$0xff] %vm1030, %v949
      %1039 = vst.msk [vmem:[#allocation2 + $0x40] sm:$0xff] %vm1030, %v951
      %1040 = vst.msk [vmem:[#allocation2 + $0x48] sm:$0xff] %vm1030, %v953
      %1041 = vst.msk [vmem:[#allocation2 + $0x50] sm:$0xff] %vm1030, %v955
      %1042 = vst.msk [vmem:[#allocation2 + $0x58] sm:$0xff] %vm1030, %v957
      %1043 = vst.msk [vmem:[#allocation2 + $0x60] sm:$0xff] %vm1030, %v959
      %1044 = vst.msk [vmem:[#allocation2 + $0x68] sm:$0xff] %vm1030, %v961
      %1045 = vst.msk [vmem:[#allocation2 + $0x70] sm:$0xff] %vm1030, %v963
      %1046 = vst.msk [vmem:[#allocation2 + $0x78] sm:$0xff] %vm1030, %v965
      %1047 = vst.msk [vmem:[#allocation2 + $0x80] sm:$0xff] %vm1030, %v967
      %1048 = vst.msk [vmem:[#allocation2 + $0x88] sm:$0xff] %vm1030, %v969
      %1049 = vst.msk [vmem:[#allocation2 + $0x90] sm:$0xff] %vm1030, %v971
      %1050 = vst.msk [vmem:[#allocation2 + $0x98] sm:$0xff] %vm1030, %v973
      %1051 = vst.msk [vmem:[#allocation2 + $0xa0] sm:$0xff] %vm1030, %v975
      %1052 = vst.msk [vmem:[#allocation2 + $0xa8] sm:$0xff] %vm1030, %v977
      %1053 = vst.msk [vmem:[#allocation2 + $0xb0] sm:$0xff] %vm1030, %v979
      %1054 = vst.msk [vmem:[#allocation2 + $0xb8] sm:$0xff] %vm1030, %v981
      %1055 = vst.msk [vmem:[#allocation2 + $0xc0] sm:$0xff] %vm1030, %v983
      %1056 = vst.msk [vmem:[#allocation2 + $0xc8] sm:$0xff] %vm1030, %v985
      %1057 = vst.msk [vmem:[#allocation2 + $0xd0] sm:$0xff] %vm1030, %v987
      %1058 = vst.msk [vmem:[#allocation2 + $0xd8] sm:$0xff] %vm1030, %v989
      %1059 = vst.msk [vmem:[#allocation2 + $0xe0] sm:$0xff] %vm1030, %v991
      %1060 = vst.msk [vmem:[#allocation2 + $0xe8] sm:$0xff] %vm1030, %v993
      %1061 = vst.msk [vmem:[#allocation2 + $0xf0] sm:$0xff] %vm1030, %v995
      %1062 = vst.msk [vmem:[#allocation2 + $0xf8] sm:$0xff] %vm1030, %v997
      %v1063 = vld [vmem:[%s676 + $0x2] sm:$0xff]
      %v1064 = vld [vmem:[%s676 + $0xa] sm:$0xff]
      %v1065 = vld [vmem:[%s676 + $0x1a] sm:$0xff]
      %v1066 = vld [vmem:[%s676 + $0x22] sm:$0xff]
      %v1067 = vld [vmem:[%s676 + $0x32] sm:$0xff]
      %v1068 = vld [vmem:[%s676 + $0x3a] sm:$0xff]
      %v1069 = vld [vmem:[%s676 + $0x4a] sm:$0xff]
      %v1070 = vld [vmem:[%s676 + $0x52] sm:$0xff]
      %v1071 = vld [vmem:[%s676 + $0x62] sm:$0xff]
      %v1072 = vld [vmem:[%s676 + $0x6a] sm:$0xff]
      %v1073 = vld [vmem:[%s676 + $0x7a] sm:$0xff]
      %v1074 = vld [vmem:[%s676 + $0x82] sm:$0xff]
      %v1075 = vld [vmem:[%s676 + $0x92] sm:$0xff]
      %v1076 = vld [vmem:[%s676 + $0x9a] sm:$0xff]
      %v1077 = vld [vmem:[%s676 + $0xaa] sm:$0xff]
      %v1078 = vld [vmem:[%s676 + $0xb2] sm:$0xff]
      %v1079 = vld [vmem:[%s676 + $0xc2] sm:$0xff]
      %v1080 = vld [vmem:[%s676 + $0xca] sm:$0xff]
      %v1081 = vld [vmem:[%s676 + $0xda] sm:$0xff]
      %v1082 = vld [vmem:[%s676 + $0xe2] sm:$0xff]
      %v1083 = vld [vmem:[%s676 + $0xf2] sm:$0xff]
      %v1084 = vld [vmem:[%s676 + $0xfa] sm:$0xff]
      %v1085 = vld [vmem:[%s676 + $0x10a] sm:$0xff]
      %v1086 = vld [vmem:[%s676 + $0x112] sm:$0xff]
      %v1087 = vld [vmem:[%s676 + $0x122] sm:$0xff]
      %v1088 = vld [vmem:[%s676 + $0x12a] sm:$0xff]
      %v1089 = vld [vmem:[%s676 + $0x13a] sm:$0xff]
      %v1090 = vld [vmem:[%s676 + $0x142] sm:$0xff]
      %v1091 = vld [vmem:[%s676 + $0x152] sm:$0xff]
      %v1092 = vld [vmem:[%s676 + $0x15a] sm:$0xff]
      %v1093 = vld [vmem:[%s676 + $0x16a] sm:$0xff]
      %v1094 = vld [vmem:[%s676 + $0x172] sm:$0xff]
      %1127 = vrot.lane.b32.xlu0 %v1063, 20
      %v1128 = vpop.permute.xlu0 %1127
      %1129 = vrot.lane.b32.xlu0 %v1064, 20
      %v1130 = vpop.permute.xlu0 %1129
      %1131 = vrot.lane.b32.xlu0 %v1065, 20
      %v1132 = vpop.permute.xlu0 %1131
      %1133 = vrot.lane.b32.xlu0 %v1066, 20
      %v1134 = vpop.permute.xlu0 %1133
      %1135 = vrot.lane.b32.xlu0 %v1067, 20
      %v1136 = vpop.permute.xlu0 %1135
      %1137 = vrot.lane.b32.xlu0 %v1068, 20
      %v1138 = vpop.permute.xlu0 %1137
      %1139 = vrot.lane.b32.xlu0 %v1069, 20
      %v1140 = vpop.permute.xlu0 %1139
      %1141 = vrot.lane.b32.xlu0 %v1070, 20
      %v1142 = vpop.permute.xlu0 %1141
      %1143 = vrot.lane.b32.xlu0 %v1071, 20
      %v1144 = vpop.permute.xlu0 %1143
      %1145 = vrot.lane.b32.xlu0 %v1072, 20
      %v1146 = vpop.permute.xlu0 %1145
      %1147 = vrot.lane.b32.xlu0 %v1073, 20
      %v1148 = vpop.permute.xlu0 %1147
      %1149 = vrot.lane.b32.xlu0 %v1074, 20
      %v1150 = vpop.permute.xlu0 %1149
      %1151 = vrot.lane.b32.xlu0 %v1075, 20
      %v1152 = vpop.permute.xlu0 %1151
      %1153 = vrot.lane.b32.xlu0 %v1076, 20
      %v1154 = vpop.permute.xlu0 %1153
      %1155 = vrot.lane.b32.xlu0 %v1077, 20
      %v1156 = vpop.permute.xlu0 %1155
      %1157 = vrot.lane.b32.xlu0 %v1078, 20
      %v1158 = vpop.permute.xlu0 %1157
      %1159 = vrot.lane.b32.xlu0 %v1079, 20
      %v1160 = vpop.permute.xlu0 %1159
      %1161 = vrot.lane.b32.xlu0 %v1080, 20
      %v1162 = vpop.permute.xlu0 %1161
      %1163 = vrot.lane.b32.xlu0 %v1081, 20
      %v1164 = vpop.permute.xlu0 %1163
      %1165 = vrot.lane.b32.xlu0 %v1082, 20
      %v1166 = vpop.permute.xlu0 %1165
      %1167 = vrot.lane.b32.xlu0 %v1083, 20
      %v1168 = vpop.permute.xlu0 %1167
      %1169 = vrot.lane.b32.xlu0 %v1084, 20
      %v1170 = vpop.permute.xlu0 %1169
      %1171 = vrot.lane.b32.xlu0 %v1085, 20
      %v1172 = vpop.permute.xlu0 %1171
      %1173 = vrot.lane.b32.xlu0 %v1086, 20
      %v1174 = vpop.permute.xlu0 %1173
      %1175 = vrot.lane.b32.xlu0 %v1087, 20
      %v1176 = vpop.permute.xlu0 %1175
      %1177 = vrot.lane.b32.xlu0 %v1088, 20
      %v1178 = vpop.permute.xlu0 %1177
      %1179 = vrot.lane.b32.xlu0 %v1089, 20
      %v1180 = vpop.permute.xlu0 %1179
      %1181 = vrot.lane.b32.xlu0 %v1090, 20
      %v1182 = vpop.permute.xlu0 %1181
      %1183 = vrot.lane.b32.xlu0 %v1091, 20
      %v1184 = vpop.permute.xlu0 %1183
      %1185 = vrot.lane.b32.xlu0 %v1092, 20
      %v1186 = vpop.permute.xlu0 %1185
      %1187 = vrot.lane.b32.xlu0 %v1093, 20
      %v1188 = vpop.permute.xlu0 %1187
      %1189 = vrot.lane.b32.xlu0 %v1094, 20
      %v1190 = vpop.permute.xlu0 %1189
      %vm1223 = vcmask 195744
      %1224 = vst.msk [vmem:[#allocation2] sm:$0xff] %vm1223, %v1128
      %1225 = vst.msk [vmem:[#allocation2 + $0x8] sm:$0xff] %vm1223, %v1130
      %1226 = vst.msk [vmem:[#allocation2 + $0x10] sm:$0xff] %vm1223, %v1132
      %1227 = vst.msk [vmem:[#allocation2 + $0x18] sm:$0xff] %vm1223, %v1134
      %1228 = vst.msk [vmem:[#allocation2 + $0x20] sm:$0xff] %vm1223, %v1136
      %1229 = vst.msk [vmem:[#allocation2 + $0x28] sm:$0xff] %vm1223, %v1138
      %1230 = vst.msk [vmem:[#allocation2 + $0x30] sm:$0xff] %vm1223, %v1140
      %1231 = vst.msk [vmem:[#allocation2 + $0x38] sm:$0xff] %vm1223, %v1142
      %1232 = vst.msk [vmem:[#allocation2 + $0x40] sm:$0xff] %vm1223, %v1144
      %1233 = vst.msk [vmem:[#allocation2 + $0x48] sm:$0xff] %vm1223, %v1146
      %1234 = vst.msk [vmem:[#allocation2 + $0x50] sm:$0xff] %vm1223, %v1148
      %1235 = vst.msk [vmem:[#allocation2 + $0x58] sm:$0xff] %vm1223, %v1150
      %1236 = vst.msk [vmem:[#allocation2 + $0x60] sm:$0xff] %vm1223, %v1152
      %1237 = vst.msk [vmem:[#allocation2 + $0x68] sm:$0xff] %vm1223, %v1154
      %1238 = vst.msk [vmem:[#allocation2 + $0x70] sm:$0xff] %vm1223, %v1156
      %1239 = vst.msk [vmem:[#allocation2 + $0x78] sm:$0xff] %vm1223, %v1158
      %1240 = vst.msk [vmem:[#allocation2 + $0x80] sm:$0xff] %vm1223, %v1160
      %1241 = vst.msk [vmem:[#allocation2 + $0x88] sm:$0xff] %vm1223, %v1162
      %1242 = vst.msk [vmem:[#allocation2 + $0x90] sm:$0xff] %vm1223, %v1164
      %1243 = vst.msk [vmem:[#allocation2 + $0x98] sm:$0xff] %vm1223, %v1166
      %1244 = vst.msk [vmem:[#allocation2 + $0xa0] sm:$0xff] %vm1223, %v1168
      %1245 = vst.msk [vmem:[#allocation2 + $0xa8] sm:$0xff] %vm1223, %v1170
      %1246 = vst.msk [vmem:[#allocation2 + $0xb0] sm:$0xff] %vm1223, %v1172
      %1247 = vst.msk [vmem:[#allocation2 + $0xb8] sm:$0xff] %vm1223, %v1174
      %1248 = vst.msk [vmem:[#allocation2 + $0xc0] sm:$0xff] %vm1223, %v1176
      %1249 = vst.msk [vmem:[#allocation2 + $0xc8] sm:$0xff] %vm1223, %v1178
      %1250 = vst.msk [vmem:[#allocation2 + $0xd0] sm:$0xff] %vm1223, %v1180
      %1251 = vst.msk [vmem:[#allocation2 + $0xd8] sm:$0xff] %vm1223, %v1182
      %1252 = vst.msk [vmem:[#allocation2 + $0xe0] sm:$0xff] %vm1223, %v1184
      %1253 = vst.msk [vmem:[#allocation2 + $0xe8] sm:$0xff] %vm1223, %v1186
      %1254 = vst.msk [vmem:[#allocation2 + $0xf0] sm:$0xff] %vm1223, %v1188
      %1255 = vst.msk [vmem:[#allocation2 + $0xf8] sm:$0xff] %vm1223, %v1190
      %s1256 = scalar_lea.vmem %s219, 48
      %v1257 = vld [vmem:[%s1256] sm:$0xff]
      %v1258 = vld [vmem:[%s1256 + $0x8] sm:$0xff]
      %v1259 = vld [vmem:[%s1256 + $0x18] sm:$0xff]
      %v1260 = vld [vmem:[%s1256 + $0x20] sm:$0xff]
      %v1261 = vld [vmem:[%s1256 + $0x30] sm:$0xff]
      %v1262 = vld [vmem:[%s1256 + $0x38] sm:$0xff]
      %v1263 = vld [vmem:[%s1256 + $0x48] sm:$0xff]
      %v1264 = vld [vmem:[%s1256 + $0x50] sm:$0xff]
      %v1265 = vld [vmem:[%s1256 + $0x60] sm:$0xff]
      %v1266 = vld [vmem:[%s1256 + $0x68] sm:$0xff]
      %v1267 = vld [vmem:[%s1256 + $0x78] sm:$0xff]
      %v1268 = vld [vmem:[%s1256 + $0x80] sm:$0xff]
      %v1269 = vld [vmem:[%s1256 + $0x90] sm:$0xff]
      %v1270 = vld [vmem:[%s1256 + $0x98] sm:$0xff]
      %v1271 = vld [vmem:[%s1256 + $0xa8] sm:$0xff]
      %v1272 = vld [vmem:[%s1256 + $0xb0] sm:$0xff]
      %v1273 = vld [vmem:[%s1256 + $0xc0] sm:$0xff]
      %v1274 = vld [vmem:[%s1256 + $0xc8] sm:$0xff]
      %v1275 = vld [vmem:[%s1256 + $0xd8] sm:$0xff]
      %v1276 = vld [vmem:[%s1256 + $0xe0] sm:$0xff]
      %v1277 = vld [vmem:[%s1256 + $0xf0] sm:$0xff]
      %v1278 = vld [vmem:[%s1256 + $0xf8] sm:$0xff]
      %v1279 = vld [vmem:[%s1256 + $0x108] sm:$0xff]
      %v1280 = vld [vmem:[%s1256 + $0x110] sm:$0xff]
      %v1281 = vld [vmem:[%s1256 + $0x120] sm:$0xff]
      %v1282 = vld [vmem:[%s1256 + $0x128] sm:$0xff]
      %v1283 = vld [vmem:[%s1256 + $0x138] sm:$0xff]
      %v1284 = vld [vmem:[%s1256 + $0x140] sm:$0xff]
      %v1285 = vld [vmem:[%s1256 + $0x150] sm:$0xff]
      %v1286 = vld [vmem:[%s1256 + $0x158] sm:$0xff]
      %v1287 = vld [vmem:[%s1256 + $0x168] sm:$0xff]
      %v1288 = vld [vmem:[%s1256 + $0x170] sm:$0xff]
      %1321 = vrot.lane.b32.xlu0 %v1257, 24
      %v1322 = vpop.permute.xlu0 %1321
      %1323 = vrot.lane.b32.xlu0 %v1258, 24
      %v1324 = vpop.permute.xlu0 %1323
      %1325 = vrot.lane.b32.xlu0 %v1259, 24
      %v1326 = vpop.permute.xlu0 %1325
      %1327 = vrot.lane.b32.xlu0 %v1260, 24
      %v1328 = vpop.permute.xlu0 %1327
      %1329 = vrot.lane.b32.xlu0 %v1261, 24
      %v1330 = vpop.permute.xlu0 %1329
      %1331 = vrot.lane.b32.xlu0 %v1262, 24
      %v1332 = vpop.permute.xlu0 %1331
      %1333 = vrot.lane.b32.xlu0 %v1263, 24
      %v1334 = vpop.permute.xlu0 %1333
      %1335 = vrot.lane.b32.xlu0 %v1264, 24
      %v1336 = vpop.permute.xlu0 %1335
      %1337 = vrot.lane.b32.xlu0 %v1265, 24
      %v1338 = vpop.permute.xlu0 %1337
      %1339 = vrot.lane.b32.xlu0 %v1266, 24
      %v1340 = vpop.permute.xlu0 %1339
      %1341 = vrot.lane.b32.xlu0 %v1267, 24
      %v1342 = vpop.permute.xlu0 %1341
      %1343 = vrot.lane.b32.xlu0 %v1268, 24
      %v1344 = vpop.permute.xlu0 %1343
      %1345 = vrot.lane.b32.xlu0 %v1269, 24
      %v1346 = vpop.permute.xlu0 %1345
      %1347 = vrot.lane.b32.xlu0 %v1270, 24
      %v1348 = vpop.permute.xlu0 %1347
      %1349 = vrot.lane.b32.xlu0 %v1271, 24
      %v1350 = vpop.permute.xlu0 %1349
      %1351 = vrot.lane.b32.xlu0 %v1272, 24
      %v1352 = vpop.permute.xlu0 %1351
      %1353 = vrot.lane.b32.xlu0 %v1273, 24
      %v1354 = vpop.permute.xlu0 %1353
      %1355 = vrot.lane.b32.xlu0 %v1274, 24
      %v1356 = vpop.permute.xlu0 %1355
      %1357 = vrot.lane.b32.xlu0 %v1275, 24
      %v1358 = vpop.permute.xlu0 %1357
      %1359 = vrot.lane.b32.xlu0 %v1276, 24
      %v1360 = vpop.permute.xlu0 %1359
      %1361 = vrot.lane.b32.xlu0 %v1277, 24
      %v1362 = vpop.permute.xlu0 %1361
      %1363 = vrot.lane.b32.xlu0 %v1278, 24
      %v1364 = vpop.permute.xlu0 %1363
      %1365 = vrot.lane.b32.xlu0 %v1279, 24
      %v1366 = vpop.permute.xlu0 %1365
      %1367 = vrot.lane.b32.xlu0 %v1280, 24
      %v1368 = vpop.permute.xlu0 %1367
      %1369 = vrot.lane.b32.xlu0 %v1281, 24
      %v1370 = vpop.permute.xlu0 %1369
      %1371 = vrot.lane.b32.xlu0 %v1282, 24
      %v1372 = vpop.permute.xlu0 %1371
      %1373 = vrot.lane.b32.xlu0 %v1283, 24
      %v1374 = vpop.permute.xlu0 %1373
      %1375 = vrot.lane.b32.xlu0 %v1284, 24
      %v1376 = vpop.permute.xlu0 %1375
      %1377 = vrot.lane.b32.xlu0 %v1285, 24
      %v1378 = vpop.permute.xlu0 %1377
      %1379 = vrot.lane.b32.xlu0 %v1286, 24
      %v1380 = vpop.permute.xlu0 %1379
      %1381 = vrot.lane.b32.xlu0 %v1287, 24
      %v1382 = vpop.permute.xlu0 %1381
      %1383 = vrot.lane.b32.xlu0 %v1288, 24
      %v1384 = vpop.permute.xlu0 %1383
      %vm1417 = vcmask 228544
      %1418 = vst.msk [vmem:[#allocation2] sm:$0xff] %vm1417, %v1322
      %1419 = vst.msk [vmem:[#allocation2 + $0x8] sm:$0xff] %vm1417, %v1324
      %1420 = vst.msk [vmem:[#allocation2 + $0x10] sm:$0xff] %vm1417, %v1326
      %1421 = vst.msk [vmem:[#allocation2 + $0x18] sm:$0xff] %vm1417, %v1328
      %1422 = vst.msk [vmem:[#allocation2 + $0x20] sm:$0xff] %vm1417, %v1330
      %1423 = vst.msk [vmem:[#allocation2 + $0x28] sm:$0xff] %vm1417, %v1332
      %1424 = vst.msk [vmem:[#allocation2 + $0x30] sm:$0xff] %vm1417, %v1334
      %1425 = vst.msk [vmem:[#allocation2 + $0x38] sm:$0xff] %vm1417, %v1336
      %1426 = vst.msk [vmem:[#allocation2 + $0x40] sm:$0xff] %vm1417, %v1338
      %1427 = vst.msk [vmem:[#allocation2 + $0x48] sm:$0xff] %vm1417, %v1340
      %1428 = vst.msk [vmem:[#allocation2 + $0x50] sm:$0xff] %vm1417, %v1342
      %1429 = vst.msk [vmem:[#allocation2 + $0x58] sm:$0xff] %vm1417, %v1344
      %1430 = vst.msk [vmem:[#allocation2 + $0x60] sm:$0xff] %vm1417, %v1346
      %1431 = vst.msk [vmem:[#allocation2 + $0x68] sm:$0xff] %vm1417, %v1348
      %1432 = vst.msk [vmem:[#allocation2 + $0x70] sm:$0xff] %vm1417, %v1350
      %1433 = vst.msk [vmem:[#allocation2 + $0x78] sm:$0xff] %vm1417, %v1352
      %1434 = vst.msk [vmem:[#allocation2 + $0x80] sm:$0xff] %vm1417, %v1354
      %1435 = vst.msk [vmem:[#allocation2 + $0x88] sm:$0xff] %vm1417, %v1356
      %1436 = vst.msk [vmem:[#allocation2 + $0x90] sm:$0xff] %vm1417, %v1358
      %1437 = vst.msk [vmem:[#allocation2 + $0x98] sm:$0xff] %vm1417, %v1360
      %1438 = vst.msk [vmem:[#allocation2 + $0xa0] sm:$0xff] %vm1417, %v1362
      %1439 = vst.msk [vmem:[#allocation2 + $0xa8] sm:$0xff] %vm1417, %v1364
      %1440 = vst.msk [vmem:[#allocation2 + $0xb0] sm:$0xff] %vm1417, %v1366
      %1441 = vst.msk [vmem:[#allocation2 + $0xb8] sm:$0xff] %vm1417, %v1368
      %1442 = vst.msk [vmem:[#allocation2 + $0xc0] sm:$0xff] %vm1417, %v1370
      %1443 = vst.msk [vmem:[#allocation2 + $0xc8] sm:$0xff] %vm1417, %v1372
      %1444 = vst.msk [vmem:[#allocation2 + $0xd0] sm:$0xff] %vm1417, %v1374
      %1445 = vst.msk [vmem:[#allocation2 + $0xd8] sm:$0xff] %vm1417, %v1376
      %1446 = vst.msk [vmem:[#allocation2 + $0xe0] sm:$0xff] %vm1417, %v1378
      %1447 = vst.msk [vmem:[#allocation2 + $0xe8] sm:$0xff] %vm1417, %v1380
      %1448 = vst.msk [vmem:[#allocation2 + $0xf0] sm:$0xff] %vm1417, %v1382
      %1449 = vst.msk [vmem:[#allocation2 + $0xf8] sm:$0xff] %vm1417, %v1384
      %v1450 = vld [vmem:[%s1256 + $0x1] sm:$0xff]
      %v1451 = vld [vmem:[%s1256 + $0x9] sm:$0xff]
      %v1452 = vld [vmem:[%s1256 + $0x19] sm:$0xff]
      %v1453 = vld [vmem:[%s1256 + $0x21] sm:$0xff]
      %v1454 = vld [vmem:[%s1256 + $0x31] sm:$0xff]
      %v1455 = vld [vmem:[%s1256 + $0x39] sm:$0xff]
      %v1456 = vld [vmem:[%s1256 + $0x49] sm:$0xff]
      %v1457 = vld [vmem:[%s1256 + $0x51] sm:$0xff]
      %v1458 = vld [vmem:[%s1256 + $0x61] sm:$0xff]
      %v1459 = vld [vmem:[%s1256 + $0x69] sm:$0xff]
      %v1460 = vld [vmem:[%s1256 + $0x79] sm:$0xff]
      %v1461 = vld [vmem:[%s1256 + $0x81] sm:$0xff]
      %v1462 = vld [vmem:[%s1256 + $0x91] sm:$0xff]
      %v1463 = vld [vmem:[%s1256 + $0x99] sm:$0xff]
      %v1464 = vld [vmem:[%s1256 + $0xa9] sm:$0xff]
      %v1465 = vld [vmem:[%s1256 + $0xb1] sm:$0xff]
      %v1466 = vld [vmem:[%s1256 + $0xc1] sm:$0xff]
      %v1467 = vld [vmem:[%s1256 + $0xc9] sm:$0xff]
      %v1468 = vld [vmem:[%s1256 + $0xd9] sm:$0xff]
      %v1469 = vld [vmem:[%s1256 + $0xe1] sm:$0xff]
      %v1470 = vld [vmem:[%s1256 + $0xf1] sm:$0xff]
      %v1471 = vld [vmem:[%s1256 + $0xf9] sm:$0xff]
      %v1472 = vld [vmem:[%s1256 + $0x109] sm:$0xff]
      %v1473 = vld [vmem:[%s1256 + $0x111] sm:$0xff]
      %v1474 = vld [vmem:[%s1256 + $0x121] sm:$0xff]
      %v1475 = vld [vmem:[%s1256 + $0x129] sm:$0xff]
      %v1476 = vld [vmem:[%s1256 + $0x139] sm:$0xff]
      %v1477 = vld [vmem:[%s1256 + $0x141] sm:$0xff]
      %v1478 = vld [vmem:[%s1256 + $0x151] sm:$0xff]
      %v1479 = vld [vmem:[%s1256 + $0x159] sm:$0xff]
      %v1480 = vld [vmem:[%s1256 + $0x169] sm:$0xff]
      %v1481 = vld [vmem:[%s1256 + $0x171] sm:$0xff]
      %1514 = vrot.lane.b32.xlu0 %v1450, 28
      %v1515 = vpop.permute.xlu0 %1514
      %1516 = vrot.lane.b32.xlu0 %v1451, 28
      %v1517 = vpop.permute.xlu0 %1516
      %1518 = vrot.lane.b32.xlu0 %v1452, 28
      %v1519 = vpop.permute.xlu0 %1518
      %1520 = vrot.lane.b32.xlu0 %v1453, 28
      %v1521 = vpop.permute.xlu0 %1520
      %1522 = vrot.lane.b32.xlu0 %v1454, 28
      %v1523 = vpop.permute.xlu0 %1522
      %1524 = vrot.lane.b32.xlu0 %v1455, 28
      %v1525 = vpop.permute.xlu0 %1524
      %1526 = vrot.lane.b32.xlu0 %v1456, 28
      %v1527 = vpop.permute.xlu0 %1526
      %1528 = vrot.lane.b32.xlu0 %v1457, 28
      %v1529 = vpop.permute.xlu0 %1528
      %1530 = vrot.lane.b32.xlu0 %v1458, 28
      %v1531 = vpop.permute.xlu0 %1530
      %1532 = vrot.lane.b32.xlu0 %v1459, 28
      %v1533 = vpop.permute.xlu0 %1532
      %1534 = vrot.lane.b32.xlu0 %v1460, 28
      %v1535 = vpop.permute.xlu0 %1534
      %1536 = vrot.lane.b32.xlu0 %v1461, 28
      %v1537 = vpop.permute.xlu0 %1536
      %1538 = vrot.lane.b32.xlu0 %v1462, 28
      %v1539 = vpop.permute.xlu0 %1538
      %1540 = vrot.lane.b32.xlu0 %v1463, 28
      %v1541 = vpop.permute.xlu0 %1540
      %1542 = vrot.lane.b32.xlu0 %v1464, 28
      %v1543 = vpop.permute.xlu0 %1542
      %1544 = vrot.lane.b32.xlu0 %v1465, 28
      %v1545 = vpop.permute.xlu0 %1544
      %1546 = vrot.lane.b32.xlu0 %v1466, 28
      %v1547 = vpop.permute.xlu0 %1546
      %1548 = vrot.lane.b32.xlu0 %v1467, 28
      %v1549 = vpop.permute.xlu0 %1548
      %1550 = vrot.lane.b32.xlu0 %v1468, 28
      %v1551 = vpop.permute.xlu0 %1550
      %1552 = vrot.lane.b32.xlu0 %v1469, 28
      %v1553 = vpop.permute.xlu0 %1552
      %1554 = vrot.lane.b32.xlu0 %v1470, 28
      %v1555 = vpop.permute.xlu0 %1554
      %1556 = vrot.lane.b32.xlu0 %v1471, 28
      %v1557 = vpop.permute.xlu0 %1556
      %1558 = vrot.lane.b32.xlu0 %v1472, 28
      %v1559 = vpop.permute.xlu0 %1558
      %1560 = vrot.lane.b32.xlu0 %v1473, 28
      %v1561 = vpop.permute.xlu0 %1560
      %1562 = vrot.lane.b32.xlu0 %v1474, 28
      %v1563 = vpop.permute.xlu0 %1562
      %1564 = vrot.lane.b32.xlu0 %v1475, 28
      %v1565 = vpop.permute.xlu0 %1564
      %1566 = vrot.lane.b32.xlu0 %v1476, 28
      %v1567 = vpop.permute.xlu0 %1566
      %1568 = vrot.lane.b32.xlu0 %v1477, 28
      %v1569 = vpop.permute.xlu0 %1568
      %1570 = vrot.lane.b32.xlu0 %v1478, 28
      %v1571 = vpop.permute.xlu0 %1570
      %1572 = vrot.lane.b32.xlu0 %v1479, 28
      %v1573 = vpop.permute.xlu0 %1572
      %1574 = vrot.lane.b32.xlu0 %v1480, 28
      %v1575 = vpop.permute.xlu0 %1574
      %1576 = vrot.lane.b32.xlu0 %v1481, 28
      %v1577 = vpop.permute.xlu0 %1576
      %vm1610 = vcmask 261344
      %1611 = vst.msk [vmem:[#allocation2] sm:$0xff] %vm1610, %v1515
      %1612 = vst.msk [vmem:[#allocation2 + $0x8] sm:$0xff] %vm1610, %v1517
      %1613 = vst.msk [vmem:[#allocation2 + $0x10] sm:$0xff] %vm1610, %v1519
      %1614 = vst.msk [vmem:[#allocation2 + $0x18] sm:$0xff] %vm1610, %v1521
      %1615 = vst.msk [vmem:[#allocation2 + $0x20] sm:$0xff] %vm1610, %v1523
      %1616 = vst.msk [vmem:[#allocation2 + $0x28] sm:$0xff] %vm1610, %v1525
      %1617 = vst.msk [vmem:[#allocation2 + $0x30] sm:$0xff] %vm1610, %v1527
      %1618 = vst.msk [vmem:[#allocation2 + $0x38] sm:$0xff] %vm1610, %v1529
      %1619 = vst.msk [vmem:[#allocation2 + $0x40] sm:$0xff] %vm1610, %v1531
      %1620 = vst.msk [vmem:[#allocation2 + $0x48] sm:$0xff] %vm1610, %v1533
      %1621 = vst.msk [vmem:[#allocation2 + $0x50] sm:$0xff] %vm1610, %v1535
      %1622 = vst.msk [vmem:[#allocation2 + $0x58] sm:$0xff] %vm1610, %v1537
      %1623 = vst.msk [vmem:[#allocation2 + $0x60] sm:$0xff] %vm1610, %v1539
      %1624 = vst.msk [vmem:[#allocation2 + $0x68] sm:$0xff] %vm1610, %v1541
      %1625 = vst.msk [vmem:[#allocation2 + $0x70] sm:$0xff] %vm1610, %v1543
      %1626 = vst.msk [vmem:[#allocation2 + $0x78] sm:$0xff] %vm1610, %v1545
      %1627 = vst.msk [vmem:[#allocation2 + $0x80] sm:$0xff] %vm1610, %v1547
      %1628 = vst.msk [vmem:[#allocation2 + $0x88] sm:$0xff] %vm1610, %v1549
      %1629 = vst.msk [vmem:[#allocation2 + $0x90] sm:$0xff] %vm1610, %v1551
      %1630 = vst.msk [vmem:[#allocation2 + $0x98] sm:$0xff] %vm1610, %v1553
      %1631 = vst.msk [vmem:[#allocation2 + $0xa0] sm:$0xff] %vm1610, %v1555
      %1632 = vst.msk [vmem:[#allocation2 + $0xa8] sm:$0xff] %vm1610, %v1557
      %1633 = vst.msk [vmem:[#allocation2 + $0xb0] sm:$0xff] %vm1610, %v1559
      %1634 = vst.msk [vmem:[#allocation2 + $0xb8] sm:$0xff] %vm1610, %v1561
      %1635 = vst.msk [vmem:[#allocation2 + $0xc0] sm:$0xff] %vm1610, %v1563
      %1636 = vst.msk [vmem:[#allocation2 + $0xc8] sm:$0xff] %vm1610, %v1565
      %1637 = vst.msk [vmem:[#allocation2 + $0xd0] sm:$0xff] %vm1610, %v1567
      %1638 = vst.msk [vmem:[#allocation2 + $0xd8] sm:$0xff] %vm1610, %v1569
      %1639 = vst.msk [vmem:[#allocation2 + $0xe0] sm:$0xff] %vm1610, %v1571
      %1640 = vst.msk [vmem:[#allocation2 + $0xe8] sm:$0xff] %vm1610, %v1573
      %1641 = vst.msk [vmem:[#allocation2 + $0xf0] sm:$0xff] %vm1610, %v1575
      %1642 = vst.msk [vmem:[#allocation2 + $0xf8] sm:$0xff] %vm1610, %v1577
      %v1643 = vld [vmem:[%s1256 + $0x2] sm:$0xff]
      %v1644 = vld [vmem:[%s1256 + $0xa] sm:$0xff]
      %v1645 = vld [vmem:[%s1256 + $0x1a] sm:$0xff]
      %v1646 = vld [vmem:[%s1256 + $0x22] sm:$0xff]
      %v1647 = vld [vmem:[%s1256 + $0x32] sm:$0xff]
      %v1648 = vld [vmem:[%s1256 + $0x3a] sm:$0xff]
      %v1649 = vld [vmem:[%s1256 + $0x4a] sm:$0xff]
      %v1650 = vld [vmem:[%s1256 + $0x52] sm:$0xff]
      %v1651 = vld [vmem:[%s1256 + $0x62] sm:$0xff]
      %v1652 = vld [vmem:[%s1256 + $0x6a] sm:$0xff]
      %v1653 = vld [vmem:[%s1256 + $0x7a] sm:$0xff]
      %v1654 = vld [vmem:[%s1256 + $0x82] sm:$0xff]
      %v1655 = vld [vmem:[%s1256 + $0x92] sm:$0xff]
      %v1656 = vld [vmem:[%s1256 + $0x9a] sm:$0xff]
      %v1657 = vld [vmem:[%s1256 + $0xaa] sm:$0xff]
      %v1658 = vld [vmem:[%s1256 + $0xb2] sm:$0xff]
      %v1659 = vld [vmem:[%s1256 + $0xc2] sm:$0xff]
      %v1660 = vld [vmem:[%s1256 + $0xca] sm:$0xff]
      %v1661 = vld [vmem:[%s1256 + $0xda] sm:$0xff]
      %v1662 = vld [vmem:[%s1256 + $0xe2] sm:$0xff]
      %v1663 = vld [vmem:[%s1256 + $0xf2] sm:$0xff]
      %v1664 = vld [vmem:[%s1256 + $0xfa] sm:$0xff]
      %v1665 = vld [vmem:[%s1256 + $0x10a] sm:$0xff]
      %v1666 = vld [vmem:[%s1256 + $0x112] sm:$0xff]
      %v1667 = vld [vmem:[%s1256 + $0x122] sm:$0xff]
      %v1668 = vld [vmem:[%s1256 + $0x12a] sm:$0xff]
      %v1669 = vld [vmem:[%s1256 + $0x13a] sm:$0xff]
      %v1670 = vld [vmem:[%s1256 + $0x142] sm:$0xff]
      %v1671 = vld [vmem:[%s1256 + $0x152] sm:$0xff]
      %v1672 = vld [vmem:[%s1256 + $0x15a] sm:$0xff]
      %v1673 = vld [vmem:[%s1256 + $0x16a] sm:$0xff]
      %v1674 = vld [vmem:[%s1256 + $0x172] sm:$0xff]
      %1707 = vrot.lane.b32.xlu0 %v1643, 32
      %v1708 = vpop.permute.xlu0 %1707
      %1709 = vrot.lane.b32.xlu0 %v1644, 32
      %v1710 = vpop.permute.xlu0 %1709
      %1711 = vrot.lane.b32.xlu0 %v1645, 32
      %v1712 = vpop.permute.xlu0 %1711
      %1713 = vrot.lane.b32.xlu0 %v1646, 32
      %v1714 = vpop.permute.xlu0 %1713
      %1715 = vrot.lane.b32.xlu0 %v1647, 32
      %v1716 = vpop.permute.xlu0 %1715
      %1717 = vrot.lane.b32.xlu0 %v1648, 32
      %v1718 = vpop.permute.xlu0 %1717
      %1719 = vrot.lane.b32.xlu0 %v1649, 32
      %v1720 = vpop.permute.xlu0 %1719
      %1721 = vrot.lane.b32.xlu0 %v1650, 32
      %v1722 = vpop.permute.xlu0 %1721
      %1723 = vrot.lane.b32.xlu0 %v1651, 32
      %v1724 = vpop.permute.xlu0 %1723
      %1725 = vrot.lane.b32.xlu0 %v1652, 32
      %v1726 = vpop.permute.xlu0 %1725
      %1727 = vrot.lane.b32.xlu0 %v1653, 32
      %v1728 = vpop.permute.xlu0 %1727
      %1729 = vrot.lane.b32.xlu0 %v1654, 32
      %v1730 = vpop.permute.xlu0 %1729
      %1731 = vrot.lane.b32.xlu0 %v1655, 32
      %v1732 = vpop.permute.xlu0 %1731
      %1733 = vrot.lane.b32.xlu0 %v1656, 32
      %v1734 = vpop.permute.xlu0 %1733
      %1735 = vrot.lane.b32.xlu0 %v1657, 32
      %v1736 = vpop.permute.xlu0 %1735
      %1737 = vrot.lane.b32.xlu0 %v1658, 32
      %v1738 = vpop.permute.xlu0 %1737
      %1739 = vrot.lane.b32.xlu0 %v1659, 32
      %v1740 = vpop.permute.xlu0 %1739
      %1741 = vrot.lane.b32.xlu0 %v1660, 32
      %v1742 = vpop.permute.xlu0 %1741
      %1743 = vrot.lane.b32.xlu0 %v1661, 32
      %v1744 = vpop.permute.xlu0 %1743
      %1745 = vrot.lane.b32.xlu0 %v1662, 32
      %v1746 = vpop.permute.xlu0 %1745
      %1747 = vrot.lane.b32.xlu0 %v1663, 32
      %v1748 = vpop.permute.xlu0 %1747
      %1749 = vrot.lane.b32.xlu0 %v1664, 32
      %v1750 = vpop.permute.xlu0 %1749
      %1751 = vrot.lane.b32.xlu0 %v1665, 32
      %v1752 = vpop.permute.xlu0 %1751
      %1753 = vrot.lane.b32.xlu0 %v1666, 32
      %v1754 = vpop.permute.xlu0 %1753
      %1755 = vrot.lane.b32.xlu0 %v1667, 32
      %v1756 = vpop.permute.xlu0 %1755
      %1757 = vrot.lane.b32.xlu0 %v1668, 32
      %v1758 = vpop.permute.xlu0 %1757
      %1759 = vrot.lane.b32.xlu0 %v1669, 32
      %v1760 = vpop.permute.xlu0 %1759
      %1761 = vrot.lane.b32.xlu0 %v1670, 32
      %v1762 = vpop.permute.xlu0 %1761
      %1763 = vrot.lane.b32.xlu0 %v1671, 32
      %v1764 = vpop.permute.xlu0 %1763
      %1765 = vrot.lane.b32.xlu0 %v1672, 32
      %v1766 = vpop.permute.xlu0 %1765
      %1767 = vrot.lane.b32.xlu0 %v1673, 32
      %v1768 = vpop.permute.xlu0 %1767
      %1769 = vrot.lane.b32.xlu0 %v1674, 32
      %v1770 = vpop.permute.xlu0 %1769
      %vm1803 = vcmask 294144
      %1804 = vst.msk [vmem:[#allocation2] sm:$0xff] %vm1803, %v1708
      %1805 = vst.msk [vmem:[#allocation2 + $0x8] sm:$0xff] %vm1803, %v1710
      %1806 = vst.msk [vmem:[#allocation2 + $0x10] sm:$0xff] %vm1803, %v1712
      %1807 = vst.msk [vmem:[#allocation2 + $0x18] sm:$0xff] %vm1803, %v1714
      %1808 = vst.msk [vmem:[#allocation2 + $0x20] sm:$0xff] %vm1803, %v1716
      %1809 = vst.msk [vmem:[#allocation2 + $0x28] sm:$0xff] %vm1803, %v1718
      %1810 = vst.msk [vmem:[#allocation2 + $0x30] sm:$0xff] %vm1803, %v1720
      %1811 = vst.msk [vmem:[#allocation2 + $0x38] sm:$0xff] %vm1803, %v1722
      %1812 = vst.msk [vmem:[#allocation2 + $0x40] sm:$0xff] %vm1803, %v1724
      %1813 = vst.msk [vmem:[#allocation2 + $0x48] sm:$0xff] %vm1803, %v1726
      %1814 = vst.msk [vmem:[#allocation2 + $0x50] sm:$0xff] %vm1803, %v1728
      %1815 = vst.msk [vmem:[#allocation2 + $0x58] sm:$0xff] %vm1803, %v1730
      %1816 = vst.msk [vmem:[#allocation2 + $0x60] sm:$0xff] %vm1803, %v1732
      %1817 = vst.msk [vmem:[#allocation2 + $0x68] sm:$0xff] %vm1803, %v1734
      %1818 = vst.msk [vmem:[#allocation2 + $0x70] sm:$0xff] %vm1803, %v1736
      %1819 = vst.msk [vmem:[#allocation2 + $0x78] sm:$0xff] %vm1803, %v1738
      %1820 = vst.msk [vmem:[#allocation2 + $0x80] sm:$0xff] %vm1803, %v1740
      %1821 = vst.msk [vmem:[#allocation2 + $0x88] sm:$0xff] %vm1803, %v1742
      %1822 = vst.msk [vmem:[#allocation2 + $0x90] sm:$0xff] %vm1803, %v1744
      %1823 = vst.msk [vmem:[#allocation2 + $0x98] sm:$0xff] %vm1803, %v1746
      %1824 = vst.msk [vmem:[#allocation2 + $0xa0] sm:$0xff] %vm1803, %v1748
      %1825 = vst.msk [vmem:[#allocation2 + $0xa8] sm:$0xff] %vm1803, %v1750
      %1826 = vst.msk [vmem:[#allocation2 + $0xb0] sm:$0xff] %vm1803, %v1752
      %1827 = vst.msk [vmem:[#allocation2 + $0xb8] sm:$0xff] %vm1803, %v1754
      %1828 = vst.msk [vmem:[#allocation2 + $0xc0] sm:$0xff] %vm1803, %v1756
      %1829 = vst.msk [vmem:[#allocation2 + $0xc8] sm:$0xff] %vm1803, %v1758
      %1830 = vst.msk [vmem:[#allocation2 + $0xd0] sm:$0xff] %vm1803, %v1760
      %1831 = vst.msk [vmem:[#allocation2 + $0xd8] sm:$0xff] %vm1803, %v1762
      %1832 = vst.msk [vmem:[#allocation2 + $0xe0] sm:$0xff] %vm1803, %v1764
      %1833 = vst.msk [vmem:[#allocation2 + $0xe8] sm:$0xff] %vm1803, %v1766
      %1834 = vst.msk [vmem:[#allocation2 + $0xf0] sm:$0xff] %vm1803, %v1768
      %1835 = vst.msk [vmem:[#allocation2 + $0xf8] sm:$0xff] %vm1803, %v1770
      %v1836 = vld [vmem:[#allocation2] sm:$0xff]
      %v1837 = vld [vmem:[#allocation2 + $0x8] sm:$0xff]
      %v1838 = vld [vmem:[#allocation2 + $0x10] sm:$0xff]
      %v1839 = vld [vmem:[#allocation2 + $0x18] sm:$0xff]
      %v1840 = vld [vmem:[#allocation2 + $0x20] sm:$0xff]
      %v1841 = vld [vmem:[#allocation2 + $0x28] sm:$0xff]
      %v1842 = vld [vmem:[#allocation2 + $0x30] sm:$0xff]
      %v1843 = vld [vmem:[#allocation2 + $0x38] sm:$0xff]
      %v1844 = vld [vmem:[#allocation2 + $0x40] sm:$0xff]
      %v1845 = vld [vmem:[#allocation2 + $0x48] sm:$0xff]
      %v1846 = vld [vmem:[#allocation2 + $0x50] sm:$0xff]
      %v1847 = vld [vmem:[#allocation2 + $0x58] sm:$0xff]
      %v1848 = vld [vmem:[#allocation2 + $0x60] sm:$0xff]
      %v1849 = vld [vmem:[#allocation2 + $0x68] sm:$0xff]
      %v1850 = vld [vmem:[#allocation2 + $0x70] sm:$0xff]
      %v1851 = vld [vmem:[#allocation2 + $0x78] sm:$0xff]
      %v1852 = vld [vmem:[#allocation2 + $0x80] sm:$0xff]
      %v1853 = vld [vmem:[#allocation2 + $0x88] sm:$0xff]
      %v1854 = vld [vmem:[#allocation2 + $0x90] sm:$0xff]
      %v1855 = vld [vmem:[#allocation2 + $0x98] sm:$0xff]
      %v1856 = vld [vmem:[#allocation2 + $0xa0] sm:$0xff]
      %v1857 = vld [vmem:[#allocation2 + $0xa8] sm:$0xff]
      %v1858 = vld [vmem:[#allocation2 + $0xb0] sm:$0xff]
      %v1859 = vld [vmem:[#allocation2 + $0xb8] sm:$0xff]
      %v1860 = vld [vmem:[#allocation2 + $0xc0] sm:$0xff]
      %v1861 = vld [vmem:[#allocation2 + $0xc8] sm:$0xff]
      %v1862 = vld [vmem:[#allocation2 + $0xd0] sm:$0xff]
      %v1863 = vld [vmem:[#allocation2 + $0xd8] sm:$0xff]
      %v1864 = vld [vmem:[#allocation2 + $0xe0] sm:$0xff]
      %v1865 = vld [vmem:[#allocation2 + $0xe8] sm:$0xff]
      %v1866 = vld [vmem:[#allocation2 + $0xf0] sm:$0xff]
      %v1867 = vld [vmem:[#allocation2 + $0xf8] sm:$0xff]
      %v1868 = vld [vmem:[%s1] sm:$0xff]
      %v1869 = vld [vmem:[%s1 + $0x8] sm:$0xff]
      %v1870 = vld [vmem:[%s1 + $0x10] sm:$0xff]
      %v1871 = vld [vmem:[%s1 + $0x18] sm:$0xff]
      %v1872 = vld [vmem:[%s1 + $0x20] sm:$0xf]
      %v1873 = vld [vmem:[%s2] sm:$0x1]
      %v1875 = vlaneseq
      %v1876 = vshrl.u32 %v1875, 7
      %v1877 = vsub.s32 0, %v1876
      %v1878 = vrot.slane %v1873, %v1877
      %vm1880 = vcmask 293888
      %v1882 = vsel %vm1880, %v1836, 0
      %v1885 = vsel %vm1880, %v1837, 0
      %v1888 = vsel %vm1880, %v1838, 0
      %v1891 = vsel %vm1880, %v1839, 0
      %v1894 = vsel %vm1880, %v1840, 0
      %v1897 = vsel %vm1880, %v1841, 0
      %v1900 = vsel %vm1880, %v1842, 0
      %v1903 = vsel %vm1880, %v1843, 0
      %v1906 = vsel %vm1880, %v1844, 0
      %v1909 = vsel %vm1880, %v1845, 0
      %v1912 = vsel %vm1880, %v1846, 0
      %v1915 = vsel %vm1880, %v1847, 0
      %v1918 = vsel %vm1880, %v1848, 0
      %v1921 = vsel %vm1880, %v1849, 0
      %v1924 = vsel %vm1880, %v1850, 0
      %v1927 = vsel %vm1880, %v1851, 0
      %v1930 = vsel %vm1880, %v1852, 0
      %v1933 = vsel %vm1880, %v1853, 0
      %v1936 = vsel %vm1880, %v1854, 0
      %v1939 = vsel %vm1880, %v1855, 0
      %v1942 = vsel %vm1880, %v1856, 0
      %v1945 = vsel %vm1880, %v1857, 0
      %v1948 = vsel %vm1880, %v1858, 0
      %v1951 = vsel %vm1880, %v1859, 0
      %v1954 = vsel %vm1880, %v1860, 0
      %v1957 = vsel %vm1880, %v1861, 0
      %v1960 = vsel %vm1880, %v1862, 0
      %v1963 = vsel %vm1880, %v1863, 0
      %v1966 = vsel %vm1880, %v1864, 0
      %v1969 = vsel %vm1880, %v1865, 0
      %v1972 = vsel %vm1880, %v1866, 0
      %v1975 = vsel %vm1880, %v1867, 0
      %vm1977 = vcmask 1043456
      %v1979 = vsel %vm1977, %v1872, 0
      %1981 = vmatprep.subr.mxu0 0.0
      %1982 = vmatpush1.msra.mxu0 %v1868
      %1983 = vmatprep.subr.mxu0 0.0
      %1984 = vmatpush1.msra.mxu0 %v1869
      %1985 = vmatprep.subr.mxu0 0.0
      %1986 = vmatpush1.msra.mxu0 %v1870
      %1987 = vmatprep.subr.mxu0 0.0
      %1988 = vmatpush1.msra.mxu0 %v1871
      %1989 = vmatprep.subr.mxu0 0.0
      %1990 = vmatpush1.msra.mxu0 %v1979
      %1991 = vmatprep.subr.mxu0 0.0
      %1992 = vmatpush1.msra.mxu0 0.0
      %1993 = vmatprep.subr.mxu0 0.0
      %1994 = vmatpush1.msra.mxu0 0.0
      %1995 = vmatprep.subr.mxu0 0.0
      %1996 = vmatpush1.msra.mxu0 0.0
      %1997 = vmatprep.subr.mxu0 0.0
      %1998 = vmatpush1.msra.mxu0 0.0
      %1999 = vmatprep.subr.mxu0 0.0
      %2000 = vmatpush1.msra.mxu0 0.0
      %2001 = vmatprep.subr.mxu0 0.0
      %2002 = vmatpush1.msra.mxu0 0.0
      %2003 = vmatprep.subr.mxu0 0.0
      %2004 = vmatpush1.msra.mxu0 0.0
      %2005 = vmatprep.subr.mxu0 0.0
      %2006 = vmatpush1.msra.mxu0 0.0
      %2007 = vmatprep.subr.mxu0 0.0
      %2008 = vmatpush1.msra.mxu0 0.0
      %2009 = vmatprep.subr.mxu0 0.0
      %2010 = vmatpush1.msra.mxu0 0.0
      %2011 = vmatprep.subr.mxu0 0.0
      %2012 = vmatpush1.msra.mxu0 0.0
      %2013 = vmatprep.subr.mxu0 0.0
      %2014 = vmatpush1.msra.mxu0 0.0
      %2015 = vmatprep.subr.mxu0 0.0
      %2016 = vmatpush1.msra.mxu0 0.0
      %2017 = vmatprep.subr.mxu0 0.0
      %2018 = vmatpush1.msra.mxu0 0.0
      %2019 = vmatprep.subr.mxu0 0.0
      %2020 = vmatpush1.msra.mxu0 0.0
      %2021 = vmatprep.subr.mxu0 0.0
      %2022 = vmatpush1.msra.mxu0 0.0
      %2023 = vmatprep.subr.mxu0 0.0
      %2024 = vmatpush1.msra.mxu0 0.0
      %2025 = vmatprep.subr.mxu0 0.0
      %2026 = vmatpush1.msra.mxu0 0.0
      %2027 = vmatprep.subr.mxu0 0.0
      %2028 = vmatpush1.msra.mxu0 0.0
      %2029 = vmatprep.subr.mxu0 0.0
      %2030 = vmatpush1.msra.mxu0 0.0
      %2031 = vmatprep.subr.mxu0 0.0
      %2032 = vmatpush1.msra.mxu0 0.0
      %2033 = vmatprep.subr.mxu0 0.0
      %2034 = vmatpush1.msra.mxu0 0.0
      %2035 = vmatprep.subr.mxu0 0.0
      %2036 = vmatpush1.msra.mxu0 0.0
      %2037 = vmatprep.subr.mxu0 0.0
      %2038 = vmatpush1.msra.mxu0 0.0
      %2039 = vmatprep.subr.mxu0 0.0
      %2040 = vmatpush1.msra.mxu0 0.0
      %2041 = vmatprep.subr.mxu0 0.0
      %2042 = vmatpush1.msra.mxu0 0.0
      %2043 = vmatprep.subr.mxu0 0.0
      %2044 = vmatpush1.msra.mxu0 0.0
      %2045 = vmatprep.mubr.f32.mxu0 0.0
      %2046 = vmatmul.mubr.f32.gmra.mrb[0].mxu0 %v1882
      %v2047 = vpop.f32.mrb[0].mxu0
      %v2048 = vadd.f32 %v1878, %v2047
      %v2049 = vpop.f32.mrb[0].mxu0
      %2050 = vmatprep.mubr.f32.mxu0 0.0
      %2051 = vmatmul.mubr.f32.gmra.mrb[0].mxu0 %v1885
      %v2052 = vpop.f32.mrb[0].mxu0
      %v2053 = vadd.f32 %v1878, %v2052
      %v2054 = vpop.f32.mrb[0].mxu0
      %2055 = vmatprep.mubr.f32.mxu0 0.0
      %2056 = vmatmul.mubr.f32.gmra.mrb[0].mxu0 %v1888
      %v2057 = vpop.f32.mrb[0].mxu0
      %v2058 = vadd.f32 %v1878, %v2057
      %v2059 = vpop.f32.mrb[0].mxu0
      %2060 = vmatprep.mubr.f32.mxu0 0.0
      %2061 = vmatmul.mubr.f32.gmra.mrb[0].mxu0 %v1891
      %v2062 = vpop.f32.mrb[0].mxu0
      %v2063 = vadd.f32 %v1878, %v2062
      %v2064 = vpop.f32.mrb[0].mxu0
      %2065 = vmatprep.mubr.f32.mxu0 0.0
      %2066 = vmatmul.mubr.f32.gmra.mrb[0].mxu0 %v1894
      %v2067 = vpop.f32.mrb[0].mxu0
      %v2068 = vadd.f32 %v1878, %v2067
      %v2069 = vpop.f32.mrb[0].mxu0
      %2070 = vmatprep.mubr.f32.mxu0 0.0
      %2071 = vmatmul.mubr.f32.gmra.mrb[0].mxu0 %v1897
      %v2072 = vpop.f32.mrb[0].mxu0
      %v2073 = vadd.f32 %v1878, %v2072
      %v2074 = vpop.f32.mrb[0].mxu0
      %2075 = vmatprep.mubr.f32.mxu0 0.0
      %2076 = vmatmul.mubr.f32.gmra.mrb[0].mxu0 %v1900
      %v2077 = vpop.f32.mrb[0].mxu0
      %v2078 = vadd.f32 %v1878, %v2077
      %v2079 = vpop.f32.mrb[0].mxu0
      %2080 = vmatprep.mubr.f32.mxu0 0.0
      %2081 = vmatmul.mubr.f32.gmra.mrb[0].mxu0 %v1903
      %v2082 = vpop.f32.mrb[0].mxu0
      %v2083 = vadd.f32 %v1878, %v2082
      %v2084 = vpop.f32.mrb[0].mxu0
      %2085 = vmatprep.mubr.f32.mxu0 0.0
      %2086 = vmatmul.mubr.f32.gmra.mrb[0].mxu0 %v1906
      %v2087 = vpop.f32.mrb[0].mxu0
      %v2088 = vadd.f32 %v1878, %v2087
      %v2089 = vpop.f32.mrb[0].mxu0
      %2090 = vmatprep.mubr.f32.mxu0 0.0
      %2091 = vmatmul.mubr.f32.gmra.mrb[0].mxu0 %v1909
      %v2092 = vpop.f32.mrb[0].mxu0
      %v2093 = vadd.f32 %v1878, %v2092
      %v2094 = vpop.f32.mrb[0].mxu0
      %2095 = vmatprep.mubr.f32.mxu0 0.0
      %2096 = vmatmul.mubr.f32.gmra.mrb[0].mxu0 %v1912
      %v2097 = vpop.f32.mrb[0].mxu0
      %v2098 = vadd.f32 %v1878, %v2097
      %v2099 = vpop.f32.mrb[0].mxu0
      %2100 = vmatprep.mubr.f32.mxu0 0.0
      %2101 = vmatmul.mubr.f32.gmra.mrb[0].mxu0 %v1915
      %v2102 = vpop.f32.mrb[0].mxu0
      %v2103 = vadd.f32 %v1878, %v2102
      %v2104 = vpop.f32.mrb[0].mxu0
      %2105 = vmatprep.mubr.f32.mxu0 0.0
      %2106 = vmatmul.mubr.f32.gmra.mrb[0].mxu0 %v1918
      %v2107 = vpop.f32.mrb[0].mxu0
      %v2108 = vadd.f32 %v1878, %v2107
      %v2109 = vpop.f32.mrb[0].mxu0
      %2110 = vmatprep.mubr.f32.mxu0 0.0
      %2111 = vmatmul.mubr.f32.gmra.mrb[0].mxu0 %v1921
      %v2112 = vpop.f32.mrb[0].mxu0
      %v2113 = vadd.f32 %v1878, %v2112
      %v2114 = vpop.f32.mrb[0].mxu0
      %2115 = vmatprep.mubr.f32.mxu0 0.0
      %2116 = vmatmul.mubr.f32.gmra.mrb[0].mxu0 %v1924
      %v2117 = vpop.f32.mrb[0].mxu0
      %v2118 = vadd.f32 %v1878, %v2117
      %v2119 = vpop.f32.mrb[0].mxu0
      %2120 = vmatprep.mubr.f32.mxu0 0.0
      %2121 = vmatmul.mubr.f32.gmra.mrb[0].mxu0 %v1927
      %v2122 = vpop.f32.mrb[0].mxu0
      %v2123 = vadd.f32 %v1878, %v2122
      %v2124 = vpop.f32.mrb[0].mxu0
      %2125 = vmatprep.mubr.f32.mxu0 0.0
      %2126 = vmatmul.mubr.f32.gmra.mrb[0].mxu0 %v1930
      %v2127 = vpop.f32.mrb[0].mxu0
      %v2128 = vadd.f32 %v1878, %v2127
      %v2129 = vpop.f32.mrb[0].mxu0
      %2130 = vmatprep.mubr.f32.mxu0 0.0
      %2131 = vmatmul.mubr.f32.gmra.mrb[0].mxu0 %v1933
      %v2132 = vpop.f32.mrb[0].mxu0
      %v2133 = vadd.f32 %v1878, %v2132
      %v2134 = vpop.f32.mrb[0].mxu0
      %2135 = vmatprep.mubr.f32.mxu0 0.0
      %2136 = vmatmul.mubr.f32.gmra.mrb[0].mxu0 %v1936
      %v2137 = vpop.f32.mrb[0].mxu0
      %v2138 = vadd.f32 %v1878, %v2137
      %v2139 = vpop.f32.mrb[0].mxu0
      %2140 = vmatprep.mubr.f32.mxu0 0.0
      %2141 = vmatmul.mubr.f32.gmra.mrb[0].mxu0 %v1939
      %v2142 = vpop.f32.mrb[0].mxu0
      %v2143 = vadd.f32 %v1878, %v2142
      %v2144 = vpop.f32.mrb[0].mxu0
      %2145 = vmatprep.mubr.f32.mxu0 0.0
      %2146 = vmatmul.mubr.f32.gmra.mrb[0].mxu0 %v1942
      %v2147 = vpop.f32.mrb[0].mxu0
      %v2148 = vadd.f32 %v1878, %v2147
      %v2149 = vpop.f32.mrb[0].mxu0
      %2150 = vmatprep.mubr.f32.mxu0 0.0
      %2151 = vmatmul.mubr.f32.gmra.mrb[0].mxu0 %v1945
      %v2152 = vpop.f32.mrb[0].mxu0
      %v2153 = vadd.f32 %v1878, %v2152
      %v2154 = vpop.f32.mrb[0].mxu0
      %2155 = vmatprep.mubr.f32.mxu0 0.0
      %2156 = vmatmul.mubr.f32.gmra.mrb[0].mxu0 %v1948
      %v2157 = vpop.f32.mrb[0].mxu0
      %v2158 = vadd.f32 %v1878, %v2157
      %v2159 = vpop.f32.mrb[0].mxu0
      %2160 = vmatprep.mubr.f32.mxu0 0.0
      %2161 = vmatmul.mubr.f32.gmra.mrb[0].mxu0 %v1951
      %v2162 = vpop.f32.mrb[0].mxu0
      %v2163 = vadd.f32 %v1878, %v2162
      %v2164 = vpop.f32.mrb[0].mxu0
      %2165 = vmatprep.mubr.f32.mxu0 0.0
      %2166 = vmatmul.mubr.f32.gmra.mrb[0].mxu0 %v1954
      %v2167 = vpop.f32.mrb[0].mxu0
      %v2168 = vadd.f32 %v1878, %v2167
      %v2169 = vpop.f32.mrb[0].mxu0
      %2170 = vmatprep.mubr.f32.mxu0 0.0
      %2171 = vmatmul.mubr.f32.gmra.mrb[0].mxu0 %v1957
      %v2172 = vpop.f32.mrb[0].mxu0
      %v2173 = vadd.f32 %v1878, %v2172
      %v2174 = vpop.f32.mrb[0].mxu0
      %2175 = vmatprep.mubr.f32.mxu0 0.0
      %2176 = vmatmul.mubr.f32.gmra.mrb[0].mxu0 %v1960
      %v2177 = vpop.f32.mrb[0].mxu0
      %v2178 = vadd.f32 %v1878, %v2177
      %v2179 = vpop.f32.mrb[0].mxu0
      %2180 = vmatprep.mubr.f32.mxu0 0.0
      %2181 = vmatmul.mubr.f32.gmra.mrb[0].mxu0 %v1963
      %v2182 = vpop.f32.mrb[0].mxu0
      %v2183 = vadd.f32 %v1878, %v2182
      %v2184 = vpop.f32.mrb[0].mxu0
      %2185 = vmatprep.mubr.f32.mxu0 0.0
      %2186 = vmatmul.mubr.f32.gmra.mrb[0].mxu0 %v1966
      %v2187 = vpop.f32.mrb[0].mxu0
      %v2188 = vadd.f32 %v1878, %v2187
      %v2189 = vpop.f32.mrb[0].mxu0
      %2190 = vmatprep.mubr.f32.mxu0 0.0
      %2191 = vmatmul.mubr.f32.gmra.mrb[0].mxu0 %v1969
      %v2192 = vpop.f32.mrb[0].mxu0
      %v2193 = vadd.f32 %v1878, %v2192
      %v2194 = vpop.f32.mrb[0].mxu0
      %2195 = vmatprep.mubr.f32.mxu0 0.0
      %2196 = vmatmul.mubr.f32.gmra.mrb[0].mxu0 %v1972
      %v2197 = vpop.f32.mrb[0].mxu0
      %v2198 = vadd.f32 %v1878, %v2197
      %v2199 = vpop.f32.mrb[0].mxu0
      %2200 = vmatprep.mubr.f32.mxu0 0.0
      %2201 = vmatmul.mubr.f32.gmra.mrb[0].mxu0 %v1975
      %v2202 = vpop.f32.mrb[0].mxu0
      %v2203 = vadd.f32 %v1878, %v2202
      %v2204 = vpop.f32.mrb[0].mxu0
      %2205 = vdwg.mxu0
      %v2206 = vmax.f32 %v2048, 0.0
      %v2207 = vmax.f32 %v2053, 0.0
      %v2208 = vmax.f32 %v2058, 0.0
      %v2209 = vmax.f32 %v2063, 0.0
      %v2210 = vmax.f32 %v2068, 0.0
      %v2211 = vmax.f32 %v2073, 0.0
      %v2212 = vmax.f32 %v2078, 0.0
      %v2213 = vmax.f32 %v2083, 0.0
      %v2214 = vmax.f32 %v2088, 0.0
      %v2215 = vmax.f32 %v2093, 0.0
      %v2216 = vmax.f32 %v2098, 0.0
      %v2217 = vmax.f32 %v2103, 0.0
      %v2218 = vmax.f32 %v2108, 0.0
      %v2219 = vmax.f32 %v2113, 0.0
      %v2220 = vmax.f32 %v2118, 0.0
      %v2221 = vmax.f32 %v2123, 0.0
      %v2222 = vmax.f32 %v2128, 0.0
      %v2223 = vmax.f32 %v2133, 0.0
      %v2224 = vmax.f32 %v2138, 0.0
      %v2225 = vmax.f32 %v2143, 0.0
      %v2226 = vmax.f32 %v2148, 0.0
      %v2227 = vmax.f32 %v2153, 0.0
      %v2228 = vmax.f32 %v2158, 0.0
      %v2229 = vmax.f32 %v2163, 0.0
      %v2230 = vmax.f32 %v2168, 0.0
      %v2231 = vmax.f32 %v2173, 0.0
      %v2232 = vmax.f32 %v2178, 0.0
      %v2233 = vmax.f32 %v2183, 0.0
      %v2234 = vmax.f32 %v2188, 0.0
      %v2235 = vmax.f32 %v2193, 0.0
      %v2236 = vmax.f32 %v2198, 0.0
      %v2237 = vmax.f32 %v2203, 0.0
      %vm2238 = vcmask 64512
      %2239 = vst.msk [vmem:[#allocation3] sm:$0xff] %vm2238, 0.0
      %2240 = vst.msk [vmem:[#allocation3 + $0x8] sm:$0xff] %vm2238, 0.0
      %2241 = vst.msk [vmem:[#allocation3 + $0x10] sm:$0xff] %vm2238, 0.0
      %2242 = vst.msk [vmem:[#allocation3 + $0x18] sm:$0xff] %vm2238, 0.0
      %2243 = vst.msk [vmem:[#allocation3 + $0x20] sm:$0xff] %vm2238, 0.0
      %2244 = vst.msk [vmem:[#allocation3 + $0x28] sm:$0xff] %vm2238, 0.0
      %2245 = vst.msk [vmem:[#allocation3 + $0x30] sm:$0xff] %vm2238, 0.0
      %2246 = vst.msk [vmem:[#allocation3 + $0x38] sm:$0xff] %vm2238, 0.0
      %2247 = vst.msk [vmem:[#allocation3 + $0x40] sm:$0xff] %vm2238, 0.0
      %2248 = vst.msk [vmem:[#allocation3 + $0x48] sm:$0xff] %vm2238, 0.0
      %2249 = vst.msk [vmem:[#allocation3 + $0x50] sm:$0xff] %vm2238, 0.0
      %2250 = vst.msk [vmem:[#allocation3 + $0x58] sm:$0xff] %vm2238, 0.0
      %2251 = vst.msk [vmem:[#allocation3 + $0x60] sm:$0xff] %vm2238, 0.0
      %2252 = vst.msk [vmem:[#allocation3 + $0x68] sm:$0xff] %vm2238, 0.0
      %2253 = vst.msk [vmem:[#allocation3 + $0x70] sm:$0xff] %vm2238, 0.0
      %2254 = vst.msk [vmem:[#allocation3 + $0x78] sm:$0xff] %vm2238, 0.0
      %2255 = vst.msk [vmem:[#allocation3 + $0x80] sm:$0xff] %vm2238, 0.0
      %2256 = vst.msk [vmem:[#allocation3 + $0x88] sm:$0xff] %vm2238, 0.0
      %2257 = vst.msk [vmem:[#allocation3 + $0x90] sm:$0xff] %vm2238, 0.0
      %2258 = vst.msk [vmem:[#allocation3 + $0x98] sm:$0xff] %vm2238, 0.0
      %2259 = vst.msk [vmem:[#allocation3 + $0xa0] sm:$0xff] %vm2238, 0.0
      %2260 = vst.msk [vmem:[#allocation3 + $0xa8] sm:$0xff] %vm2238, 0.0
      %2261 = vst.msk [vmem:[#allocation3 + $0xb0] sm:$0xff] %vm2238, 0.0
      %2262 = vst.msk [vmem:[#allocation3 + $0xb8] sm:$0xff] %vm2238, 0.0
      %2263 = vst.msk [vmem:[#allocation3 + $0xc0] sm:$0xff] %vm2238, 0.0
      %2264 = vst.msk [vmem:[#allocation3 + $0xc8] sm:$0xff] %vm2238, 0.0
      %2265 = vst.msk [vmem:[#allocation3 + $0xd0] sm:$0xff] %vm2238, 0.0
      %2266 = vst.msk [vmem:[#allocation3 + $0xd8] sm:$0xff] %vm2238, 0.0
      %2267 = vst.msk [vmem:[#allocation3 + $0xe0] sm:$0xff] %vm2238, 0.0
      %2268 = vst.msk [vmem:[#allocation3 + $0xe8] sm:$0xff] %vm2238, 0.0
      %2269 = vst.msk [vmem:[#allocation3 + $0xf0] sm:$0xff] %vm2238, 0.0
      %2270 = vst.msk [vmem:[#allocation3 + $0xf8] sm:$0xff] %vm2238, 0.0
      %2271 = vst.msk [vmem:[#allocation3 + $0x100] sm:$0xff] %vm2238, 0.0
      %2272 = vst.msk [vmem:[#allocation3 + $0x108] sm:$0xff] %vm2238, 0.0
      %2273 = vst.msk [vmem:[#allocation3 + $0x110] sm:$0xff] %vm2238, 0.0
      %2274 = vst.msk [vmem:[#allocation3 + $0x118] sm:$0xff] %vm2238, 0.0
      %2275 = vst.msk [vmem:[#allocation3 + $0x120] sm:$0xff] %vm2238, 0.0
      %2276 = vst.msk [vmem:[#allocation3 + $0x128] sm:$0xff] %vm2238, 0.0
      %2277 = vst.msk [vmem:[#allocation3 + $0x130] sm:$0xff] %vm2238, 0.0
      %2278 = vst.msk [vmem:[#allocation3 + $0x138] sm:$0xff] %vm2238, 0.0
      %2279 = vst.msk [vmem:[#allocation3 + $0x140] sm:$0xff] %vm2238, 0.0
      %2280 = vst.msk [vmem:[#allocation3 + $0x148] sm:$0xff] %vm2238, 0.0
      %2281 = vst.msk [vmem:[#allocation3 + $0x150] sm:$0xff] %vm2238, 0.0
      %2282 = vst.msk [vmem:[#allocation3 + $0x158] sm:$0xff] %vm2238, 0.0
      %2283 = vst.msk [vmem:[#allocation3 + $0x160] sm:$0xff] %vm2238, 0.0
      %2284 = vst.msk [vmem:[#allocation3 + $0x168] sm:$0xff] %vm2238, 0.0
      %2285 = vst.msk [vmem:[#allocation3 + $0x170] sm:$0xff] %vm2238, 0.0
      %2286 = vst.msk [vmem:[#allocation3 + $0x178] sm:$0xff] %vm2238, 0.0
      %2287 = vst.msk [vmem:[#allocation3 + $0x180] sm:$0xff] %vm2238, 0.0
      %2288 = vst.msk [vmem:[#allocation3 + $0x188] sm:$0xff] %vm2238, 0.0
      %2289 = vst.msk [vmem:[#allocation3 + $0x190] sm:$0xff] %vm2238, 0.0
      %2290 = vst.msk [vmem:[#allocation3 + $0x198] sm:$0xff] %vm2238, 0.0
      %2291 = vst.msk [vmem:[#allocation3 + $0x1a0] sm:$0xff] %vm2238, 0.0
      %2292 = vst.msk [vmem:[#allocation3 + $0x1a8] sm:$0xff] %vm2238, 0.0
      %2293 = vst.msk [vmem:[#allocation3 + $0x1b0] sm:$0xff] %vm2238, 0.0
      %2294 = vst.msk [vmem:[#allocation3 + $0x1b8] sm:$0xff] %vm2238, 0.0
      %2295 = vst.msk [vmem:[#allocation3 + $0x1c0] sm:$0xff] %vm2238, 0.0
      %2296 = vst.msk [vmem:[#allocation3 + $0x1c8] sm:$0xff] %vm2238, 0.0
      %2297 = vst.msk [vmem:[#allocation3 + $0x1d0] sm:$0xff] %vm2238, 0.0
      %2298 = vst.msk [vmem:[#allocation3 + $0x1d8] sm:$0xff] %vm2238, 0.0
      %2299 = vst.msk [vmem:[#allocation3 + $0x1e0] sm:$0xff] %vm2238, 0.0
      %2300 = vst.msk [vmem:[#allocation3 + $0x1e8] sm:$0xff] %vm2238, 0.0
      %2301 = vst.msk [vmem:[#allocation3 + $0x1f0] sm:$0xff] %vm2238, 0.0
      %2302 = vst.msk [vmem:[#allocation3 + $0x1f8] sm:$0xff] %vm2238, 0.0
      %2303 = vst.msk [vmem:[#allocation3 + $0x200] sm:$0xff] %vm2238, 0.0
      %2304 = vst.msk [vmem:[#allocation3 + $0x208] sm:$0xff] %vm2238, 0.0
      %2305 = vst.msk [vmem:[#allocation3 + $0x210] sm:$0xff] %vm2238, 0.0
      %2306 = vst.msk [vmem:[#allocation3 + $0x218] sm:$0xff] %vm2238, 0.0
      %2307 = vst.msk [vmem:[#allocation3 + $0x220] sm:$0xff] %vm2238, 0.0
      %2308 = vst.msk [vmem:[#allocation3 + $0x228] sm:$0xff] %vm2238, 0.0
      %2309 = vst.msk [vmem:[#allocation3 + $0x230] sm:$0xff] %vm2238, 0.0
      %2310 = vst.msk [vmem:[#allocation3 + $0x238] sm:$0xff] %vm2238, 0.0
      %s2311 = scalar_lea.vmem [#allocation3], 32
      %2312 = vst.msk [vmem:[%s2311 + $0x8] sm:$0xff] %vm2238, %v2206
      %2313 = vst.msk [vmem:[%s2311 + $0x10] sm:$0xff] %vm2238, %v2207
      %2314 = vst.msk [vmem:[%s2311 + $0x28] sm:$0xff] %vm2238, %v2208
      %2315 = vst.msk [vmem:[%s2311 + $0x30] sm:$0xff] %vm2238, %v2209
      %2316 = vst.msk [vmem:[%s2311 + $0x48] sm:$0xff] %vm2238, %v2210
      %2317 = vst.msk [vmem:[%s2311 + $0x50] sm:$0xff] %vm2238, %v2211
      %2318 = vst.msk [vmem:[%s2311 + $0x68] sm:$0xff] %vm2238, %v2212
      %2319 = vst.msk [vmem:[%s2311 + $0x70] sm:$0xff] %vm2238, %v2213
      %2320 = vst.msk [vmem:[%s2311 + $0x88] sm:$0xff] %vm2238, %v2214
      %2321 = vst.msk [vmem:[%s2311 + $0x90] sm:$0xff] %vm2238, %v2215
      %2322 = vst.msk [vmem:[%s2311 + $0xa8] sm:$0xff] %vm2238, %v2216
      %2323 = vst.msk [vmem:[%s2311 + $0xb0] sm:$0xff] %vm2238, %v2217
      %2324 = vst.msk [vmem:[%s2311 + $0xc8] sm:$0xff] %vm2238, %v2218
      %2325 = vst.msk [vmem:[%s2311 + $0xd0] sm:$0xff] %vm2238, %v2219
      %2326 = vst.msk [vmem:[%s2311 + $0xe8] sm:$0xff] %vm2238, %v2220
      %2327 = vst.msk [vmem:[%s2311 + $0xf0] sm:$0xff] %vm2238, %v2221
      %2328 = vst.msk [vmem:[%s2311 + $0x108] sm:$0xff] %vm2238, %v2222
      %2329 = vst.msk [vmem:[%s2311 + $0x110] sm:$0xff] %vm2238, %v2223
      %2330 = vst.msk [vmem:[%s2311 + $0x128] sm:$0xff] %vm2238, %v2224
      %2331 = vst.msk [vmem:[%s2311 + $0x130] sm:$0xff] %vm2238, %v2225
      %2332 = vst.msk [vmem:[%s2311 + $0x148] sm:$0xff] %vm2238, %v2226
      %2333 = vst.msk [vmem:[%s2311 + $0x150] sm:$0xff] %vm2238, %v2227
      %2334 = vst.msk [vmem:[%s2311 + $0x168] sm:$0xff] %vm2238, %v2228
      %2335 = vst.msk [vmem:[%s2311 + $0x170] sm:$0xff] %vm2238, %v2229
      %2336 = vst.msk [vmem:[%s2311 + $0x188] sm:$0xff] %vm2238, %v2230
      %2337 = vst.msk [vmem:[%s2311 + $0x190] sm:$0xff] %vm2238, %v2231
      %2338 = vst.msk [vmem:[%s2311 + $0x1a8] sm:$0xff] %vm2238, %v2232
      %2339 = vst.msk [vmem:[%s2311 + $0x1b0] sm:$0xff] %vm2238, %v2233
      %2340 = vst.msk [vmem:[%s2311 + $0x1c8] sm:$0xff] %vm2238, %v2234
      %2341 = vst.msk [vmem:[%s2311 + $0x1d0] sm:$0xff] %vm2238, %v2235
      %2342 = vst.msk [vmem:[%s2311 + $0x1e8] sm:$0xff] %vm2238, %v2236
      %2343 = vst.msk [vmem:[%s2311 + $0x1f0] sm:$0xff] %vm2238, %v2237
      %v2344 = vld [vmem:[#allocation3 + $0x7] sm:$0xff]
      %v2345 = vld [vmem:[#allocation3 + $0xf] sm:$0xff]
      %v2346 = vld [vmem:[#allocation3 + $0x27] sm:$0xff]
      %v2347 = vld [vmem:[#allocation3 + $0x2f] sm:$0xff]
      %v2348 = vld [vmem:[#allocation3 + $0x47] sm:$0xff]
      %v2349 = vld [vmem:[#allocation3 + $0x4f] sm:$0xff]
      %v2350 = vld [vmem:[#allocation3 + $0x67] sm:$0xff]
      %v2351 = vld [vmem:[#allocation3 + $0x6f] sm:$0xff]
      %v2352 = vld [vmem:[#allocation3 + $0x87] sm:$0xff]
      %v2353 = vld [vmem:[#allocation3 + $0x8f] sm:$0xff]
      %v2354 = vld [vmem:[#allocation3 + $0xa7] sm:$0xff]
      %v2355 = vld [vmem:[#allocation3 + $0xaf] sm:$0xff]
      %v2356 = vld [vmem:[#allocation3 + $0xc7] sm:$0xff]
      %v2357 = vld [vmem:[#allocation3 + $0xcf] sm:$0xff]
      %v2358 = vld [vmem:[#allocation3 + $0xe7] sm:$0xff]
      %v2359 = vld [vmem:[#allocation3 + $0xef] sm:$0xff]
      %v2360 = vld [vmem:[#allocation3 + $0x107] sm:$0xff]
      %v2361 = vld [vmem:[#allocation3 + $0x10f] sm:$0xff]
      %v2362 = vld [vmem:[#allocation3 + $0x127] sm:$0xff]
      %v2363 = vld [vmem:[#allocation3 + $0x12f] sm:$0xff]
      %v2364 = vld [vmem:[#allocation3 + $0x147] sm:$0xff]
      %v2365 = vld [vmem:[#allocation3 + $0x14f] sm:$0xff]
      %v2366 = vld [vmem:[#allocation3 + $0x167] sm:$0xff]
      %v2367 = vld [vmem:[#allocation3 + $0x16f] sm:$0xff]
      %v2368 = vld [vmem:[#allocation3 + $0x187] sm:$0xff]
      %v2369 = vld [vmem:[#allocation3 + $0x18f] sm:$0xff]
      %v2370 = vld [vmem:[#allocation3 + $0x1a7] sm:$0xff]
      %v2371 = vld [vmem:[#allocation3 + $0x1af] sm:$0xff]
      %v2372 = vld [vmem:[#allocation3 + $0x1c7] sm:$0xff]
      %v2373 = vld [vmem:[#allocation3 + $0x1cf] sm:$0xff]
      %v2374 = vld [vmem:[#allocation3 + $0x1e7] sm:$0xff]
      %v2375 = vld [vmem:[#allocation3 + $0x1ef] sm:$0xff]
      %2376 = vst.msk [vmem:[#allocation4] sm:$0xff] %vm2238, %v2344
      %2377 = vst.msk [vmem:[#allocation4 + $0x8] sm:$0xff] %vm2238, %v2345
      %2378 = vst.msk [vmem:[#allocation4 + $0x10] sm:$0xff] %vm2238, %v2346
      %2379 = vst.msk [vmem:[#allocation4 + $0x18] sm:$0xff] %vm2238, %v2347
      %2380 = vst.msk [vmem:[#allocation4 + $0x20] sm:$0xff] %vm2238, %v2348
      %2381 = vst.msk [vmem:[#allocation4 + $0x28] sm:$0xff] %vm2238, %v2349
      %2382 = vst.msk [vmem:[#allocation4 + $0x30] sm:$0xff] %vm2238, %v2350
      %2383 = vst.msk [vmem:[#allocation4 + $0x38] sm:$0xff] %vm2238, %v2351
      %2384 = vst.msk [vmem:[#allocation4 + $0x40] sm:$0xff] %vm2238, %v2352
      %2385 = vst.msk [vmem:[#allocation4 + $0x48] sm:$0xff] %vm2238, %v2353
      %2386 = vst.msk [vmem:[#allocation4 + $0x50] sm:$0xff] %vm2238, %v2354
      %2387 = vst.msk [vmem:[#allocation4 + $0x58] sm:$0xff] %vm2238, %v2355
      %2388 = vst.msk [vmem:[#allocation4 + $0x60] sm:$0xff] %vm2238, %v2356
      %2389 = vst.msk [vmem:[#allocation4 + $0x68] sm:$0xff] %vm2238, %v2357
      %2390 = vst.msk [vmem:[#allocation4 + $0x70] sm:$0xff] %vm2238, %v2358
      %2391 = vst.msk [vmem:[#allocation4 + $0x78] sm:$0xff] %vm2238, %v2359
      %2392 = vst.msk [vmem:[#allocation4 + $0x80] sm:$0xff] %vm2238, %v2360
      %2393 = vst.msk [vmem:[#allocation4 + $0x88] sm:$0xff] %vm2238, %v2361
      %2394 = vst.msk [vmem:[#allocation4 + $0x90] sm:$0xff] %vm2238, %v2362
      %2395 = vst.msk [vmem:[#allocation4 + $0x98] sm:$0xff] %vm2238, %v2363
      %2396 = vst.msk [vmem:[#allocation4 + $0xa0] sm:$0xff] %vm2238, %v2364
      %2397 = vst.msk [vmem:[#allocation4 + $0xa8] sm:$0xff] %vm2238, %v2365
      %2398 = vst.msk [vmem:[#allocation4 + $0xb0] sm:$0xff] %vm2238, %v2366
      %2399 = vst.msk [vmem:[#allocation4 + $0xb8] sm:$0xff] %vm2238, %v2367
      %2400 = vst.msk [vmem:[#allocation4 + $0xc0] sm:$0xff] %vm2238, %v2368
      %2401 = vst.msk [vmem:[#allocation4 + $0xc8] sm:$0xff] %vm2238, %v2369
      %2402 = vst.msk [vmem:[#allocation4 + $0xd0] sm:$0xff] %vm2238, %v2370
      %2403 = vst.msk [vmem:[#allocation4 + $0xd8] sm:$0xff] %vm2238, %v2371
      %2404 = vst.msk [vmem:[#allocation4 + $0xe0] sm:$0xff] %vm2238, %v2372
      %2405 = vst.msk [vmem:[#allocation4 + $0xe8] sm:$0xff] %vm2238, %v2373
      %2406 = vst.msk [vmem:[#allocation4 + $0xf0] sm:$0xff] %vm2238, %v2374
      %2407 = vst.msk [vmem:[#allocation4 + $0xf8] sm:$0xff] %vm2238, %v2375
      %v2408 = vld [vmem:[#allocation3 + $0x8] sm:$0xff]
      %v2409 = vld [vmem:[#allocation3 + $0x10] sm:$0xff]
      %v2410 = vld [vmem:[#allocation3 + $0x28] sm:$0xff]
      %v2411 = vld [vmem:[#allocation3 + $0x30] sm:$0xff]
      %v2412 = vld [vmem:[#allocation3 + $0x48] sm:$0xff]
      %v2413 = vld [vmem:[#allocation3 + $0x50] sm:$0xff]
      %v2414 = vld [vmem:[#allocation3 + $0x68] sm:$0xff]
      %v2415 = vld [vmem:[#allocation3 + $0x70] sm:$0xff]
      %v2416 = vld [vmem:[#allocation3 + $0x88] sm:$0xff]
      %v2417 = vld [vmem:[#allocation3 + $0x90] sm:$0xff]
      %v2418 = vld [vmem:[#allocation3 + $0xa8] sm:$0xff]
      %v2419 = vld [vmem:[#allocation3 + $0xb0] sm:$0xff]
      %v2420 = vld [vmem:[#allocation3 + $0xc8] sm:$0xff]
      %v2421 = vld [vmem:[#allocation3 + $0xd0] sm:$0xff]
      %v2422 = vld [vmem:[#allocation3 + $0xe8] sm:$0xff]
      %v2423 = vld [vmem:[#allocation3 + $0xf0] sm:$0xff]
      %v2424 = vld [vmem:[#allocation3 + $0x108] sm:$0xff]
      %v2425 = vld [vmem:[#allocation3 + $0x110] sm:$0xff]
      %v2426 = vld [vmem:[#allocation3 + $0x128] sm:$0xff]
      %v2427 = vld [vmem:[#allocation3 + $0x130] sm:$0xff]
      %v2428 = vld [vmem:[#allocation3 + $0x148] sm:$0xff]
      %v2429 = vld [vmem:[#allocation3 + $0x150] sm:$0xff]
      %v2430 = vld [vmem:[#allocation3 + $0x168] sm:$0xff]
      %v2431 = vld [vmem:[#allocation3 + $0x170] sm:$0xff]
      %v2432 = vld [vmem:[#allocation3 + $0x188] sm:$0xff]
      %v2433 = vld [vmem:[#allocation3 + $0x190] sm:$0xff]
      %v2434 = vld [vmem:[#allocation3 + $0x1a8] sm:$0xff]
      %v2435 = vld [vmem:[#allocation3 + $0x1b0] sm:$0xff]
      %v2436 = vld [vmem:[#allocation3 + $0x1c8] sm:$0xff]
      %v2437 = vld [vmem:[#allocation3 + $0x1d0] sm:$0xff]
      %v2438 = vld [vmem:[#allocation3 + $0x1e8] sm:$0xff]
      %v2439 = vld [vmem:[#allocation3 + $0x1f0] sm:$0xff]
      %2472 = vrot.lane.b32.xlu0 %v2408, 8
      %v2473 = vpop.permute.xlu0 %2472
      %2474 = vrot.lane.b32.xlu0 %v2409, 8
      %v2475 = vpop.permute.xlu0 %2474
      %2476 = vrot.lane.b32.xlu0 %v2410, 8
      %v2477 = vpop.permute.xlu0 %2476
      %2478 = vrot.lane.b32.xlu0 %v2411, 8
      %v2479 = vpop.permute.xlu0 %2478
      %2480 = vrot.lane.b32.xlu0 %v2412, 8
      %v2481 = vpop.permute.xlu0 %2480
      %2482 = vrot.lane.b32.xlu0 %v2413, 8
      %v2483 = vpop.permute.xlu0 %2482
      %2484 = vrot.lane.b32.xlu0 %v2414, 8
      %v2485 = vpop.permute.xlu0 %2484
      %2486 = vrot.lane.b32.xlu0 %v2415, 8
      %v2487 = vpop.permute.xlu0 %2486
      %2488 = vrot.lane.b32.xlu0 %v2416, 8
      %v2489 = vpop.permute.xlu0 %2488
      %2490 = vrot.lane.b32.xlu0 %v2417, 8
      %v2491 = vpop.permute.xlu0 %2490
      %2492 = vrot.lane.b32.xlu0 %v2418, 8
      %v2493 = vpop.permute.xlu0 %2492
      %2494 = vrot.lane.b32.xlu0 %v2419, 8
      %v2495 = vpop.permute.xlu0 %2494
      %2496 = vrot.lane.b32.xlu0 %v2420, 8
      %v2497 = vpop.permute.xlu0 %2496
      %2498 = vrot.lane.b32.xlu0 %v2421, 8
      %v2499 = vpop.permute.xlu0 %2498
      %2500 = vrot.lane.b32.xlu0 %v2422, 8
      %v2501 = vpop.permute.xlu0 %2500
      %2502 = vrot.lane.b32.xlu0 %v2423, 8
      %v2503 = vpop.permute.xlu0 %2502
      %2504 = vrot.lane.b32.xlu0 %v2424, 8
      %v2505 = vpop.permute.xlu0 %2504
      %2506 = vrot.lane.b32.xlu0 %v2425, 8
      %v2507 = vpop.permute.xlu0 %2506
      %2508 = vrot.lane.b32.xlu0 %v2426, 8
      %v2509 = vpop.permute.xlu0 %2508
      %2510 = vrot.lane.b32.xlu0 %v2427, 8
      %v2511 = vpop.permute.xlu0 %2510
      %2512 = vrot.lane.b32.xlu0 %v2428, 8
      %v2513 = vpop.permute.xlu0 %2512
      %2514 = vrot.lane.b32.xlu0 %v2429, 8
      %v2515 = vpop.permute.xlu0 %2514
      %2516 = vrot.lane.b32.xlu0 %v2430, 8
      %v2517 = vpop.permute.xlu0 %2516
      %2518 = vrot.lane.b32.xlu0 %v2431, 8
      %v2519 = vpop.permute.xlu0 %2518
      %2520 = vrot.lane.b32.xlu0 %v2432, 8
      %v2521 = vpop.permute.xlu0 %2520
      %2522 = vrot.lane.b32.xlu0 %v2433, 8
      %v2523 = vpop.permute.xlu0 %2522
      %2524 = vrot.lane.b32.xlu0 %v2434, 8
      %v2525 = vpop.permute.xlu0 %2524
      %2526 = vrot.lane.b32.xlu0 %v2435, 8
      %v2527 = vpop.permute.xlu0 %2526
      %2528 = vrot.lane.b32.xlu0 %v2436, 8
      %v2529 = vpop.permute.xlu0 %2528
      %2530 = vrot.lane.b32.xlu0 %v2437, 8
      %v2531 = vpop.permute.xlu0 %2530
      %2532 = vrot.lane.b32.xlu0 %v2438, 8
      %v2533 = vpop.permute.xlu0 %2532
      %2534 = vrot.lane.b32.xlu0 %v2439, 8
      %v2535 = vpop.permute.xlu0 %2534
      %vm2568 = vcmask 130112
      %2569 = vst.msk [vmem:[#allocation4] sm:$0xff] %vm2568, %v2473
      %2570 = vst.msk [vmem:[#allocation4 + $0x8] sm:$0xff] %vm2568, %v2475
      %2571 = vst.msk [vmem:[#allocation4 + $0x10] sm:$0xff] %vm2568, %v2477
      %2572 = vst.msk [vmem:[#allocation4 + $0x18] sm:$0xff] %vm2568, %v2479
      %2573 = vst.msk [vmem:[#allocation4 + $0x20] sm:$0xff] %vm2568, %v2481
      %2574 = vst.msk [vmem:[#allocation4 + $0x28] sm:$0xff] %vm2568, %v2483
      %2575 = vst.msk [vmem:[#allocation4 + $0x30] sm:$0xff] %vm2568, %v2485
      %2576 = vst.msk [vmem:[#allocation4 + $0x38] sm:$0xff] %vm2568, %v2487
      %2577 = vst.msk [vmem:[#allocation4 + $0x40] sm:$0xff] %vm2568, %v2489
      %2578 = vst.msk [vmem:[#allocation4 + $0x48] sm:$0xff] %vm2568, %v2491
      %2579 = vst.msk [vmem:[#allocation4 + $0x50] sm:$0xff] %vm2568, %v2493
      %2580 = vst.msk [vmem:[#allocation4 + $0x58] sm:$0xff] %vm2568, %v2495
      %2581 = vst.msk [vmem:[#allocation4 + $0x60] sm:$0xff] %vm2568, %v2497
      %2582 = vst.msk [vmem:[#allocation4 + $0x68] sm:$0xff] %vm2568, %v2499
      %2583 = vst.msk [vmem:[#allocation4 + $0x70] sm:$0xff] %vm2568, %v2501
      %2584 = vst.msk [vmem:[#allocation4 + $0x78] sm:$0xff] %vm2568, %v2503
      %2585 = vst.msk [vmem:[#allocation4 + $0x80] sm:$0xff] %vm2568, %v2505
      %2586 = vst.msk [vmem:[#allocation4 + $0x88] sm:$0xff] %vm2568, %v2507
      %2587 = vst.msk [vmem:[#allocation4 + $0x90] sm:$0xff] %vm2568, %v2509
      %2588 = vst.msk [vmem:[#allocation4 + $0x98] sm:$0xff] %vm2568, %v2511
      %2589 = vst.msk [vmem:[#allocation4 + $0xa0] sm:$0xff] %vm2568, %v2513
      %2590 = vst.msk [vmem:[#allocation4 + $0xa8] sm:$0xff] %vm2568, %v2515
      %2591 = vst.msk [vmem:[#allocation4 + $0xb0] sm:$0xff] %vm2568, %v2517
      %2592 = vst.msk [vmem:[#allocation4 + $0xb8] sm:$0xff] %vm2568, %v2519
      %2593 = vst.msk [vmem:[#allocation4 + $0xc0] sm:$0xff] %vm2568, %v2521
      %2594 = vst.msk [vmem:[#allocation4 + $0xc8] sm:$0xff] %vm2568, %v2523
      %2595 = vst.msk [vmem:[#allocation4 + $0xd0] sm:$0xff] %vm2568, %v2525
      %2596 = vst.msk [vmem:[#allocation4 + $0xd8] sm:$0xff] %vm2568, %v2527
      %2597 = vst.msk [vmem:[#allocation4 + $0xe0] sm:$0xff] %vm2568, %v2529
      %2598 = vst.msk [vmem:[#allocation4 + $0xe8] sm:$0xff] %vm2568, %v2531
      %2599 = vst.msk [vmem:[#allocation4 + $0xf0] sm:$0xff] %vm2568, %v2533
      %2600 = vst.msk [vmem:[#allocation4 + $0xf8] sm:$0xff] %vm2568, %v2535
      %v2601 = vld [vmem:[#allocation3 + $0x9] sm:$0xff]
      %v2602 = vld [vmem:[#allocation3 + $0x11] sm:$0xff]
      %v2603 = vld [vmem:[#allocation3 + $0x29] sm:$0xff]
      %v2604 = vld [vmem:[#allocation3 + $0x31] sm:$0xff]
      %v2605 = vld [vmem:[#allocation3 + $0x49] sm:$0xff]
      %v2606 = vld [vmem:[#allocation3 + $0x51] sm:$0xff]
      %v2607 = vld [vmem:[#allocation3 + $0x69] sm:$0xff]
      %v2608 = vld [vmem:[#allocation3 + $0x71] sm:$0xff]
      %v2609 = vld [vmem:[#allocation3 + $0x89] sm:$0xff]
      %v2610 = vld [vmem:[#allocation3 + $0x91] sm:$0xff]
      %v2611 = vld [vmem:[#allocation3 + $0xa9] sm:$0xff]
      %v2612 = vld [vmem:[#allocation3 + $0xb1] sm:$0xff]
      %v2613 = vld [vmem:[#allocation3 + $0xc9] sm:$0xff]
      %v2614 = vld [vmem:[#allocation3 + $0xd1] sm:$0xff]
      %v2615 = vld [vmem:[#allocation3 + $0xe9] sm:$0xff]
      %v2616 = vld [vmem:[#allocation3 + $0xf1] sm:$0xff]
      %v2617 = vld [vmem:[#allocation3 + $0x109] sm:$0xff]
      %v2618 = vld [vmem:[#allocation3 + $0x111] sm:$0xff]
      %v2619 = vld [vmem:[#allocation3 + $0x129] sm:$0xff]
      %v2620 = vld [vmem:[#allocation3 + $0x131] sm:$0xff]
      %v2621 = vld [vmem:[#allocation3 + $0x149] sm:$0xff]
      %v2622 = vld [vmem:[#allocation3 + $0x151] sm:$0xff]
      %v2623 = vld [vmem:[#allocation3 + $0x169] sm:$0xff]
      %v2624 = vld [vmem:[#allocation3 + $0x171] sm:$0xff]
      %v2625 = vld [vmem:[#allocation3 + $0x189] sm:$0xff]
      %v2626 = vld [vmem:[#allocation3 + $0x191] sm:$0xff]
      %v2627 = vld [vmem:[#allocation3 + $0x1a9] sm:$0xff]
      %v2628 = vld [vmem:[#allocation3 + $0x1b1] sm:$0xff]
      %v2629 = vld [vmem:[#allocation3 + $0x1c9] sm:$0xff]
      %v2630 = vld [vmem:[#allocation3 + $0x1d1] sm:$0xff]
      %v2631 = vld [vmem:[#allocation3 + $0x1e9] sm:$0xff]
      %v2632 = vld [vmem:[#allocation3 + $0x1f1] sm:$0xff]
      %2665 = vrot.lane.b32.xlu0 %v2601, 16
      %v2666 = vpop.permute.xlu0 %2665
      %2667 = vrot.lane.b32.xlu0 %v2602, 16
      %v2668 = vpop.permute.xlu0 %2667
      %2669 = vrot.lane.b32.xlu0 %v2603, 16
      %v2670 = vpop.permute.xlu0 %2669
      %2671 = vrot.lane.b32.xlu0 %v2604, 16
      %v2672 = vpop.permute.xlu0 %2671
      %2673 = vrot.lane.b32.xlu0 %v2605, 16
      %v2674 = vpop.permute.xlu0 %2673
      %2675 = vrot.lane.b32.xlu0 %v2606, 16
      %v2676 = vpop.permute.xlu0 %2675
      %2677 = vrot.lane.b32.xlu0 %v2607, 16
      %v2678 = vpop.permute.xlu0 %2677
      %2679 = vrot.lane.b32.xlu0 %v2608, 16
      %v2680 = vpop.permute.xlu0 %2679
      %2681 = vrot.lane.b32.xlu0 %v2609, 16
      %v2682 = vpop.permute.xlu0 %2681
      %2683 = vrot.lane.b32.xlu0 %v2610, 16
      %v2684 = vpop.permute.xlu0 %2683
      %2685 = vrot.lane.b32.xlu0 %v2611, 16
      %v2686 = vpop.permute.xlu0 %2685
      %2687 = vrot.lane.b32.xlu0 %v2612, 16
      %v2688 = vpop.permute.xlu0 %2687
      %2689 = vrot.lane.b32.xlu0 %v2613, 16
      %v2690 = vpop.permute.xlu0 %2689
      %2691 = vrot.lane.b32.xlu0 %v2614, 16
      %v2692 = vpop.permute.xlu0 %2691
      %2693 = vrot.lane.b32.xlu0 %v2615, 16
      %v2694 = vpop.permute.xlu0 %2693
      %2695 = vrot.lane.b32.xlu0 %v2616, 16
      %v2696 = vpop.permute.xlu0 %2695
      %2697 = vrot.lane.b32.xlu0 %v2617, 16
      %v2698 = vpop.permute.xlu0 %2697
      %2699 = vrot.lane.b32.xlu0 %v2618, 16
      %v2700 = vpop.permute.xlu0 %2699
      %2701 = vrot.lane.b32.xlu0 %v2619, 16
      %v2702 = vpop.permute.xlu0 %2701
      %2703 = vrot.lane.b32.xlu0 %v2620, 16
      %v2704 = vpop.permute.xlu0 %2703
      %2705 = vrot.lane.b32.xlu0 %v2621, 16
      %v2706 = vpop.permute.xlu0 %2705
      %2707 = vrot.lane.b32.xlu0 %v2622, 16
      %v2708 = vpop.permute.xlu0 %2707
      %2709 = vrot.lane.b32.xlu0 %v2623, 16
      %v2710 = vpop.permute.xlu0 %2709
      %2711 = vrot.lane.b32.xlu0 %v2624, 16
      %v2712 = vpop.permute.xlu0 %2711
      %2713 = vrot.lane.b32.xlu0 %v2625, 16
      %v2714 = vpop.permute.xlu0 %2713
      %2715 = vrot.lane.b32.xlu0 %v2626, 16
      %v2716 = vpop.permute.xlu0 %2715
      %2717 = vrot.lane.b32.xlu0 %v2627, 16
      %v2718 = vpop.permute.xlu0 %2717
      %2719 = vrot.lane.b32.xlu0 %v2628, 16
      %v2720 = vpop.permute.xlu0 %2719
      %2721 = vrot.lane.b32.xlu0 %v2629, 16
      %v2722 = vpop.permute.xlu0 %2721
      %2723 = vrot.lane.b32.xlu0 %v2630, 16
      %v2724 = vpop.permute.xlu0 %2723
      %2725 = vrot.lane.b32.xlu0 %v2631, 16
      %v2726 = vpop.permute.xlu0 %2725
      %2727 = vrot.lane.b32.xlu0 %v2632, 16
      %v2728 = vpop.permute.xlu0 %2727
      %vm2761 = vcmask 195712
      %2762 = vst.msk [vmem:[#allocation4] sm:$0xff] %vm2761, %v2666
      %2763 = vst.msk [vmem:[#allocation4 + $0x8] sm:$0xff] %vm2761, %v2668
      %2764 = vst.msk [vmem:[#allocation4 + $0x10] sm:$0xff] %vm2761, %v2670
      %2765 = vst.msk [vmem:[#allocation4 + $0x18] sm:$0xff] %vm2761, %v2672
      %2766 = vst.msk [vmem:[#allocation4 + $0x20] sm:$0xff] %vm2761, %v2674
      %2767 = vst.msk [vmem:[#allocation4 + $0x28] sm:$0xff] %vm2761, %v2676
      %2768 = vst.msk [vmem:[#allocation4 + $0x30] sm:$0xff] %vm2761, %v2678
      %2769 = vst.msk [vmem:[#allocation4 + $0x38] sm:$0xff] %vm2761, %v2680
      %2770 = vst.msk [vmem:[#allocation4 + $0x40] sm:$0xff] %vm2761, %v2682
      %2771 = vst.msk [vmem:[#allocation4 + $0x48] sm:$0xff] %vm2761, %v2684
      %2772 = vst.msk [vmem:[#allocation4 + $0x50] sm:$0xff] %vm2761, %v2686
      %2773 = vst.msk [vmem:[#allocation4 + $0x58] sm:$0xff] %vm2761, %v2688
      %2774 = vst.msk [vmem:[#allocation4 + $0x60] sm:$0xff] %vm2761, %v2690
      %2775 = vst.msk [vmem:[#allocation4 + $0x68] sm:$0xff] %vm2761, %v2692
      %2776 = vst.msk [vmem:[#allocation4 + $0x70] sm:$0xff] %vm2761, %v2694
      %2777 = vst.msk [vmem:[#allocation4 + $0x78] sm:$0xff] %vm2761, %v2696
      %2778 = vst.msk [vmem:[#allocation4 + $0x80] sm:$0xff] %vm2761, %v2698
      %2779 = vst.msk [vmem:[#allocation4 + $0x88] sm:$0xff] %vm2761, %v2700
      %2780 = vst.msk [vmem:[#allocation4 + $0x90] sm:$0xff] %vm2761, %v2702
      %2781 = vst.msk [vmem:[#allocation4 + $0x98] sm:$0xff] %vm2761, %v2704
      %2782 = vst.msk [vmem:[#allocation4 + $0xa0] sm:$0xff] %vm2761, %v2706
      %2783 = vst.msk [vmem:[#allocation4 + $0xa8] sm:$0xff] %vm2761, %v2708
      %2784 = vst.msk [vmem:[#allocation4 + $0xb0] sm:$0xff] %vm2761, %v2710
      %2785 = vst.msk [vmem:[#allocation4 + $0xb8] sm:$0xff] %vm2761, %v2712
      %2786 = vst.msk [vmem:[#allocation4 + $0xc0] sm:$0xff] %vm2761, %v2714
      %2787 = vst.msk [vmem:[#allocation4 + $0xc8] sm:$0xff] %vm2761, %v2716
      %2788 = vst.msk [vmem:[#allocation4 + $0xd0] sm:$0xff] %vm2761, %v2718
      %2789 = vst.msk [vmem:[#allocation4 + $0xd8] sm:$0xff] %vm2761, %v2720
      %2790 = vst.msk [vmem:[#allocation4 + $0xe0] sm:$0xff] %vm2761, %v2722
      %2791 = vst.msk [vmem:[#allocation4 + $0xe8] sm:$0xff] %vm2761, %v2724
      %2792 = vst.msk [vmem:[#allocation4 + $0xf0] sm:$0xff] %vm2761, %v2726
      %2793 = vst.msk [vmem:[#allocation4 + $0xf8] sm:$0xff] %vm2761, %v2728
      %v2794 = vld [vmem:[%s2311 + $0x7] sm:$0xff]
      %v2795 = vld [vmem:[%s2311 + $0xf] sm:$0xff]
      %v2796 = vld [vmem:[%s2311 + $0x27] sm:$0xff]
      %v2797 = vld [vmem:[%s2311 + $0x2f] sm:$0xff]
      %v2798 = vld [vmem:[%s2311 + $0x47] sm:$0xff]
      %v2799 = vld [vmem:[%s2311 + $0x4f] sm:$0xff]
      %v2800 = vld [vmem:[%s2311 + $0x67] sm:$0xff]
      %v2801 = vld [vmem:[%s2311 + $0x6f] sm:$0xff]
      %v2802 = vld [vmem:[%s2311 + $0x87] sm:$0xff]
      %v2803 = vld [vmem:[%s2311 + $0x8f] sm:$0xff]
      %v2804 = vld [vmem:[%s2311 + $0xa7] sm:$0xff]
      %v2805 = vld [vmem:[%s2311 + $0xaf] sm:$0xff]
      %v2806 = vld [vmem:[%s2311 + $0xc7] sm:$0xff]
      %v2807 = vld [vmem:[%s2311 + $0xcf] sm:$0xff]
      %v2808 = vld [vmem:[%s2311 + $0xe7] sm:$0xff]
      %v2809 = vld [vmem:[%s2311 + $0xef] sm:$0xff]
      %v2810 = vld [vmem:[%s2311 + $0x107] sm:$0xff]
      %v2811 = vld [vmem:[%s2311 + $0x10f] sm:$0xff]
      %v2812 = vld [vmem:[%s2311 + $0x127] sm:$0xff]
      %v2813 = vld [vmem:[%s2311 + $0x12f] sm:$0xff]
      %v2814 = vld [vmem:[%s2311 + $0x147] sm:$0xff]
      %v2815 = vld [vmem:[%s2311 + $0x14f] sm:$0xff]
      %v2816 = vld [vmem:[%s2311 + $0x167] sm:$0xff]
      %v2817 = vld [vmem:[%s2311 + $0x16f] sm:$0xff]
      %v2818 = vld [vmem:[%s2311 + $0x187] sm:$0xff]
      %v2819 = vld [vmem:[%s2311 + $0x18f] sm:$0xff]
      %v2820 = vld [vmem:[%s2311 + $0x1a7] sm:$0xff]
      %v2821 = vld [vmem:[%s2311 + $0x1af] sm:$0xff]
      %v2822 = vld [vmem:[%s2311 + $0x1c7] sm:$0xff]
      %v2823 = vld [vmem:[%s2311 + $0x1cf] sm:$0xff]
      %v2824 = vld [vmem:[%s2311 + $0x1e7] sm:$0xff]
      %v2825 = vld [vmem:[%s2311 + $0x1ef] sm:$0xff]
      %2858 = vrot.lane.b32.xlu0 %v2794, 24
      %v2859 = vpop.permute.xlu0 %2858
      %2860 = vrot.lane.b32.xlu0 %v2795, 24
      %v2861 = vpop.permute.xlu0 %2860
      %2862 = vrot.lane.b32.xlu0 %v2796, 24
      %v2863 = vpop.permute.xlu0 %2862
      %2864 = vrot.lane.b32.xlu0 %v2797, 24
      %v2865 = vpop.permute.xlu0 %2864
      %2866 = vrot.lane.b32.xlu0 %v2798, 24
      %v2867 = vpop.permute.xlu0 %2866
      %2868 = vrot.lane.b32.xlu0 %v2799, 24
      %v2869 = vpop.permute.xlu0 %2868
      %2870 = vrot.lane.b32.xlu0 %v2800, 24
      %v2871 = vpop.permute.xlu0 %2870
      %2872 = vrot.lane.b32.xlu0 %v2801, 24
      %v2873 = vpop.permute.xlu0 %2872
      %2874 = vrot.lane.b32.xlu0 %v2802, 24
      %v2875 = vpop.permute.xlu0 %2874
      %2876 = vrot.lane.b32.xlu0 %v2803, 24
      %v2877 = vpop.permute.xlu0 %2876
      %2878 = vrot.lane.b32.xlu0 %v2804, 24
      %v2879 = vpop.permute.xlu0 %2878
      %2880 = vrot.lane.b32.xlu0 %v2805, 24
      %v2881 = vpop.permute.xlu0 %2880
      %2882 = vrot.lane.b32.xlu0 %v2806, 24
      %v2883 = vpop.permute.xlu0 %2882
      %2884 = vrot.lane.b32.xlu0 %v2807, 24
      %v2885 = vpop.permute.xlu0 %2884
      %2886 = vrot.lane.b32.xlu0 %v2808, 24
      %v2887 = vpop.permute.xlu0 %2886
      %2888 = vrot.lane.b32.xlu0 %v2809, 24
      %v2889 = vpop.permute.xlu0 %2888
      %2890 = vrot.lane.b32.xlu0 %v2810, 24
      %v2891 = vpop.permute.xlu0 %2890
      %2892 = vrot.lane.b32.xlu0 %v2811, 24
      %v2893 = vpop.permute.xlu0 %2892
      %2894 = vrot.lane.b32.xlu0 %v2812, 24
      %v2895 = vpop.permute.xlu0 %2894
      %2896 = vrot.lane.b32.xlu0 %v2813, 24
      %v2897 = vpop.permute.xlu0 %2896
      %2898 = vrot.lane.b32.xlu0 %v2814, 24
      %v2899 = vpop.permute.xlu0 %2898
      %2900 = vrot.lane.b32.xlu0 %v2815, 24
      %v2901 = vpop.permute.xlu0 %2900
      %2902 = vrot.lane.b32.xlu0 %v2816, 24
      %v2903 = vpop.permute.xlu0 %2902
      %2904 = vrot.lane.b32.xlu0 %v2817, 24
      %v2905 = vpop.permute.xlu0 %2904
      %2906 = vrot.lane.b32.xlu0 %v2818, 24
      %v2907 = vpop.permute.xlu0 %2906
      %2908 = vrot.lane.b32.xlu0 %v2819, 24
      %v2909 = vpop.permute.xlu0 %2908
      %2910 = vrot.lane.b32.xlu0 %v2820, 24
      %v2911 = vpop.permute.xlu0 %2910
      %2912 = vrot.lane.b32.xlu0 %v2821, 24
      %v2913 = vpop.permute.xlu0 %2912
      %2914 = vrot.lane.b32.xlu0 %v2822, 24
      %v2915 = vpop.permute.xlu0 %2914
      %2916 = vrot.lane.b32.xlu0 %v2823, 24
      %v2917 = vpop.permute.xlu0 %2916
      %2918 = vrot.lane.b32.xlu0 %v2824, 24
      %v2919 = vpop.permute.xlu0 %2918
      %2920 = vrot.lane.b32.xlu0 %v2825, 24
      %v2921 = vpop.permute.xlu0 %2920
      %vm2954 = vcmask 261312
      %2955 = vst.msk [vmem:[#allocation4] sm:$0xff] %vm2954, %v2859
      %2956 = vst.msk [vmem:[#allocation4 + $0x8] sm:$0xff] %vm2954, %v2861
      %2957 = vst.msk [vmem:[#allocation4 + $0x10] sm:$0xff] %vm2954, %v2863
      %2958 = vst.msk [vmem:[#allocation4 + $0x18] sm:$0xff] %vm2954, %v2865
      %2959 = vst.msk [vmem:[#allocation4 + $0x20] sm:$0xff] %vm2954, %v2867
      %2960 = vst.msk [vmem:[#allocation4 + $0x28] sm:$0xff] %vm2954, %v2869
      %2961 = vst.msk [vmem:[#allocation4 + $0x30] sm:$0xff] %vm2954, %v2871
      %2962 = vst.msk [vmem:[#allocation4 + $0x38] sm:$0xff] %vm2954, %v2873
      %2963 = vst.msk [vmem:[#allocation4 + $0x40] sm:$0xff] %vm2954, %v2875
      %2964 = vst.msk [vmem:[#allocation4 + $0x48] sm:$0xff] %vm2954, %v2877
      %2965 = vst.msk [vmem:[#allocation4 + $0x50] sm:$0xff] %vm2954, %v2879
      %2966 = vst.msk [vmem:[#allocation4 + $0x58] sm:$0xff] %vm2954, %v2881
      %2967 = vst.msk [vmem:[#allocation4 + $0x60] sm:$0xff] %vm2954, %v2883
      %2968 = vst.msk [vmem:[#allocation4 + $0x68] sm:$0xff] %vm2954, %v2885
      %2969 = vst.msk [vmem:[#allocation4 + $0x70] sm:$0xff] %vm2954, %v2887
      %2970 = vst.msk [vmem:[#allocation4 + $0x78] sm:$0xff] %vm2954, %v2889
      %2971 = vst.msk [vmem:[#allocation4 + $0x80] sm:$0xff] %vm2954, %v2891
      %2972 = vst.msk [vmem:[#allocation4 + $0x88] sm:$0xff] %vm2954, %v2893
      %2973 = vst.msk [vmem:[#allocation4 + $0x90] sm:$0xff] %vm2954, %v2895
      %2974 = vst.msk [vmem:[#allocation4 + $0x98] sm:$0xff] %vm2954, %v2897
      %2975 = vst.msk [vmem:[#allocation4 + $0xa0] sm:$0xff] %vm2954, %v2899
      %2976 = vst.msk [vmem:[#allocation4 + $0xa8] sm:$0xff] %vm2954, %v2901
      %2977 = vst.msk [vmem:[#allocation4 + $0xb0] sm:$0xff] %vm2954, %v2903
      %2978 = vst.msk [vmem:[#allocation4 + $0xb8] sm:$0xff] %vm2954, %v2905
      %2979 = vst.msk [vmem:[#allocation4 + $0xc0] sm:$0xff] %vm2954, %v2907
      %2980 = vst.msk [vmem:[#allocation4 + $0xc8] sm:$0xff] %vm2954, %v2909
      %2981 = vst.msk [vmem:[#allocation4 + $0xd0] sm:$0xff] %vm2954, %v2911
      %2982 = vst.msk [vmem:[#allocation4 + $0xd8] sm:$0xff] %vm2954, %v2913
      %2983 = vst.msk [vmem:[#allocation4 + $0xe0] sm:$0xff] %vm2954, %v2915
      %2984 = vst.msk [vmem:[#allocation4 + $0xe8] sm:$0xff] %vm2954, %v2917
      %2985 = vst.msk [vmem:[#allocation4 + $0xf0] sm:$0xff] %vm2954, %v2919
      %2986 = vst.msk [vmem:[#allocation4 + $0xf8] sm:$0xff] %vm2954, %v2921
      %v2987 = vld [vmem:[%s2311 + $0x8] sm:$0xff]
      %v2988 = vld [vmem:[%s2311 + $0x10] sm:$0xff]
      %v2989 = vld [vmem:[%s2311 + $0x28] sm:$0xff]
      %v2990 = vld [vmem:[%s2311 + $0x30] sm:$0xff]
      %v2991 = vld [vmem:[%s2311 + $0x48] sm:$0xff]
      %v2992 = vld [vmem:[%s2311 + $0x50] sm:$0xff]
      %v2993 = vld [vmem:[%s2311 + $0x68] sm:$0xff]
      %v2994 = vld [vmem:[%s2311 + $0x70] sm:$0xff]
      %v2995 = vld [vmem:[%s2311 + $0x88] sm:$0xff]
      %v2996 = vld [vmem:[%s2311 + $0x90] sm:$0xff]
      %v2997 = vld [vmem:[%s2311 + $0xa8] sm:$0xff]
      %v2998 = vld [vmem:[%s2311 + $0xb0] sm:$0xff]
      %v2999 = vld [vmem:[%s2311 + $0xc8] sm:$0xff]
      %v3000 = vld [vmem:[%s2311 + $0xd0] sm:$0xff]
      %v3001 = vld [vmem:[%s2311 + $0xe8] sm:$0xff]
      %v3002 = vld [vmem:[%s2311 + $0xf0] sm:$0xff]
      %v3003 = vld [vmem:[%s2311 + $0x108] sm:$0xff]
      %v3004 = vld [vmem:[%s2311 + $0x110] sm:$0xff]
      %v3005 = vld [vmem:[%s2311 + $0x128] sm:$0xff]
      %v3006 = vld [vmem:[%s2311 + $0x130] sm:$0xff]
      %v3007 = vld [vmem:[%s2311 + $0x148] sm:$0xff]
      %v3008 = vld [vmem:[%s2311 + $0x150] sm:$0xff]
      %v3009 = vld [vmem:[%s2311 + $0x168] sm:$0xff]
      %v3010 = vld [vmem:[%s2311 + $0x170] sm:$0xff]
      %v3011 = vld [vmem:[%s2311 + $0x188] sm:$0xff]
      %v3012 = vld [vmem:[%s2311 + $0x190] sm:$0xff]
      %v3013 = vld [vmem:[%s2311 + $0x1a8] sm:$0xff]
      %v3014 = vld [vmem:[%s2311 + $0x1b0] sm:$0xff]
      %v3015 = vld [vmem:[%s2311 + $0x1c8] sm:$0xff]
      %v3016 = vld [vmem:[%s2311 + $0x1d0] sm:$0xff]
      %v3017 = vld [vmem:[%s2311 + $0x1e8] sm:$0xff]
      %v3018 = vld [vmem:[%s2311 + $0x1f0] sm:$0xff]
      %3051 = vrot.lane.b32.xlu0 %v2987, 32
      %v3052 = vpop.permute.xlu0 %3051
      %3053 = vrot.lane.b32.xlu0 %v2988, 32
      %v3054 = vpop.permute.xlu0 %3053
      %3055 = vrot.lane.b32.xlu0 %v2989, 32
      %v3056 = vpop.permute.xlu0 %3055
      %3057 = vrot.lane.b32.xlu0 %v2990, 32
      %v3058 = vpop.permute.xlu0 %3057
      %3059 = vrot.lane.b32.xlu0 %v2991, 32
      %v3060 = vpop.permute.xlu0 %3059
      %3061 = vrot.lane.b32.xlu0 %v2992, 32
      %v3062 = vpop.permute.xlu0 %3061
      %3063 = vrot.lane.b32.xlu0 %v2993, 32
      %v3064 = vpop.permute.xlu0 %3063
      %3065 = vrot.lane.b32.xlu0 %v2994, 32
      %v3066 = vpop.permute.xlu0 %3065
      %3067 = vrot.lane.b32.xlu0 %v2995, 32
      %v3068 = vpop.permute.xlu0 %3067
      %3069 = vrot.lane.b32.xlu0 %v2996, 32
      %v3070 = vpop.permute.xlu0 %3069
      %3071 = vrot.lane.b32.xlu0 %v2997, 32
      %v3072 = vpop.permute.xlu0 %3071
      %3073 = vrot.lane.b32.xlu0 %v2998, 32
      %v3074 = vpop.permute.xlu0 %3073
      %3075 = vrot.lane.b32.xlu0 %v2999, 32
      %v3076 = vpop.permute.xlu0 %3075
      %3077 = vrot.lane.b32.xlu0 %v3000, 32
      %v3078 = vpop.permute.xlu0 %3077
      %3079 = vrot.lane.b32.xlu0 %v3001, 32
      %v3080 = vpop.permute.xlu0 %3079
      %3081 = vrot.lane.b32.xlu0 %v3002, 32
      %v3082 = vpop.permute.xlu0 %3081
      %3083 = vrot.lane.b32.xlu0 %v3003, 32
      %v3084 = vpop.permute.xlu0 %3083
      %3085 = vrot.lane.b32.xlu0 %v3004, 32
      %v3086 = vpop.permute.xlu0 %3085
      %3087 = vrot.lane.b32.xlu0 %v3005, 32
      %v3088 = vpop.permute.xlu0 %3087
      %3089 = vrot.lane.b32.xlu0 %v3006, 32
      %v3090 = vpop.permute.xlu0 %3089
      %3091 = vrot.lane.b32.xlu0 %v3007, 32
      %v3092 = vpop.permute.xlu0 %3091
      %3093 = vrot.lane.b32.xlu0 %v3008, 32
      %v3094 = vpop.permute.xlu0 %3093
      %3095 = vrot.lane.b32.xlu0 %v3009, 32
      %v3096 = vpop.permute.xlu0 %3095
      %3097 = vrot.lane.b32.xlu0 %v3010, 32
      %v3098 = vpop.permute.xlu0 %3097
      %3099 = vrot.lane.b32.xlu0 %v3011, 32
      %v3100 = vpop.permute.xlu0 %3099
      %3101 = vrot.lane.b32.xlu0 %v3012, 32
      %v3102 = vpop.permute.xlu0 %3101
      %3103 = vrot.lane.b32.xlu0 %v3013, 32
      %v3104 = vpop.permute.xlu0 %3103
      %3105 = vrot.lane.b32.xlu0 %v3014, 32
      %v3106 = vpop.permute.xlu0 %3105
      %3107 = vrot.lane.b32.xlu0 %v3015, 32
      %v3108 = vpop.permute.xlu0 %3107
      %3109 = vrot.lane.b32.xlu0 %v3016, 32
      %v3110 = vpop.permute.xlu0 %3109
      %3111 = vrot.lane.b32.xlu0 %v3017, 32
      %v3112 = vpop.permute.xlu0 %3111
      %3113 = vrot.lane.b32.xlu0 %v3018, 32
      %v3114 = vpop.permute.xlu0 %3113
      %vm3147 = vcmask 326912
      %3148 = vst.msk [vmem:[#allocation4] sm:$0xff] %vm3147, %v3052
      %3149 = vst.msk [vmem:[#allocation4 + $0x8] sm:$0xff] %vm3147, %v3054
      %3150 = vst.msk [vmem:[#allocation4 + $0x10] sm:$0xff] %vm3147, %v3056
      %3151 = vst.msk [vmem:[#allocation4 + $0x18] sm:$0xff] %vm3147, %v3058
      %3152 = vst.msk [vmem:[#allocation4 + $0x20] sm:$0xff] %vm3147, %v3060
      %3153 = vst.msk [vmem:[#allocation4 + $0x28] sm:$0xff] %vm3147, %v3062
      %3154 = vst.msk [vmem:[#allocation4 + $0x30] sm:$0xff] %vm3147, %v3064
      %3155 = vst.msk [vmem:[#allocation4 + $0x38] sm:$0xff] %vm3147, %v3066
      %3156 = vst.msk [vmem:[#allocation4 + $0x40] sm:$0xff] %vm3147, %v3068
      %3157 = vst.msk [vmem:[#allocation4 + $0x48] sm:$0xff] %vm3147, %v3070
      %3158 = vst.msk [vmem:[#allocation4 + $0x50] sm:$0xff] %vm3147, %v3072
      %3159 = vst.msk [vmem:[#allocation4 + $0x58] sm:$0xff] %vm3147, %v3074
      %3160 = vst.msk [vmem:[#allocation4 + $0x60] sm:$0xff] %vm3147, %v3076
      %3161 = vst.msk [vmem:[#allocation4 + $0x68] sm:$0xff] %vm3147, %v3078
      %3162 = vst.msk [vmem:[#allocation4 + $0x70] sm:$0xff] %vm3147, %v3080
      %3163 = vst.msk [vmem:[#allocation4 + $0x78] sm:$0xff] %vm3147, %v3082
      %3164 = vst.msk [vmem:[#allocation4 + $0x80] sm:$0xff] %vm3147, %v3084
      %3165 = vst.msk [vmem:[#allocation4 + $0x88] sm:$0xff] %vm3147, %v3086
      %3166 = vst.msk [vmem:[#allocation4 + $0x90] sm:$0xff] %vm3147, %v3088
      %3167 = vst.msk [vmem:[#allocation4 + $0x98] sm:$0xff] %vm3147, %v3090
      %3168 = vst.msk [vmem:[#allocation4 + $0xa0] sm:$0xff] %vm3147, %v3092
      %3169 = vst.msk [vmem:[#allocation4 + $0xa8] sm:$0xff] %vm3147, %v3094
      %3170 = vst.msk [vmem:[#allocation4 + $0xb0] sm:$0xff] %vm3147, %v3096
      %3171 = vst.msk [vmem:[#allocation4 + $0xb8] sm:$0xff] %vm3147, %v3098
      %3172 = vst.msk [vmem:[#allocation4 + $0xc0] sm:$0xff] %vm3147, %v3100
      %3173 = vst.msk [vmem:[#allocation4 + $0xc8] sm:$0xff] %vm3147, %v3102
      %3174 = vst.msk [vmem:[#allocation4 + $0xd0] sm:$0xff] %vm3147, %v3104
      %3175 = vst.msk [vmem:[#allocation4 + $0xd8] sm:$0xff] %vm3147, %v3106
      %3176 = vst.msk [vmem:[#allocation4 + $0xe0] sm:$0xff] %vm3147, %v3108
      %3177 = vst.msk [vmem:[#allocation4 + $0xe8] sm:$0xff] %vm3147, %v3110
      %3178 = vst.msk [vmem:[#allocation4 + $0xf0] sm:$0xff] %vm3147, %v3112
      %3179 = vst.msk [vmem:[#allocation4 + $0xf8] sm:$0xff] %vm3147, %v3114
      %v3180 = vld [vmem:[%s2311 + $0x9] sm:$0xff]
      %v3181 = vld [vmem:[%s2311 + $0x11] sm:$0xff]
      %v3182 = vld [vmem:[%s2311 + $0x29] sm:$0xff]
      %v3183 = vld [vmem:[%s2311 + $0x31] sm:$0xff]
      %v3184 = vld [vmem:[%s2311 + $0x49] sm:$0xff]
      %v3185 = vld [vmem:[%s2311 + $0x51] sm:$0xff]
      %v3186 = vld [vmem:[%s2311 + $0x69] sm:$0xff]
      %v3187 = vld [vmem:[%s2311 + $0x71] sm:$0xff]
      %v3188 = vld [vmem:[%s2311 + $0x89] sm:$0xff]
      %v3189 = vld [vmem:[%s2311 + $0x91] sm:$0xff]
      %v3190 = vld [vmem:[%s2311 + $0xa9] sm:$0xff]
      %v3191 = vld [vmem:[%s2311 + $0xb1] sm:$0xff]
      %v3192 = vld [vmem:[%s2311 + $0xc9] sm:$0xff]
      %v3193 = vld [vmem:[%s2311 + $0xd1] sm:$0xff]
      %v3194 = vld [vmem:[%s2311 + $0xe9] sm:$0xff]
      %v3195 = vld [vmem:[%s2311 + $0xf1] sm:$0xff]
      %v3196 = vld [vmem:[%s2311 + $0x109] sm:$0xff]
      %v3197 = vld [vmem:[%s2311 + $0x111] sm:$0xff]
      %v3198 = vld [vmem:[%s2311 + $0x129] sm:$0xff]
      %v3199 = vld [vmem:[%s2311 + $0x131] sm:$0xff]
      %v3200 = vld [vmem:[%s2311 + $0x149] sm:$0xff]
      %v3201 = vld [vmem:[%s2311 + $0x151] sm:$0xff]
      %v3202 = vld [vmem:[%s2311 + $0x169] sm:$0xff]
      %v3203 = vld [vmem:[%s2311 + $0x171] sm:$0xff]
      %v3204 = vld [vmem:[%s2311 + $0x189] sm:$0xff]
      %v3205 = vld [vmem:[%s2311 + $0x191] sm:$0xff]
      %v3206 = vld [vmem:[%s2311 + $0x1a9] sm:$0xff]
      %v3207 = vld [vmem:[%s2311 + $0x1b1] sm:$0xff]
      %v3208 = vld [vmem:[%s2311 + $0x1c9] sm:$0xff]
      %v3209 = vld [vmem:[%s2311 + $0x1d1] sm:$0xff]
      %v3210 = vld [vmem:[%s2311 + $0x1e9] sm:$0xff]
      %v3211 = vld [vmem:[%s2311 + $0x1f1] sm:$0xff]
      %3244 = vrot.lane.b32.xlu0 %v3180, 40
      %v3245 = vpop.permute.xlu0 %3244
      %3246 = vrot.lane.b32.xlu0 %v3181, 40
      %v3247 = vpop.permute.xlu0 %3246
      %3248 = vrot.lane.b32.xlu0 %v3182, 40
      %v3249 = vpop.permute.xlu0 %3248
      %3250 = vrot.lane.b32.xlu0 %v3183, 40
      %v3251 = vpop.permute.xlu0 %3250
      %3252 = vrot.lane.b32.xlu0 %v3184, 40
      %v3253 = vpop.permute.xlu0 %3252
      %3254 = vrot.lane.b32.xlu0 %v3185, 40
      %v3255 = vpop.permute.xlu0 %3254
      %3256 = vrot.lane.b32.xlu0 %v3186, 40
      %v3257 = vpop.permute.xlu0 %3256
      %3258 = vrot.lane.b32.xlu0 %v3187, 40
      %v3259 = vpop.permute.xlu0 %3258
      %3260 = vrot.lane.b32.xlu0 %v3188, 40
      %v3261 = vpop.permute.xlu0 %3260
      %3262 = vrot.lane.b32.xlu0 %v3189, 40
      %v3263 = vpop.permute.xlu0 %3262
      %3264 = vrot.lane.b32.xlu0 %v3190, 40
      %v3265 = vpop.permute.xlu0 %3264
      %3266 = vrot.lane.b32.xlu0 %v3191, 40
      %v3267 = vpop.permute.xlu0 %3266
      %3268 = vrot.lane.b32.xlu0 %v3192, 40
      %v3269 = vpop.permute.xlu0 %3268
      %3270 = vrot.lane.b32.xlu0 %v3193, 40
      %v3271 = vpop.permute.xlu0 %3270
      %3272 = vrot.lane.b32.xlu0 %v3194, 40
      %v3273 = vpop.permute.xlu0 %3272
      %3274 = vrot.lane.b32.xlu0 %v3195, 40
      %v3275 = vpop.permute.xlu0 %3274
      %3276 = vrot.lane.b32.xlu0 %v3196, 40
      %v3277 = vpop.permute.xlu0 %3276
      %3278 = vrot.lane.b32.xlu0 %v3197, 40
      %v3279 = vpop.permute.xlu0 %3278
      %3280 = vrot.lane.b32.xlu0 %v3198, 40
      %v3281 = vpop.permute.xlu0 %3280
      %3282 = vrot.lane.b32.xlu0 %v3199, 40
      %v3283 = vpop.permute.xlu0 %3282
      %3284 = vrot.lane.b32.xlu0 %v3200, 40
      %v3285 = vpop.permute.xlu0 %3284
      %3286 = vrot.lane.b32.xlu0 %v3201, 40
      %v3287 = vpop.permute.xlu0 %3286
      %3288 = vrot.lane.b32.xlu0 %v3202, 40
      %v3289 = vpop.permute.xlu0 %3288
      %3290 = vrot.lane.b32.xlu0 %v3203, 40
      %v3291 = vpop.permute.xlu0 %3290
      %3292 = vrot.lane.b32.xlu0 %v3204, 40
      %v3293 = vpop.permute.xlu0 %3292
      %3294 = vrot.lane.b32.xlu0 %v3205, 40
      %v3295 = vpop.permute.xlu0 %3294
      %3296 = vrot.lane.b32.xlu0 %v3206, 40
      %v3297 = vpop.permute.xlu0 %3296
      %3298 = vrot.lane.b32.xlu0 %v3207, 40
      %v3299 = vpop.permute.xlu0 %3298
      %3300 = vrot.lane.b32.xlu0 %v3208, 40
      %v3301 = vpop.permute.xlu0 %3300
      %3302 = vrot.lane.b32.xlu0 %v3209, 40
      %v3303 = vpop.permute.xlu0 %3302
      %3304 = vrot.lane.b32.xlu0 %v3210, 40
      %v3305 = vpop.permute.xlu0 %3304
      %3306 = vrot.lane.b32.xlu0 %v3211, 40
      %v3307 = vpop.permute.xlu0 %3306
      %vm3340 = vcmask 392512
      %3341 = vst.msk [vmem:[#allocation4] sm:$0xff] %vm3340, %v3245
      %3342 = vst.msk [vmem:[#allocation4 + $0x8] sm:$0xff] %vm3340, %v3247
      %3343 = vst.msk [vmem:[#allocation4 + $0x10] sm:$0xff] %vm3340, %v3249
      %3344 = vst.msk [vmem:[#allocation4 + $0x18] sm:$0xff] %vm3340, %v3251
      %3345 = vst.msk [vmem:[#allocation4 + $0x20] sm:$0xff] %vm3340, %v3253
      %3346 = vst.msk [vmem:[#allocation4 + $0x28] sm:$0xff] %vm3340, %v3255
      %3347 = vst.msk [vmem:[#allocation4 + $0x30] sm:$0xff] %vm3340, %v3257
      %3348 = vst.msk [vmem:[#allocation4 + $0x38] sm:$0xff] %vm3340, %v3259
      %3349 = vst.msk [vmem:[#allocation4 + $0x40] sm:$0xff] %vm3340, %v3261
      %3350 = vst.msk [vmem:[#allocation4 + $0x48] sm:$0xff] %vm3340, %v3263
      %3351 = vst.msk [vmem:[#allocation4 + $0x50] sm:$0xff] %vm3340, %v3265
      %3352 = vst.msk [vmem:[#allocation4 + $0x58] sm:$0xff] %vm3340, %v3267
      %3353 = vst.msk [vmem:[#allocation4 + $0x60] sm:$0xff] %vm3340, %v3269
      %3354 = vst.msk [vmem:[#allocation4 + $0x68] sm:$0xff] %vm3340, %v3271
      %3355 = vst.msk [vmem:[#allocation4 + $0x70] sm:$0xff] %vm3340, %v3273
      %3356 = vst.msk [vmem:[#allocation4 + $0x78] sm:$0xff] %vm3340, %v3275
      %3357 = vst.msk [vmem:[#allocation4 + $0x80] sm:$0xff] %vm3340, %v3277
      %3358 = vst.msk [vmem:[#allocation4 + $0x88] sm:$0xff] %vm3340, %v3279
      %3359 = vst.msk [vmem:[#allocation4 + $0x90] sm:$0xff] %vm3340, %v3281
      %3360 = vst.msk [vmem:[#allocation4 + $0x98] sm:$0xff] %vm3340, %v3283
      %3361 = vst.msk [vmem:[#allocation4 + $0xa0] sm:$0xff] %vm3340, %v3285
      %3362 = vst.msk [vmem:[#allocation4 + $0xa8] sm:$0xff] %vm3340, %v3287
      %3363 = vst.msk [vmem:[#allocation4 + $0xb0] sm:$0xff] %vm3340, %v3289
      %3364 = vst.msk [vmem:[#allocation4 + $0xb8] sm:$0xff] %vm3340, %v3291
      %3365 = vst.msk [vmem:[#allocation4 + $0xc0] sm:$0xff] %vm3340, %v3293
      %3366 = vst.msk [vmem:[#allocation4 + $0xc8] sm:$0xff] %vm3340, %v3295
      %3367 = vst.msk [vmem:[#allocation4 + $0xd0] sm:$0xff] %vm3340, %v3297
      %3368 = vst.msk [vmem:[#allocation4 + $0xd8] sm:$0xff] %vm3340, %v3299
      %3369 = vst.msk [vmem:[#allocation4 + $0xe0] sm:$0xff] %vm3340, %v3301
      %3370 = vst.msk [vmem:[#allocation4 + $0xe8] sm:$0xff] %vm3340, %v3303
      %3371 = vst.msk [vmem:[#allocation4 + $0xf0] sm:$0xff] %vm3340, %v3305
      %3372 = vst.msk [vmem:[#allocation4 + $0xf8] sm:$0xff] %vm3340, %v3307
      %s3373 = scalar_lea.vmem [#allocation3], 64
      %v3374 = vld [vmem:[%s3373 + $0x7] sm:$0xff]
      %v3375 = vld [vmem:[%s3373 + $0xf] sm:$0xff]
      %v3376 = vld [vmem:[%s3373 + $0x27] sm:$0xff]
      %v3377 = vld [vmem:[%s3373 + $0x2f] sm:$0xff]
      %v3378 = vld [vmem:[%s3373 + $0x47] sm:$0xff]
      %v3379 = vld [vmem:[%s3373 + $0x4f] sm:$0xff]
      %v3380 = vld [vmem:[%s3373 + $0x67] sm:$0xff]
      %v3381 = vld [vmem:[%s3373 + $0x6f] sm:$0xff]
      %v3382 = vld [vmem:[%s3373 + $0x87] sm:$0xff]
      %v3383 = vld [vmem:[%s3373 + $0x8f] sm:$0xff]
      %v3384 = vld [vmem:[%s3373 + $0xa7] sm:$0xff]
      %v3385 = vld [vmem:[%s3373 + $0xaf] sm:$0xff]
      %v3386 = vld [vmem:[%s3373 + $0xc7] sm:$0xff]
      %v3387 = vld [vmem:[%s3373 + $0xcf] sm:$0xff]
      %v3388 = vld [vmem:[%s3373 + $0xe7] sm:$0xff]
      %v3389 = vld [vmem:[%s3373 + $0xef] sm:$0xff]
      %v3390 = vld [vmem:[%s3373 + $0x107] sm:$0xff]
      %v3391 = vld [vmem:[%s3373 + $0x10f] sm:$0xff]
      %v3392 = vld [vmem:[%s3373 + $0x127] sm:$0xff]
      %v3393 = vld [vmem:[%s3373 + $0x12f] sm:$0xff]
      %v3394 = vld [vmem:[%s3373 + $0x147] sm:$0xff]
      %v3395 = vld [vmem:[%s3373 + $0x14f] sm:$0xff]
      %v3396 = vld [vmem:[%s3373 + $0x167] sm:$0xff]
      %v3397 = vld [vmem:[%s3373 + $0x16f] sm:$0xff]
      %v3398 = vld [vmem:[%s3373 + $0x187] sm:$0xff]
      %v3399 = vld [vmem:[%s3373 + $0x18f] sm:$0xff]
      %v3400 = vld [vmem:[%s3373 + $0x1a7] sm:$0xff]
      %v3401 = vld [vmem:[%s3373 + $0x1af] sm:$0xff]
      %v3402 = vld [vmem:[%s3373 + $0x1c7] sm:$0xff]
      %v3403 = vld [vmem:[%s3373 + $0x1cf] sm:$0xff]
      %v3404 = vld [vmem:[%s3373 + $0x1e7] sm:$0xff]
      %v3405 = vld [vmem:[%s3373 + $0x1ef] sm:$0xff]
      %3438 = vrot.lane.b32.xlu0 %v3374, 48
      %v3439 = vpop.permute.xlu0 %3438
      %3440 = vrot.lane.b32.xlu0 %v3375, 48
      %v3441 = vpop.permute.xlu0 %3440
      %3442 = vrot.lane.b32.xlu0 %v3376, 48
      %v3443 = vpop.permute.xlu0 %3442
      %3444 = vrot.lane.b32.xlu0 %v3377, 48
      %v3445 = vpop.permute.xlu0 %3444
      %3446 = vrot.lane.b32.xlu0 %v3378, 48
      %v3447 = vpop.permute.xlu0 %3446
      %3448 = vrot.lane.b32.xlu0 %v3379, 48
      %v3449 = vpop.permute.xlu0 %3448
      %3450 = vrot.lane.b32.xlu0 %v3380, 48
      %v3451 = vpop.permute.xlu0 %3450
      %3452 = vrot.lane.b32.xlu0 %v3381, 48
      %v3453 = vpop.permute.xlu0 %3452
      %3454 = vrot.lane.b32.xlu0 %v3382, 48
      %v3455 = vpop.permute.xlu0 %3454
      %3456 = vrot.lane.b32.xlu0 %v3383, 48
      %v3457 = vpop.permute.xlu0 %3456
      %3458 = vrot.lane.b32.xlu0 %v3384, 48
      %v3459 = vpop.permute.xlu0 %3458
      %3460 = vrot.lane.b32.xlu0 %v3385, 48
      %v3461 = vpop.permute.xlu0 %3460
      %3462 = vrot.lane.b32.xlu0 %v3386, 48
      %v3463 = vpop.permute.xlu0 %3462
      %3464 = vrot.lane.b32.xlu0 %v3387, 48
      %v3465 = vpop.permute.xlu0 %3464
      %3466 = vrot.lane.b32.xlu0 %v3388, 48
      %v3467 = vpop.permute.xlu0 %3466
      %3468 = vrot.lane.b32.xlu0 %v3389, 48
      %v3469 = vpop.permute.xlu0 %3468
      %3470 = vrot.lane.b32.xlu0 %v3390, 48
      %v3471 = vpop.permute.xlu0 %3470
      %3472 = vrot.lane.b32.xlu0 %v3391, 48
      %v3473 = vpop.permute.xlu0 %3472
      %3474 = vrot.lane.b32.xlu0 %v3392, 48
      %v3475 = vpop.permute.xlu0 %3474
      %3476 = vrot.lane.b32.xlu0 %v3393, 48
      %v3477 = vpop.permute.xlu0 %3476
      %3478 = vrot.lane.b32.xlu0 %v3394, 48
      %v3479 = vpop.permute.xlu0 %3478
      %3480 = vrot.lane.b32.xlu0 %v3395, 48
      %v3481 = vpop.permute.xlu0 %3480
      %3482 = vrot.lane.b32.xlu0 %v3396, 48
      %v3483 = vpop.permute.xlu0 %3482
      %3484 = vrot.lane.b32.xlu0 %v3397, 48
      %v3485 = vpop.permute.xlu0 %3484
      %3486 = vrot.lane.b32.xlu0 %v3398, 48
      %v3487 = vpop.permute.xlu0 %3486
      %3488 = vrot.lane.b32.xlu0 %v3399, 48
      %v3489 = vpop.permute.xlu0 %3488
      %3490 = vrot.lane.b32.xlu0 %v3400, 48
      %v3491 = vpop.permute.xlu0 %3490
      %3492 = vrot.lane.b32.xlu0 %v3401, 48
      %v3493 = vpop.permute.xlu0 %3492
      %3494 = vrot.lane.b32.xlu0 %v3402, 48
      %v3495 = vpop.permute.xlu0 %3494
      %3496 = vrot.lane.b32.xlu0 %v3403, 48
      %v3497 = vpop.permute.xlu0 %3496
      %3498 = vrot.lane.b32.xlu0 %v3404, 48
      %v3499 = vpop.permute.xlu0 %3498
      %3500 = vrot.lane.b32.xlu0 %v3405, 48
      %v3501 = vpop.permute.xlu0 %3500
      %vm3534 = vcmask 458112
      %3535 = vst.msk [vmem:[#allocation4] sm:$0xff] %vm3534, %v3439
      %3536 = vst.msk [vmem:[#allocation4 + $0x8] sm:$0xff] %vm3534, %v3441
      %3537 = vst.msk [vmem:[#allocation4 + $0x10] sm:$0xff] %vm3534, %v3443
      %3538 = vst.msk [vmem:[#allocation4 + $0x18] sm:$0xff] %vm3534, %v3445
      %3539 = vst.msk [vmem:[#allocation4 + $0x20] sm:$0xff] %vm3534, %v3447
      %3540 = vst.msk [vmem:[#allocation4 + $0x28] sm:$0xff] %vm3534, %v3449
      %3541 = vst.msk [vmem:[#allocation4 + $0x30] sm:$0xff] %vm3534, %v3451
      %3542 = vst.msk [vmem:[#allocation4 + $0x38] sm:$0xff] %vm3534, %v3453
      %3543 = vst.msk [vmem:[#allocation4 + $0x40] sm:$0xff] %vm3534, %v3455
      %3544 = vst.msk [vmem:[#allocation4 + $0x48] sm:$0xff] %vm3534, %v3457
      %3545 = vst.msk [vmem:[#allocation4 + $0x50] sm:$0xff] %vm3534, %v3459
      %3546 = vst.msk [vmem:[#allocation4 + $0x58] sm:$0xff] %vm3534, %v3461
      %3547 = vst.msk [vmem:[#allocation4 + $0x60] sm:$0xff] %vm3534, %v3463
      %3548 = vst.msk [vmem:[#allocation4 + $0x68] sm:$0xff] %vm3534, %v3465
      %3549 = vst.msk [vmem:[#allocation4 + $0x70] sm:$0xff] %vm3534, %v3467
      %3550 = vst.msk [vmem:[#allocation4 + $0x78] sm:$0xff] %vm3534, %v3469
      %3551 = vst.msk [vmem:[#allocation4 + $0x80] sm:$0xff] %vm3534, %v3471
      %3552 = vst.msk [vmem:[#allocation4 + $0x88] sm:$0xff] %vm3534, %v3473
      %3553 = vst.msk [vmem:[#allocation4 + $0x90] sm:$0xff] %vm3534, %v3475
      %3554 = vst.msk [vmem:[#allocation4 + $0x98] sm:$0xff] %vm3534, %v3477
      %3555 = vst.msk [vmem:[#allocation4 + $0xa0] sm:$0xff] %vm3534, %v3479
      %3556 = vst.msk [vmem:[#allocation4 + $0xa8] sm:$0xff] %vm3534, %v3481
      %3557 = vst.msk [vmem:[#allocation4 + $0xb0] sm:$0xff] %vm3534, %v3483
      %3558 = vst.msk [vmem:[#allocation4 + $0xb8] sm:$0xff] %vm3534, %v3485
      %3559 = vst.msk [vmem:[#allocation4 + $0xc0] sm:$0xff] %vm3534, %v3487
      %3560 = vst.msk [vmem:[#allocation4 + $0xc8] sm:$0xff] %vm3534, %v3489
      %3561 = vst.msk [vmem:[#allocation4 + $0xd0] sm:$0xff] %vm3534, %v3491
      %3562 = vst.msk [vmem:[#allocation4 + $0xd8] sm:$0xff] %vm3534, %v3493
      %3563 = vst.msk [vmem:[#allocation4 + $0xe0] sm:$0xff] %vm3534, %v3495
      %3564 = vst.msk [vmem:[#allocation4 + $0xe8] sm:$0xff] %vm3534, %v3497
      %3565 = vst.msk [vmem:[#allocation4 + $0xf0] sm:$0xff] %vm3534, %v3499
      %3566 = vst.msk [vmem:[#allocation4 + $0xf8] sm:$0xff] %vm3534, %v3501
      %v3567 = vld [vmem:[%s3373 + $0x8] sm:$0xff]
      %v3568 = vld [vmem:[%s3373 + $0x10] sm:$0xff]
      %v3569 = vld [vmem:[%s3373 + $0x28] sm:$0xff]
      %v3570 = vld [vmem:[%s3373 + $0x30] sm:$0xff]
      %v3571 = vld [vmem:[%s3373 + $0x48] sm:$0xff]
      %v3572 = vld [vmem:[%s3373 + $0x50] sm:$0xff]
      %v3573 = vld [vmem:[%s3373 + $0x68] sm:$0xff]
      %v3574 = vld [vmem:[%s3373 + $0x70] sm:$0xff]
      %v3575 = vld [vmem:[%s3373 + $0x88] sm:$0xff]
      %v3576 = vld [vmem:[%s3373 + $0x90] sm:$0xff]
      %v3577 = vld [vmem:[%s3373 + $0xa8] sm:$0xff]
      %v3578 = vld [vmem:[%s3373 + $0xb0] sm:$0xff]
      %v3579 = vld [vmem:[%s3373 + $0xc8] sm:$0xff]
      %v3580 = vld [vmem:[%s3373 + $0xd0] sm:$0xff]
      %v3581 = vld [vmem:[%s3373 + $0xe8] sm:$0xff]
      %v3582 = vld [vmem:[%s3373 + $0xf0] sm:$0xff]
      %v3583 = vld [vmem:[%s3373 + $0x108] sm:$0xff]
      %v3584 = vld [vmem:[%s3373 + $0x110] sm:$0xff]
      %v3585 = vld [vmem:[%s3373 + $0x128] sm:$0xff]
      %v3586 = vld [vmem:[%s3373 + $0x130] sm:$0xff]
      %v3587 = vld [vmem:[%s3373 + $0x148] sm:$0xff]
      %v3588 = vld [vmem:[%s3373 + $0x150] sm:$0xff]
      %v3589 = vld [vmem:[%s3373 + $0x168] sm:$0xff]
      %v3590 = vld [vmem:[%s3373 + $0x170] sm:$0xff]
      %v3591 = vld [vmem:[%s3373 + $0x188] sm:$0xff]
      %v3592 = vld [vmem:[%s3373 + $0x190] sm:$0xff]
      %v3593 = vld [vmem:[%s3373 + $0x1a8] sm:$0xff]
      %v3594 = vld [vmem:[%s3373 + $0x1b0] sm:$0xff]
      %v3595 = vld [vmem:[%s3373 + $0x1c8] sm:$0xff]
      %v3596 = vld [vmem:[%s3373 + $0x1d0] sm:$0xff]
      %v3597 = vld [vmem:[%s3373 + $0x1e8] sm:$0xff]
      %v3598 = vld [vmem:[%s3373 + $0x1f0] sm:$0xff]
      %3631 = vrot.lane.b32.xlu0 %v3567, 56
      %v3632 = vpop.permute.xlu0 %3631
      %3633 = vrot.lane.b32.xlu0 %v3568, 56
      %v3634 = vpop.permute.xlu0 %3633
      %3635 = vrot.lane.b32.xlu0 %v3569, 56
      %v3636 = vpop.permute.xlu0 %3635
      %3637 = vrot.lane.b32.xlu0 %v3570, 56
      %v3638 = vpop.permute.xlu0 %3637
      %3639 = vrot.lane.b32.xlu0 %v3571, 56
      %v3640 = vpop.permute.xlu0 %3639
      %3641 = vrot.lane.b32.xlu0 %v3572, 56
      %v3642 = vpop.permute.xlu0 %3641
      %3643 = vrot.lane.b32.xlu0 %v3573, 56
      %v3644 = vpop.permute.xlu0 %3643
      %3645 = vrot.lane.b32.xlu0 %v3574, 56
      %v3646 = vpop.permute.xlu0 %3645
      %3647 = vrot.lane.b32.xlu0 %v3575, 56
      %v3648 = vpop.permute.xlu0 %3647
      %3649 = vrot.lane.b32.xlu0 %v3576, 56
      %v3650 = vpop.permute.xlu0 %3649
      %3651 = vrot.lane.b32.xlu0 %v3577, 56
      %v3652 = vpop.permute.xlu0 %3651
      %3653 = vrot.lane.b32.xlu0 %v3578, 56
      %v3654 = vpop.permute.xlu0 %3653
      %3655 = vrot.lane.b32.xlu0 %v3579, 56
      %v3656 = vpop.permute.xlu0 %3655
      %3657 = vrot.lane.b32.xlu0 %v3580, 56
      %v3658 = vpop.permute.xlu0 %3657
      %3659 = vrot.lane.b32.xlu0 %v3581, 56
      %v3660 = vpop.permute.xlu0 %3659
      %3661 = vrot.lane.b32.xlu0 %v3582, 56
      %v3662 = vpop.permute.xlu0 %3661
      %3663 = vrot.lane.b32.xlu0 %v3583, 56
      %v3664 = vpop.permute.xlu0 %3663
      %3665 = vrot.lane.b32.xlu0 %v3584, 56
      %v3666 = vpop.permute.xlu0 %3665
      %3667 = vrot.lane.b32.xlu0 %v3585, 56
      %v3668 = vpop.permute.xlu0 %3667
      %3669 = vrot.lane.b32.xlu0 %v3586, 56
      %v3670 = vpop.permute.xlu0 %3669
      %3671 = vrot.lane.b32.xlu0 %v3587, 56
      %v3672 = vpop.permute.xlu0 %3671
      %3673 = vrot.lane.b32.xlu0 %v3588, 56
      %v3674 = vpop.permute.xlu0 %3673
      %3675 = vrot.lane.b32.xlu0 %v3589, 56
      %v3676 = vpop.permute.xlu0 %3675
      %3677 = vrot.lane.b32.xlu0 %v3590, 56
      %v3678 = vpop.permute.xlu0 %3677
      %3679 = vrot.lane.b32.xlu0 %v3591, 56
      %v3680 = vpop.permute.xlu0 %3679
      %3681 = vrot.lane.b32.xlu0 %v3592, 56
      %v3682 = vpop.permute.xlu0 %3681
      %3683 = vrot.lane.b32.xlu0 %v3593, 56
      %v3684 = vpop.permute.xlu0 %3683
      %3685 = vrot.lane.b32.xlu0 %v3594, 56
      %v3686 = vpop.permute.xlu0 %3685
      %3687 = vrot.lane.b32.xlu0 %v3595, 56
      %v3688 = vpop.permute.xlu0 %3687
      %3689 = vrot.lane.b32.xlu0 %v3596, 56
      %v3690 = vpop.permute.xlu0 %3689
      %3691 = vrot.lane.b32.xlu0 %v3597, 56
      %v3692 = vpop.permute.xlu0 %3691
      %3693 = vrot.lane.b32.xlu0 %v3598, 56
      %v3694 = vpop.permute.xlu0 %3693
      %vm3727 = vcmask 523712
      %3728 = vst.msk [vmem:[#allocation4] sm:$0xff] %vm3727, %v3632
      %3729 = vst.msk [vmem:[#allocation4 + $0x8] sm:$0xff] %vm3727, %v3634
      %3730 = vst.msk [vmem:[#allocation4 + $0x10] sm:$0xff] %vm3727, %v3636
      %3731 = vst.msk [vmem:[#allocation4 + $0x18] sm:$0xff] %vm3727, %v3638
      %3732 = vst.msk [vmem:[#allocation4 + $0x20] sm:$0xff] %vm3727, %v3640
      %3733 = vst.msk [vmem:[#allocation4 + $0x28] sm:$0xff] %vm3727, %v3642
      %3734 = vst.msk [vmem:[#allocation4 + $0x30] sm:$0xff] %vm3727, %v3644
      %3735 = vst.msk [vmem:[#allocation4 + $0x38] sm:$0xff] %vm3727, %v3646
      %3736 = vst.msk [vmem:[#allocation4 + $0x40] sm:$0xff] %vm3727, %v3648
      %3737 = vst.msk [vmem:[#allocation4 + $0x48] sm:$0xff] %vm3727, %v3650
      %3738 = vst.msk [vmem:[#allocation4 + $0x50] sm:$0xff] %vm3727, %v3652
      %3739 = vst.msk [vmem:[#allocation4 + $0x58] sm:$0xff] %vm3727, %v3654
      %3740 = vst.msk [vmem:[#allocation4 + $0x60] sm:$0xff] %vm3727, %v3656
      %3741 = vst.msk [vmem:[#allocation4 + $0x68] sm:$0xff] %vm3727, %v3658
      %3742 = vst.msk [vmem:[#allocation4 + $0x70] sm:$0xff] %vm3727, %v3660
      %3743 = vst.msk [vmem:[#allocation4 + $0x78] sm:$0xff] %vm3727, %v3662
      %3744 = vst.msk [vmem:[#allocation4 + $0x80] sm:$0xff] %vm3727, %v3664
      %3745 = vst.msk [vmem:[#allocation4 + $0x88] sm:$0xff] %vm3727, %v3666
      %3746 = vst.msk [vmem:[#allocation4 + $0x90] sm:$0xff] %vm3727, %v3668
      %3747 = vst.msk [vmem:[#allocation4 + $0x98] sm:$0xff] %vm3727, %v3670
      %3748 = vst.msk [vmem:[#allocation4 + $0xa0] sm:$0xff] %vm3727, %v3672
      %3749 = vst.msk [vmem:[#allocation4 + $0xa8] sm:$0xff] %vm3727, %v3674
      %3750 = vst.msk [vmem:[#allocation4 + $0xb0] sm:$0xff] %vm3727, %v3676
      %3751 = vst.msk [vmem:[#allocation4 + $0xb8] sm:$0xff] %vm3727, %v3678
      %3752 = vst.msk [vmem:[#allocation4 + $0xc0] sm:$0xff] %vm3727, %v3680
      %3753 = vst.msk [vmem:[#allocation4 + $0xc8] sm:$0xff] %vm3727, %v3682
      %3754 = vst.msk [vmem:[#allocation4 + $0xd0] sm:$0xff] %vm3727, %v3684
      %3755 = vst.msk [vmem:[#allocation4 + $0xd8] sm:$0xff] %vm3727, %v3686
      %3756 = vst.msk [vmem:[#allocation4 + $0xe0] sm:$0xff] %vm3727, %v3688
      %3757 = vst.msk [vmem:[#allocation4 + $0xe8] sm:$0xff] %vm3727, %v3690
      %3758 = vst.msk [vmem:[#allocation4 + $0xf0] sm:$0xff] %vm3727, %v3692
      %3759 = vst.msk [vmem:[#allocation4 + $0xf8] sm:$0xff] %vm3727, %v3694
      %v3760 = vld [vmem:[%s3373 + $0x9] sm:$0xff]
      %v3761 = vld [vmem:[%s3373 + $0x11] sm:$0xff]
      %v3762 = vld [vmem:[%s3373 + $0x29] sm:$0xff]
      %v3763 = vld [vmem:[%s3373 + $0x31] sm:$0xff]
      %v3764 = vld [vmem:[%s3373 + $0x49] sm:$0xff]
      %v3765 = vld [vmem:[%s3373 + $0x51] sm:$0xff]
      %v3766 = vld [vmem:[%s3373 + $0x69] sm:$0xff]
      %v3767 = vld [vmem:[%s3373 + $0x71] sm:$0xff]
      %v3768 = vld [vmem:[%s3373 + $0x89] sm:$0xff]
      %v3769 = vld [vmem:[%s3373 + $0x91] sm:$0xff]
      %v3770 = vld [vmem:[%s3373 + $0xa9] sm:$0xff]
      %v3771 = vld [vmem:[%s3373 + $0xb1] sm:$0xff]
      %v3772 = vld [vmem:[%s3373 + $0xc9] sm:$0xff]
      %v3773 = vld [vmem:[%s3373 + $0xd1] sm:$0xff]
      %v3774 = vld [vmem:[%s3373 + $0xe9] sm:$0xff]
      %v3775 = vld [vmem:[%s3373 + $0xf1] sm:$0xff]
      %v3776 = vld [vmem:[%s3373 + $0x109] sm:$0xff]
      %v3777 = vld [vmem:[%s3373 + $0x111] sm:$0xff]
      %v3778 = vld [vmem:[%s3373 + $0x129] sm:$0xff]
      %v3779 = vld [vmem:[%s3373 + $0x131] sm:$0xff]
      %v3780 = vld [vmem:[%s3373 + $0x149] sm:$0xff]
      %v3781 = vld [vmem:[%s3373 + $0x151] sm:$0xff]
      %v3782 = vld [vmem:[%s3373 + $0x169] sm:$0xff]
      %v3783 = vld [vmem:[%s3373 + $0x171] sm:$0xff]
      %v3784 = vld [vmem:[%s3373 + $0x189] sm:$0xff]
      %v3785 = vld [vmem:[%s3373 + $0x191] sm:$0xff]
      %v3786 = vld [vmem:[%s3373 + $0x1a9] sm:$0xff]
      %v3787 = vld [vmem:[%s3373 + $0x1b1] sm:$0xff]
      %v3788 = vld [vmem:[%s3373 + $0x1c9] sm:$0xff]
      %v3789 = vld [vmem:[%s3373 + $0x1d1] sm:$0xff]
      %v3790 = vld [vmem:[%s3373 + $0x1e9] sm:$0xff]
      %v3791 = vld [vmem:[%s3373 + $0x1f1] sm:$0xff]
      %3824 = vrot.lane.b32.xlu0 %v3760, 64
      %v3825 = vpop.permute.xlu0 %3824
      %3826 = vrot.lane.b32.xlu0 %v3761, 64
      %v3827 = vpop.permute.xlu0 %3826
      %3828 = vrot.lane.b32.xlu0 %v3762, 64
      %v3829 = vpop.permute.xlu0 %3828
      %3830 = vrot.lane.b32.xlu0 %v3763, 64
      %v3831 = vpop.permute.xlu0 %3830
      %3832 = vrot.lane.b32.xlu0 %v3764, 64
      %v3833 = vpop.permute.xlu0 %3832
      %3834 = vrot.lane.b32.xlu0 %v3765, 64
      %v3835 = vpop.permute.xlu0 %3834
      %3836 = vrot.lane.b32.xlu0 %v3766, 64
      %v3837 = vpop.permute.xlu0 %3836
      %3838 = vrot.lane.b32.xlu0 %v3767, 64
      %v3839 = vpop.permute.xlu0 %3838
      %3840 = vrot.lane.b32.xlu0 %v3768, 64
      %v3841 = vpop.permute.xlu0 %3840
      %3842 = vrot.lane.b32.xlu0 %v3769, 64
      %v3843 = vpop.permute.xlu0 %3842
      %3844 = vrot.lane.b32.xlu0 %v3770, 64
      %v3845 = vpop.permute.xlu0 %3844
      %3846 = vrot.lane.b32.xlu0 %v3771, 64
      %v3847 = vpop.permute.xlu0 %3846
      %3848 = vrot.lane.b32.xlu0 %v3772, 64
      %v3849 = vpop.permute.xlu0 %3848
      %3850 = vrot.lane.b32.xlu0 %v3773, 64
      %v3851 = vpop.permute.xlu0 %3850
      %3852 = vrot.lane.b32.xlu0 %v3774, 64
      %v3853 = vpop.permute.xlu0 %3852
      %3854 = vrot.lane.b32.xlu0 %v3775, 64
      %v3855 = vpop.permute.xlu0 %3854
      %3856 = vrot.lane.b32.xlu0 %v3776, 64
      %v3857 = vpop.permute.xlu0 %3856
      %3858 = vrot.lane.b32.xlu0 %v3777, 64
      %v3859 = vpop.permute.xlu0 %3858
      %3860 = vrot.lane.b32.xlu0 %v3778, 64
      %v3861 = vpop.permute.xlu0 %3860
      %3862 = vrot.lane.b32.xlu0 %v3779, 64
      %v3863 = vpop.permute.xlu0 %3862
      %3864 = vrot.lane.b32.xlu0 %v3780, 64
      %v3865 = vpop.permute.xlu0 %3864
      %3866 = vrot.lane.b32.xlu0 %v3781, 64
      %v3867 = vpop.permute.xlu0 %3866
      %3868 = vrot.lane.b32.xlu0 %v3782, 64
      %v3869 = vpop.permute.xlu0 %3868
      %3870 = vrot.lane.b32.xlu0 %v3783, 64
      %v3871 = vpop.permute.xlu0 %3870
      %3872 = vrot.lane.b32.xlu0 %v3784, 64
      %v3873 = vpop.permute.xlu0 %3872
      %3874 = vrot.lane.b32.xlu0 %v3785, 64
      %v3875 = vpop.permute.xlu0 %3874
      %3876 = vrot.lane.b32.xlu0 %v3786, 64
      %v3877 = vpop.permute.xlu0 %3876
      %3878 = vrot.lane.b32.xlu0 %v3787, 64
      %v3879 = vpop.permute.xlu0 %3878
      %3880 = vrot.lane.b32.xlu0 %v3788, 64
      %v3881 = vpop.permute.xlu0 %3880
      %3882 = vrot.lane.b32.xlu0 %v3789, 64
      %v3883 = vpop.permute.xlu0 %3882
      %3884 = vrot.lane.b32.xlu0 %v3790, 64
      %v3885 = vpop.permute.xlu0 %3884
      %3886 = vrot.lane.b32.xlu0 %v3791, 64
      %v3887 = vpop.permute.xlu0 %3886
      %vm3920 = vcmask 589312
      %3921 = vst.msk [vmem:[#allocation4] sm:$0xff] %vm3920, %v3825
      %3922 = vst.msk [vmem:[#allocation4 + $0x8] sm:$0xff] %vm3920, %v3827
      %3923 = vst.msk [vmem:[#allocation4 + $0x10] sm:$0xff] %vm3920, %v3829
      %3924 = vst.msk [vmem:[#allocation4 + $0x18] sm:$0xff] %vm3920, %v3831
      %3925 = vst.msk [vmem:[#allocation4 + $0x20] sm:$0xff] %vm3920, %v3833
      %3926 = vst.msk [vmem:[#allocation4 + $0x28] sm:$0xff] %vm3920, %v3835
      %3927 = vst.msk [vmem:[#allocation4 + $0x30] sm:$0xff] %vm3920, %v3837
      %3928 = vst.msk [vmem:[#allocation4 + $0x38] sm:$0xff] %vm3920, %v3839
      %3929 = vst.msk [vmem:[#allocation4 + $0x40] sm:$0xff] %vm3920, %v3841
      %3930 = vst.msk [vmem:[#allocation4 + $0x48] sm:$0xff] %vm3920, %v3843
      %3931 = vst.msk [vmem:[#allocation4 + $0x50] sm:$0xff] %vm3920, %v3845
      %3932 = vst.msk [vmem:[#allocation4 + $0x58] sm:$0xff] %vm3920, %v3847
      %3933 = vst.msk [vmem:[#allocation4 + $0x60] sm:$0xff] %vm3920, %v3849
      %3934 = vst.msk [vmem:[#allocation4 + $0x68] sm:$0xff] %vm3920, %v3851
      %3935 = vst.msk [vmem:[#allocation4 + $0x70] sm:$0xff] %vm3920, %v3853
      %3936 = vst.msk [vmem:[#allocation4 + $0x78] sm:$0xff] %vm3920, %v3855
      %3937 = vst.msk [vmem:[#allocation4 + $0x80] sm:$0xff] %vm3920, %v3857
      %3938 = vst.msk [vmem:[#allocation4 + $0x88] sm:$0xff] %vm3920, %v3859
      %3939 = vst.msk [vmem:[#allocation4 + $0x90] sm:$0xff] %vm3920, %v3861
      %3940 = vst.msk [vmem:[#allocation4 + $0x98] sm:$0xff] %vm3920, %v3863
      %3941 = vst.msk [vmem:[#allocation4 + $0xa0] sm:$0xff] %vm3920, %v3865
      %3942 = vst.msk [vmem:[#allocation4 + $0xa8] sm:$0xff] %vm3920, %v3867
      %3943 = vst.msk [vmem:[#allocation4 + $0xb0] sm:$0xff] %vm3920, %v3869
      %3944 = vst.msk [vmem:[#allocation4 + $0xb8] sm:$0xff] %vm3920, %v3871
      %3945 = vst.msk [vmem:[#allocation4 + $0xc0] sm:$0xff] %vm3920, %v3873
      %3946 = vst.msk [vmem:[#allocation4 + $0xc8] sm:$0xff] %vm3920, %v3875
      %3947 = vst.msk [vmem:[#allocation4 + $0xd0] sm:$0xff] %vm3920, %v3877
      %3948 = vst.msk [vmem:[#allocation4 + $0xd8] sm:$0xff] %vm3920, %v3879
      %3949 = vst.msk [vmem:[#allocation4 + $0xe0] sm:$0xff] %vm3920, %v3881
      %3950 = vst.msk [vmem:[#allocation4 + $0xe8] sm:$0xff] %vm3920, %v3883
      %3951 = vst.msk [vmem:[#allocation4 + $0xf0] sm:$0xff] %vm3920, %v3885
      %3952 = vst.msk [vmem:[#allocation4 + $0xf8] sm:$0xff] %vm3920, %v3887
      %v3953 = vld [vmem:[%s676 + $0x1] sm:$0xff]
      %v3954 = vld [vmem:[%s676 + $0x9] sm:$0xff]
      %v3955 = vld [vmem:[%s676 + $0x19] sm:$0xff]
      %v3956 = vld [vmem:[%s676 + $0x21] sm:$0xff]
      %v3957 = vld [vmem:[%s676 + $0x31] sm:$0xff]
      %v3958 = vld [vmem:[%s676 + $0x39] sm:$0xff]
      %v3959 = vld [vmem:[%s676 + $0x49] sm:$0xff]
      %v3960 = vld [vmem:[%s676 + $0x51] sm:$0xff]
      %v3961 = vld [vmem:[%s676 + $0x61] sm:$0xff]
      %v3962 = vld [vmem:[%s676 + $0x69] sm:$0xff]
      %v3963 = vld [vmem:[%s676 + $0x79] sm:$0xff]
      %v3964 = vld [vmem:[%s676 + $0x81] sm:$0xff]
      %v3965 = vld [vmem:[%s676 + $0x91] sm:$0xff]
      %v3966 = vld [vmem:[%s676 + $0x99] sm:$0xff]
      %v3967 = vld [vmem:[%s676 + $0xa9] sm:$0xff]
      %v3968 = vld [vmem:[%s676 + $0xb1] sm:$0xff]
      %v3969 = vld [vmem:[%s676 + $0xc1] sm:$0xff]
      %v3970 = vld [vmem:[%s676 + $0xc9] sm:$0xff]
      %v3971 = vld [vmem:[%s676 + $0xd9] sm:$0xff]
      %v3972 = vld [vmem:[%s676 + $0xe1] sm:$0xff]
      %v3973 = vld [vmem:[%s676 + $0xf1] sm:$0xff]
      %v3974 = vld [vmem:[%s676 + $0xf9] sm:$0xff]
      %v3975 = vld [vmem:[%s676 + $0x109] sm:$0xff]
      %v3976 = vld [vmem:[%s676 + $0x111] sm:$0xff]
      %v3977 = vld [vmem:[%s676 + $0x121] sm:$0xff]
      %v3978 = vld [vmem:[%s676 + $0x129] sm:$0xff]
      %v3979 = vld [vmem:[%s676 + $0x139] sm:$0xff]
      %v3980 = vld [vmem:[%s676 + $0x141] sm:$0xff]
      %v3981 = vld [vmem:[%s676 + $0x151] sm:$0xff]
      %v3982 = vld [vmem:[%s676 + $0x159] sm:$0xff]
      %v3983 = vld [vmem:[%s676 + $0x169] sm:$0xff]
      %v3984 = vld [vmem:[%s676 + $0x171] sm:$0xff]
      %4017 = vrot.lane.b32.xlu0 %v3953, 72
      %v4018 = vpop.permute.xlu0 %4017
      %4019 = vrot.lane.b32.xlu0 %v3954, 72
      %v4020 = vpop.permute.xlu0 %4019
      %4021 = vrot.lane.b32.xlu0 %v3955, 72
      %v4022 = vpop.permute.xlu0 %4021
      %4023 = vrot.lane.b32.xlu0 %v3956, 72
      %v4024 = vpop.permute.xlu0 %4023
      %4025 = vrot.lane.b32.xlu0 %v3957, 72
      %v4026 = vpop.permute.xlu0 %4025
      %4027 = vrot.lane.b32.xlu0 %v3958, 72
      %v4028 = vpop.permute.xlu0 %4027
      %4029 = vrot.lane.b32.xlu0 %v3959, 72
      %v4030 = vpop.permute.xlu0 %4029
      %4031 = vrot.lane.b32.xlu0 %v3960, 72
      %v4032 = vpop.permute.xlu0 %4031
      %4033 = vrot.lane.b32.xlu0 %v3961, 72
      %v4034 = vpop.permute.xlu0 %4033
      %4035 = vrot.lane.b32.xlu0 %v3962, 72
      %v4036 = vpop.permute.xlu0 %4035
      %4037 = vrot.lane.b32.xlu0 %v3963, 72
      %v4038 = vpop.permute.xlu0 %4037
      %4039 = vrot.lane.b32.xlu0 %v3964, 72
      %v4040 = vpop.permute.xlu0 %4039
      %4041 = vrot.lane.b32.xlu0 %v3965, 72
      %v4042 = vpop.permute.xlu0 %4041
      %4043 = vrot.lane.b32.xlu0 %v3966, 72
      %v4044 = vpop.permute.xlu0 %4043
      %4045 = vrot.lane.b32.xlu0 %v3967, 72
      %v4046 = vpop.permute.xlu0 %4045
      %4047 = vrot.lane.b32.xlu0 %v3968, 72
      %v4048 = vpop.permute.xlu0 %4047
      %4049 = vrot.lane.b32.xlu0 %v3969, 72
      %v4050 = vpop.permute.xlu0 %4049
      %4051 = vrot.lane.b32.xlu0 %v3970, 72
      %v4052 = vpop.permute.xlu0 %4051
      %4053 = vrot.lane.b32.xlu0 %v3971, 72
      %v4054 = vpop.permute.xlu0 %4053
      %4055 = vrot.lane.b32.xlu0 %v3972, 72
      %v4056 = vpop.permute.xlu0 %4055
      %4057 = vrot.lane.b32.xlu0 %v3973, 72
      %v4058 = vpop.permute.xlu0 %4057
      %4059 = vrot.lane.b32.xlu0 %v3974, 72
      %v4060 = vpop.permute.xlu0 %4059
      %4061 = vrot.lane.b32.xlu0 %v3975, 72
      %v4062 = vpop.permute.xlu0 %4061
      %4063 = vrot.lane.b32.xlu0 %v3976, 72
      %v4064 = vpop.permute.xlu0 %4063
      %4065 = vrot.lane.b32.xlu0 %v3977, 72
      %v4066 = vpop.permute.xlu0 %4065
      %4067 = vrot.lane.b32.xlu0 %v3978, 72
      %v4068 = vpop.permute.xlu0 %4067
      %4069 = vrot.lane.b32.xlu0 %v3979, 72
      %v4070 = vpop.permute.xlu0 %4069
      %4071 = vrot.lane.b32.xlu0 %v3980, 72
      %v4072 = vpop.permute.xlu0 %4071
      %4073 = vrot.lane.b32.xlu0 %v3981, 72
      %v4074 = vpop.permute.xlu0 %4073
      %4075 = vrot.lane.b32.xlu0 %v3982, 72
      %v4076 = vpop.permute.xlu0 %4075
      %4077 = vrot.lane.b32.xlu0 %v3983, 72
      %v4078 = vpop.permute.xlu0 %4077
      %4079 = vrot.lane.b32.xlu0 %v3984, 72
      %v4080 = vpop.permute.xlu0 %4079
      %vm4113 = vcmask 622144
      %4114 = vst.msk [vmem:[#allocation4] sm:$0xff] %vm4113, %v4018
      %4115 = vst.msk [vmem:[#allocation4 + $0x8] sm:$0xff] %vm4113, %v4020
      %4116 = vst.msk [vmem:[#allocation4 + $0x10] sm:$0xff] %vm4113, %v4022
      %4117 = vst.msk [vmem:[#allocation4 + $0x18] sm:$0xff] %vm4113, %v4024
      %4118 = vst.msk [vmem:[#allocation4 + $0x20] sm:$0xff] %vm4113, %v4026
      %4119 = vst.msk [vmem:[#allocation4 + $0x28] sm:$0xff] %vm4113, %v4028
      %4120 = vst.msk [vmem:[#allocation4 + $0x30] sm:$0xff] %vm4113, %v4030
      %4121 = vst.msk [vmem:[#allocation4 + $0x38] sm:$0xff] %vm4113, %v4032
      %4122 = vst.msk [vmem:[#allocation4 + $0x40] sm:$0xff] %vm4113, %v4034
      %4123 = vst.msk [vmem:[#allocation4 + $0x48] sm:$0xff] %vm4113, %v4036
      %4124 = vst.msk [vmem:[#allocation4 + $0x50] sm:$0xff] %vm4113, %v4038
      %4125 = vst.msk [vmem:[#allocation4 + $0x58] sm:$0xff] %vm4113, %v4040
      %4126 = vst.msk [vmem:[#allocation4 + $0x60] sm:$0xff] %vm4113, %v4042
      %4127 = vst.msk [vmem:[#allocation4 + $0x68] sm:$0xff] %vm4113, %v4044
      %4128 = vst.msk [vmem:[#allocation4 + $0x70] sm:$0xff] %vm4113, %v4046
      %4129 = vst.msk [vmem:[#allocation4 + $0x78] sm:$0xff] %vm4113, %v4048
      %4130 = vst.msk [vmem:[#allocation4 + $0x80] sm:$0xff] %vm4113, %v4050
      %4131 = vst.msk [vmem:[#allocation4 + $0x88] sm:$0xff] %vm4113, %v4052
      %4132 = vst.msk [vmem:[#allocation4 + $0x90] sm:$0xff] %vm4113, %v4054
      %4133 = vst.msk [vmem:[#allocation4 + $0x98] sm:$0xff] %vm4113, %v4056
      %4134 = vst.msk [vmem:[#allocation4 + $0xa0] sm:$0xff] %vm4113, %v4058
      %4135 = vst.msk [vmem:[#allocation4 + $0xa8] sm:$0xff] %vm4113, %v4060
      %4136 = vst.msk [vmem:[#allocation4 + $0xb0] sm:$0xff] %vm4113, %v4062
      %4137 = vst.msk [vmem:[#allocation4 + $0xb8] sm:$0xff] %vm4113, %v4064
      %4138 = vst.msk [vmem:[#allocation4 + $0xc0] sm:$0xff] %vm4113, %v4066
      %4139 = vst.msk [vmem:[#allocation4 + $0xc8] sm:$0xff] %vm4113, %v4068
      %4140 = vst.msk [vmem:[#allocation4 + $0xd0] sm:$0xff] %vm4113, %v4070
      %4141 = vst.msk [vmem:[#allocation4 + $0xd8] sm:$0xff] %vm4113, %v4072
      %4142 = vst.msk [vmem:[#allocation4 + $0xe0] sm:$0xff] %vm4113, %v4074
      %4143 = vst.msk [vmem:[#allocation4 + $0xe8] sm:$0xff] %vm4113, %v4076
      %4144 = vst.msk [vmem:[#allocation4 + $0xf0] sm:$0xff] %vm4113, %v4078
      %4145 = vst.msk [vmem:[#allocation4 + $0xf8] sm:$0xff] %vm4113, %v4080
      %v4146 = vld [vmem:[#allocation4] sm:$0xff]
      %v4147 = vld [vmem:[#allocation4 + $0x8] sm:$0xff]
      %v4148 = vld [vmem:[#allocation4 + $0x10] sm:$0xff]
      %v4149 = vld [vmem:[#allocation4 + $0x18] sm:$0xff]
      %v4150 = vld [vmem:[#allocation4 + $0x20] sm:$0xff]
      %v4151 = vld [vmem:[#allocation4 + $0x28] sm:$0xff]
      %v4152 = vld [vmem:[#allocation4 + $0x30] sm:$0xff]
      %v4153 = vld [vmem:[#allocation4 + $0x38] sm:$0xff]
      %v4154 = vld [vmem:[#allocation4 + $0x40] sm:$0xff]
      %v4155 = vld [vmem:[#allocation4 + $0x48] sm:$0xff]
      %v4156 = vld [vmem:[#allocation4 + $0x50] sm:$0xff]
      %v4157 = vld [vmem:[#allocation4 + $0x58] sm:$0xff]
      %v4158 = vld [vmem:[#allocation4 + $0x60] sm:$0xff]
      %v4159 = vld [vmem:[#allocation4 + $0x68] sm:$0xff]
      %v4160 = vld [vmem:[#allocation4 + $0x70] sm:$0xff]
      %v4161 = vld [vmem:[#allocation4 + $0x78] sm:$0xff]
      %v4162 = vld [vmem:[#allocation4 + $0x80] sm:$0xff]
      %v4163 = vld [vmem:[#allocation4 + $0x88] sm:$0xff]
      %v4164 = vld [vmem:[#allocation4 + $0x90] sm:$0xff]
      %v4165 = vld [vmem:[#allocation4 + $0x98] sm:$0xff]
      %v4166 = vld [vmem:[#allocation4 + $0xa0] sm:$0xff]
      %v4167 = vld [vmem:[#allocation4 + $0xa8] sm:$0xff]
      %v4168 = vld [vmem:[#allocation4 + $0xb0] sm:$0xff]
      %v4169 = vld [vmem:[#allocation4 + $0xb8] sm:$0xff]
      %v4170 = vld [vmem:[#allocation4 + $0xc0] sm:$0xff]
      %v4171 = vld [vmem:[#allocation4 + $0xc8] sm:$0xff]
      %v4172 = vld [vmem:[#allocation4 + $0xd0] sm:$0xff]
      %v4173 = vld [vmem:[#allocation4 + $0xd8] sm:$0xff]
      %v4174 = vld [vmem:[#allocation4 + $0xe0] sm:$0xff]
      %v4175 = vld [vmem:[#allocation4 + $0xe8] sm:$0xff]
      %v4176 = vld [vmem:[#allocation4 + $0xf0] sm:$0xff]
      %v4177 = vld [vmem:[#allocation4 + $0xf8] sm:$0xff]
      %v4178 = vld [vmem:[%s3] sm:$0xff]
      %v4179 = vld [vmem:[%s3 + $0x8] sm:$0xff]
      %v4180 = vld [vmem:[%s3 + $0x10] sm:$0xff]
      %v4181 = vld [vmem:[%s3 + $0x18] sm:$0xff]
      %v4182 = vld [vmem:[%s3 + $0x20] sm:$0xff]
      %v4183 = vld [vmem:[%s3 + $0x28] sm:$0xff]
      %v4184 = vld [vmem:[%s3 + $0x30] sm:$0xff]
      %v4185 = vld [vmem:[%s3 + $0x38] sm:$0xff]
      %v4186 = vld [vmem:[%s3 + $0x40] sm:$0xff]
      %v4187 = vld [vmem:[%s3 + $0x48] sm:$0xf]
      %v4188 = vld [vmem:[%s4] sm:$0x1]
      %v4190 = vlaneseq
      %v4191 = vshrl.u32 %v4190, 7
      %v4192 = vsub.s32 0, %v4191
      %v4193 = vrot.slane %v4188, %v4192
      %vm4195 = vcmask 621568
      %v4197 = vsel %vm4195, %v4146, 0
      %v4200 = vsel %vm4195, %v4147, 0
      %v4203 = vsel %vm4195, %v4148, 0
      %v4206 = vsel %vm4195, %v4149, 0
      %v4209 = vsel %vm4195, %v4150, 0
      %v4212 = vsel %vm4195, %v4151, 0
      %v4215 = vsel %vm4195, %v4152, 0
      %v4218 = vsel %vm4195, %v4153, 0
      %v4221 = vsel %vm4195, %v4154, 0
      %v4224 = vsel %vm4195, %v4155, 0
      %v4227 = vsel %vm4195, %v4156, 0
      %v4230 = vsel %vm4195, %v4157, 0
      %v4233 = vsel %vm4195, %v4158, 0
      %v4236 = vsel %vm4195, %v4159, 0
      %v4239 = vsel %vm4195, %v4160, 0
      %v4242 = vsel %vm4195, %v4161, 0
      %v4245 = vsel %vm4195, %v4162, 0
      %v4248 = vsel %vm4195, %v4163, 0
      %v4251 = vsel %vm4195, %v4164, 0
      %v4254 = vsel %vm4195, %v4165, 0
      %v4257 = vsel %vm4195, %v4166, 0
      %v4260 = vsel %vm4195, %v4167, 0
      %v4263 = vsel %vm4195, %v4168, 0
      %v4266 = vsel %vm4195, %v4169, 0
      %v4269 = vsel %vm4195, %v4170, 0
      %v4272 = vsel %vm4195, %v4171, 0
      %v4275 = vsel %vm4195, %v4172, 0
      %v4278 = vsel %vm4195, %v4173, 0
      %v4281 = vsel %vm4195, %v4174, 0
      %v4284 = vsel %vm4195, %v4175, 0
      %v4287 = vsel %vm4195, %v4176, 0
      %v4290 = vsel %vm4195, %v4177, 0
      %v4293 = vsel %vm1977, %v4187, 0
      %4295 = vmatprep.subr.mxu0 0.0
      %4296 = vmatpush1.msra.mxu0 %v4178
      %4297 = vmatprep.subr.mxu0 0.0
      %4298 = vmatpush1.msra.mxu0 %v4179
      %4299 = vmatprep.subr.mxu0 0.0
      %4300 = vmatpush1.msra.mxu0 %v4180
      %4301 = vmatprep.subr.mxu0 0.0
      %4302 = vmatpush1.msra.mxu0 %v4181
      %4303 = vmatprep.subr.mxu0 0.0
      %4304 = vmatpush1.msra.mxu0 %v4182
      %4305 = vmatprep.subr.mxu0 0.0
      %4306 = vmatpush1.msra.mxu0 %v4183
      %4307 = vmatprep.subr.mxu0 0.0
      %4308 = vmatpush1.msra.mxu0 %v4184
      %4309 = vmatprep.subr.mxu0 0.0
      %4310 = vmatpush1.msra.mxu0 %v4185
      %4311 = vmatprep.subr.mxu0 0.0
      %4312 = vmatpush1.msra.mxu0 %v4186
      %4313 = vmatprep.subr.mxu0 0.0
      %4314 = vmatpush1.msra.mxu0 %v4293
      %4315 = vmatprep.subr.mxu0 0.0
      %4316 = vmatpush1.msra.mxu0 0.0
      %4317 = vmatprep.subr.mxu0 0.0
      %4318 = vmatpush1.msra.mxu0 0.0
      %4319 = vmatprep.subr.mxu0 0.0
      %4320 = vmatpush1.msra.mxu0 0.0
      %4321 = vmatprep.subr.mxu0 0.0
      %4322 = vmatpush1.msra.mxu0 0.0
      %4323 = vmatprep.subr.mxu0 0.0
      %4324 = vmatpush1.msra.mxu0 0.0
      %4325 = vmatprep.subr.mxu0 0.0
      %4326 = vmatpush1.msra.mxu0 0.0
      %4327 = vmatprep.subr.mxu0 0.0
      %4328 = vmatpush1.msra.mxu0 0.0
      %4329 = vmatprep.subr.mxu0 0.0
      %4330 = vmatpush1.msra.mxu0 0.0
      %4331 = vmatprep.subr.mxu0 0.0
      %4332 = vmatpush1.msra.mxu0 0.0
      %4333 = vmatprep.subr.mxu0 0.0
      %4334 = vmatpush1.msra.mxu0 0.0
      %4335 = vmatprep.subr.mxu0 0.0
      %4336 = vmatpush1.msra.mxu0 0.0
      %4337 = vmatprep.subr.mxu0 0.0
      %4338 = vmatpush1.msra.mxu0 0.0
      %4339 = vmatprep.subr.mxu0 0.0
      %4340 = vmatpush1.msra.mxu0 0.0
      %4341 = vmatprep.subr.mxu0 0.0
      %4342 = vmatpush1.msra.mxu0 0.0
      %4343 = vmatprep.subr.mxu0 0.0
      %4344 = vmatpush1.msra.mxu0 0.0
      %4345 = vmatprep.subr.mxu0 0.0
      %4346 = vmatpush1.msra.mxu0 0.0
      %4347 = vmatprep.subr.mxu0 0.0
      %4348 = vmatpush1.msra.mxu0 0.0
      %4349 = vmatprep.subr.mxu0 0.0
      %4350 = vmatpush1.msra.mxu0 0.0
      %4351 = vmatprep.subr.mxu0 0.0
      %4352 = vmatpush1.msra.mxu0 0.0
      %4353 = vmatprep.subr.mxu0 0.0
      %4354 = vmatpush1.msra.mxu0 0.0
      %4355 = vmatprep.subr.mxu0 0.0
      %4356 = vmatpush1.msra.mxu0 0.0
      %4357 = vmatprep.subr.mxu0 0.0
      %4358 = vmatpush1.msra.mxu0 0.0
      %4359 = vmatprep.mubr.f32.mxu0 0.0
      %4360 = vmatmul.mubr.f32.gmra.mrb[0].mxu0 %v4197
      %v4361 = vpop.f32.mrb[0].mxu0
      %v4362 = vadd.f32 %v4193, %v4361
      %v4363 = vpop.f32.mrb[0].mxu0
      %4364 = vmatprep.mubr.f32.mxu0 0.0
      %4365 = vmatmul.mubr.f32.gmra.mrb[0].mxu0 %v4200
      %v4366 = vpop.f32.mrb[0].mxu0
      %v4367 = vadd.f32 %v4193, %v4366
      %v4368 = vpop.f32.mrb[0].mxu0
      %4369 = vmatprep.mubr.f32.mxu0 0.0
      %4370 = vmatmul.mubr.f32.gmra.mrb[0].mxu0 %v4203
      %v4371 = vpop.f32.mrb[0].mxu0
      %v4372 = vadd.f32 %v4193, %v4371
      %v4373 = vpop.f32.mrb[0].mxu0
      %4374 = vmatprep.mubr.f32.mxu0 0.0
      %4375 = vmatmul.mubr.f32.gmra.mrb[0].mxu0 %v4206
      %v4376 = vpop.f32.mrb[0].mxu0
      %v4377 = vadd.f32 %v4193, %v4376
      %v4378 = vpop.f32.mrb[0].mxu0
      %4379 = vmatprep.mubr.f32.mxu0 0.0
      %4380 = vmatmul.mubr.f32.gmra.mrb[0].mxu0 %v4209
      %v4381 = vpop.f32.mrb[0].mxu0
      %v4382 = vadd.f32 %v4193, %v4381
      %v4383 = vpop.f32.mrb[0].mxu0
      %4384 = vmatprep.mubr.f32.mxu0 0.0
      %4385 = vmatmul.mubr.f32.gmra.mrb[0].mxu0 %v4212
      %v4386 = vpop.f32.mrb[0].mxu0
      %v4387 = vadd.f32 %v4193, %v4386
      %v4388 = vpop.f32.mrb[0].mxu0
      %4389 = vmatprep.mubr.f32.mxu0 0.0
      %4390 = vmatmul.mubr.f32.gmra.mrb[0].mxu0 %v4215
      %v4391 = vpop.f32.mrb[0].mxu0
      %v4392 = vadd.f32 %v4193, %v4391
      %v4393 = vpop.f32.mrb[0].mxu0
      %4394 = vmatprep.mubr.f32.mxu0 0.0
      %4395 = vmatmul.mubr.f32.gmra.mrb[0].mxu0 %v4218
      %v4396 = vpop.f32.mrb[0].mxu0
      %v4397 = vadd.f32 %v4193, %v4396
      %v4398 = vpop.f32.mrb[0].mxu0
      %4399 = vmatprep.mubr.f32.mxu0 0.0
      %4400 = vmatmul.mubr.f32.gmra.mrb[0].mxu0 %v4221
      %v4401 = vpop.f32.mrb[0].mxu0
      %v4402 = vadd.f32 %v4193, %v4401
      %v4403 = vpop.f32.mrb[0].mxu0
      %4404 = vmatprep.mubr.f32.mxu0 0.0
      %4405 = vmatmul.mubr.f32.gmra.mrb[0].mxu0 %v4224
      %v4406 = vpop.f32.mrb[0].mxu0
      %v4407 = vadd.f32 %v4193, %v4406
      %v4408 = vpop.f32.mrb[0].mxu0
      %4409 = vmatprep.mubr.f32.mxu0 0.0
      %4410 = vmatmul.mubr.f32.gmra.mrb[0].mxu0 %v4227
      %v4411 = vpop.f32.mrb[0].mxu0
      %v4412 = vadd.f32 %v4193, %v4411
      %v4413 = vpop.f32.mrb[0].mxu0
      %4414 = vmatprep.mubr.f32.mxu0 0.0
      %4415 = vmatmul.mubr.f32.gmra.mrb[0].mxu0 %v4230
      %v4416 = vpop.f32.mrb[0].mxu0
      %v4417 = vadd.f32 %v4193, %v4416
      %v4418 = vpop.f32.mrb[0].mxu0
      %4419 = vmatprep.mubr.f32.mxu0 0.0
      %4420 = vmatmul.mubr.f32.gmra.mrb[0].mxu0 %v4233
      %v4421 = vpop.f32.mrb[0].mxu0
      %v4422 = vadd.f32 %v4193, %v4421
      %v4423 = vpop.f32.mrb[0].mxu0
      %4424 = vmatprep.mubr.f32.mxu0 0.0
      %4425 = vmatmul.mubr.f32.gmra.mrb[0].mxu0 %v4236
      %v4426 = vpop.f32.mrb[0].mxu0
      %v4427 = vadd.f32 %v4193, %v4426
      %v4428 = vpop.f32.mrb[0].mxu0
      %4429 = vmatprep.mubr.f32.mxu0 0.0
      %4430 = vmatmul.mubr.f32.gmra.mrb[0].mxu0 %v4239
      %v4431 = vpop.f32.mrb[0].mxu0
      %v4432 = vadd.f32 %v4193, %v4431
      %v4433 = vpop.f32.mrb[0].mxu0
      %4434 = vmatprep.mubr.f32.mxu0 0.0
      %4435 = vmatmul.mubr.f32.gmra.mrb[0].mxu0 %v4242
      %v4436 = vpop.f32.mrb[0].mxu0
      %v4437 = vadd.f32 %v4193, %v4436
      %v4438 = vpop.f32.mrb[0].mxu0
      %4439 = vmatprep.mubr.f32.mxu0 0.0
      %4440 = vmatmul.mubr.f32.gmra.mrb[0].mxu0 %v4245
      %v4441 = vpop.f32.mrb[0].mxu0
      %v4442 = vadd.f32 %v4193, %v4441
      %v4443 = vpop.f32.mrb[0].mxu0
      %4444 = vmatprep.mubr.f32.mxu0 0.0
      %4445 = vmatmul.mubr.f32.gmra.mrb[0].mxu0 %v4248
      %v4446 = vpop.f32.mrb[0].mxu0
      %v4447 = vadd.f32 %v4193, %v4446
      %v4448 = vpop.f32.mrb[0].mxu0
      %4449 = vmatprep.mubr.f32.mxu0 0.0
      %4450 = vmatmul.mubr.f32.gmra.mrb[0].mxu0 %v4251
      %v4451 = vpop.f32.mrb[0].mxu0
      %v4452 = vadd.f32 %v4193, %v4451
      %v4453 = vpop.f32.mrb[0].mxu0
      %4454 = vmatprep.mubr.f32.mxu0 0.0
      %4455 = vmatmul.mubr.f32.gmra.mrb[0].mxu0 %v4254
      %v4456 = vpop.f32.mrb[0].mxu0
      %v4457 = vadd.f32 %v4193, %v4456
      %v4458 = vpop.f32.mrb[0].mxu0
      %4459 = vmatprep.mubr.f32.mxu0 0.0
      %4460 = vmatmul.mubr.f32.gmra.mrb[0].mxu0 %v4257
      %v4461 = vpop.f32.mrb[0].mxu0
      %v4462 = vadd.f32 %v4193, %v4461
      %v4463 = vpop.f32.mrb[0].mxu0
      %4464 = vmatprep.mubr.f32.mxu0 0.0
      %4465 = vmatmul.mubr.f32.gmra.mrb[0].mxu0 %v4260
      %v4466 = vpop.f32.mrb[0].mxu0
      %v4467 = vadd.f32 %v4193, %v4466
      %v4468 = vpop.f32.mrb[0].mxu0
      %4469 = vmatprep.mubr.f32.mxu0 0.0
      %4470 = vmatmul.mubr.f32.gmra.mrb[0].mxu0 %v4263
      %v4471 = vpop.f32.mrb[0].mxu0
      %v4472 = vadd.f32 %v4193, %v4471
      %v4473 = vpop.f32.mrb[0].mxu0
      %4474 = vmatprep.mubr.f32.mxu0 0.0
      %4475 = vmatmul.mubr.f32.gmra.mrb[0].mxu0 %v4266
      %v4476 = vpop.f32.mrb[0].mxu0
      %v4477 = vadd.f32 %v4193, %v4476
      %v4478 = vpop.f32.mrb[0].mxu0
      %4479 = vmatprep.mubr.f32.mxu0 0.0
      %4480 = vmatmul.mubr.f32.gmra.mrb[0].mxu0 %v4269
      %v4481 = vpop.f32.mrb[0].mxu0
      %v4482 = vadd.f32 %v4193, %v4481
      %v4483 = vpop.f32.mrb[0].mxu0
      %4484 = vmatprep.mubr.f32.mxu0 0.0
      %4485 = vmatmul.mubr.f32.gmra.mrb[0].mxu0 %v4272
      %v4486 = vpop.f32.mrb[0].mxu0
      %v4487 = vadd.f32 %v4193, %v4486
      %v4488 = vpop.f32.mrb[0].mxu0
      %4489 = vmatprep.mubr.f32.mxu0 0.0
      %4490 = vmatmul.mubr.f32.gmra.mrb[0].mxu0 %v4275
      %v4491 = vpop.f32.mrb[0].mxu0
      %v4492 = vadd.f32 %v4193, %v4491
      %v4493 = vpop.f32.mrb[0].mxu0
      %4494 = vmatprep.mubr.f32.mxu0 0.0
      %4495 = vmatmul.mubr.f32.gmra.mrb[0].mxu0 %v4278
      %v4496 = vpop.f32.mrb[0].mxu0
      %v4497 = vadd.f32 %v4193, %v4496
      %v4498 = vpop.f32.mrb[0].mxu0
      %4499 = vmatprep.mubr.f32.mxu0 0.0
      %4500 = vmatmul.mubr.f32.gmra.mrb[0].mxu0 %v4281
      %v4501 = vpop.f32.mrb[0].mxu0
      %v4502 = vadd.f32 %v4193, %v4501
      %v4503 = vpop.f32.mrb[0].mxu0
      %4504 = vmatprep.mubr.f32.mxu0 0.0
      %4505 = vmatmul.mubr.f32.gmra.mrb[0].mxu0 %v4284
      %v4506 = vpop.f32.mrb[0].mxu0
      %v4507 = vadd.f32 %v4193, %v4506
      %v4508 = vpop.f32.mrb[0].mxu0
      %4509 = vmatprep.mubr.f32.mxu0 0.0
      %4510 = vmatmul.mubr.f32.gmra.mrb[0].mxu0 %v4287
      %v4511 = vpop.f32.mrb[0].mxu0
      %v4512 = vadd.f32 %v4193, %v4511
      %v4513 = vpop.f32.mrb[0].mxu0
      %4514 = vmatprep.mubr.f32.mxu0 0.0
      %4515 = vmatmul.mubr.f32.gmra.mrb[0].mxu0 %v4290
      %v4516 = vpop.f32.mrb[0].mxu0
      %v4517 = vadd.f32 %v4193, %v4516
      %v4518 = vpop.f32.mrb[0].mxu0
      %4519 = vdwg.mxu0
      %v4520 = vmax.f32 %v4362, 0.0
      %v4521 = vmax.f32 %v4367, 0.0
      %v4522 = vmax.f32 %v4372, 0.0
      %v4523 = vmax.f32 %v4377, 0.0
      %v4524 = vmax.f32 %v4382, 0.0
      %v4525 = vmax.f32 %v4387, 0.0
      %v4526 = vmax.f32 %v4392, 0.0
      %v4527 = vmax.f32 %v4397, 0.0
      %v4528 = vmax.f32 %v4402, 0.0
      %v4529 = vmax.f32 %v4407, 0.0
      %v4530 = vmax.f32 %v4412, 0.0
      %v4531 = vmax.f32 %v4417, 0.0
      %v4532 = vmax.f32 %v4422, 0.0
      %v4533 = vmax.f32 %v4427, 0.0
      %v4534 = vmax.f32 %v4432, 0.0
      %v4535 = vmax.f32 %v4437, 0.0
      %v4536 = vmax.f32 %v4442, 0.0
      %v4537 = vmax.f32 %v4447, 0.0
      %v4538 = vmax.f32 %v4452, 0.0
      %v4539 = vmax.f32 %v4457, 0.0
      %v4540 = vmax.f32 %v4462, 0.0
      %v4541 = vmax.f32 %v4467, 0.0
      %v4542 = vmax.f32 %v4472, 0.0
      %v4543 = vmax.f32 %v4477, 0.0
      %v4544 = vmax.f32 %v4482, 0.0
      %v4545 = vmax.f32 %v4487, 0.0
      %v4546 = vmax.f32 %v4492, 0.0
      %v4547 = vmax.f32 %v4497, 0.0
      %v4548 = vmax.f32 %v4502, 0.0
      %v4549 = vmax.f32 %v4507, 0.0
      %v4550 = vmax.f32 %v4512, 0.0
      %v4551 = vmax.f32 %v4517, 0.0
      %4552 = vst.msk [vmem:[%s224] sm:$0xff] %vm2238, %v4520
      %4553 = vst.msk [vmem:[%s224 + $0x8] sm:$0xff] %vm2238, %v4521
      %4554 = vst.msk [vmem:[%s224 + $0x10] sm:$0xff] %vm2238, %v4522
      %4555 = vst.msk [vmem:[%s224 + $0x18] sm:$0xff] %vm2238, %v4523
      %4556 = vst.msk [vmem:[%s224 + $0x20] sm:$0xff] %vm2238, %v4524
      %4557 = vst.msk [vmem:[%s224 + $0x28] sm:$0xff] %vm2238, %v4525
      %4558 = vst.msk [vmem:[%s224 + $0x30] sm:$0xff] %vm2238, %v4526
      %4559 = vst.msk [vmem:[%s224 + $0x38] sm:$0xff] %vm2238, %v4527
      %4560 = vst.msk [vmem:[%s224 + $0x40] sm:$0xff] %vm2238, %v4528
      %4561 = vst.msk [vmem:[%s224 + $0x48] sm:$0xff] %vm2238, %v4529
      %4562 = vst.msk [vmem:[%s224 + $0x50] sm:$0xff] %vm2238, %v4530
      %4563 = vst.msk [vmem:[%s224 + $0x58] sm:$0xff] %vm2238, %v4531
      %4564 = vst.msk [vmem:[%s224 + $0x60] sm:$0xff] %vm2238, %v4532
      %4565 = vst.msk [vmem:[%s224 + $0x68] sm:$0xff] %vm2238, %v4533
      %4566 = vst.msk [vmem:[%s224 + $0x70] sm:$0xff] %vm2238, %v4534
      %4567 = vst.msk [vmem:[%s224 + $0x78] sm:$0xff] %vm2238, %v4535
      %4568 = vst.msk [vmem:[%s224 + $0x80] sm:$0xff] %vm2238, %v4536
      %4569 = vst.msk [vmem:[%s224 + $0x88] sm:$0xff] %vm2238, %v4537
      %4570 = vst.msk [vmem:[%s224 + $0x90] sm:$0xff] %vm2238, %v4538
      %4571 = vst.msk [vmem:[%s224 + $0x98] sm:$0xff] %vm2238, %v4539
      %4572 = vst.msk [vmem:[%s224 + $0xa0] sm:$0xff] %vm2238, %v4540
      %4573 = vst.msk [vmem:[%s224 + $0xa8] sm:$0xff] %vm2238, %v4541
      %4574 = vst.msk [vmem:[%s224 + $0xb0] sm:$0xff] %vm2238, %v4542
      %4575 = vst.msk [vmem:[%s224 + $0xb8] sm:$0xff] %vm2238, %v4543
      %4576 = vst.msk [vmem:[%s224 + $0xc0] sm:$0xff] %vm2238, %v4544
      %4577 = vst.msk [vmem:[%s224 + $0xc8] sm:$0xff] %vm2238, %v4545
      %4578 = vst.msk [vmem:[%s224 + $0xd0] sm:$0xff] %vm2238, %v4546
      %4579 = vst.msk [vmem:[%s224 + $0xd8] sm:$0xff] %vm2238, %v4547
      %4580 = vst.msk [vmem:[%s224 + $0xe0] sm:$0xff] %vm2238, %v4548
      %4581 = vst.msk [vmem:[%s224 + $0xe8] sm:$0xff] %vm2238, %v4549
      %4582 = vst.msk [vmem:[%s224 + $0xf0] sm:$0xff] %vm2238, %v4550
      %4583 = vst.msk [vmem:[%s224 + $0xf8] sm:$0xff] %vm2238, %v4551
      %p4584 = scmp.lt.s32.totalorder %s16, 1
      %s4585 = scalar_select %p4584, %s16, 1
      %s4586 = smul.addr %s4585, 32
      %s4587 = smul.addr %s4586, 8
      %s4588 = scalar_lea.vmem %s5, %s4587
      // Predicated region
      $region41: #{basic_block_forward.1} parent=39 // pred_check
        %p4589 = pneg %p144
      $region42: #{basic_block_forward.1} parent=39 // pred_check_branch
        %4591 = sbr.rel (%p4589) target = $region44
      $region43: #{basic_block_forward.1} parent=39 // pred_region
        _
      $region44: #{basic_block_forward.1} parent=39 // pred_fallthru
        _
    $region40: #{basic_block_forward.1} parent=5 // pred_fallthru
      _
    %p4592 = scmp.le.s32.totalorder 2, %s11
    // Predicated region
    $region45: #{basic_block_forward.1} parent=5 // pred_check
      %p4593 = pneg %p4592
    $region46: #{basic_block_forward.1} parent=5 // pred_check_branch
      %4595 = sbr.rel (%p4593) target = $region48
    $region47: #{basic_block_forward.1} parent=5 // pred_region
      %s4596 = ssub.s32 %s11, 2
      // Predicated region
      $region49: #{basic_block_forward.1} parent=47 // pred_check
        %p4597 = pneg %p150
      $region50: #{basic_block_forward.1} parent=47 // pred_check_branch
        %4599 = sbr.rel (%p4597) target = $region52
      $region51: #{basic_block_forward.1} parent=47 // pred_region
        %p4600 = scmp.lt.s32.totalorder %s17, 1
        %s4601 = scalar_select %p4600, %s17, 1
        %s4602 = smul.addr %s4601, 32
        %s4603 = smul.addr %s4602, 8
        %s4604 = scalar_lea.vmem %s5, %s4603
      $region52: #{basic_block_forward.1} parent=47 // pred_fallthru
        _
    $region48: #{basic_block_forward.1} parent=5 // pred_fallthru
      _
  $region6: #{basic_block_forward.1} parent=0 // loop_footer
    %s15 = sadd.s32 1, %s11
  $region7: #{basic_block_forward.1} parent=0 // loop_footer_branch
    %10 = sbr.rel target = $region3
  $region8: #{basic_block_forward.1} parent=0 // loop_exit
    _

</llo_original>
